<compile_context>
chip_gen: v6e
topology: v6e:2x2x1
jax: 0.10.0
libtpu: 0.0.40
codegen_flags: <defaults>
</compile_context>

<pallas_src>
import jax
import jax.numpy as jnp
from jax.experimental import pallas as pl
from jax.experimental.pallas import tpu as pltpu

# problem sizes (fixed by the module)
C_IN, C_OUT = 253, 79
H_IN, W_IN = 93, 45
H_C, W_C = H_IN - 2, W_IN - 2            # ConvTranspose2d(k=1,s=1,p=1) output = cropped interior
P_FULL = H_IN * W_IN                     # 4185 spatial positions fed to the kernel (no crop copy)
P_TRUE = H_C * W_C                       # 3913 positions that actually count for the mean

# kernel tiling
COUT_PAD = 128                           # pad 79 -> 128 output channels (weight side only)
N_CORES = 2                              # leading "parallel" axis (v7x megacore); serial elsewhere
NS = 2                                   # spatial steps per core
TP = 1152                                # lanes per step (9*128); 2*2*1152 = 4608 >= 4185
P_COVER = N_CORES * NS * TP              # mask length (covers the ragged OOB tail with zeros)

NEG_SLOPE = 0.148
OUT_H, OUT_W = 6, 40                     # final interpolate target


def _fused_kernel(w_ref, x_ref, m_ref, o_ref):
    """One grid step: (COUT_PAD, C_IN) @ (C_IN, TP) on the MXU, leaky-relu, mask out
    non-interior / out-of-bounds columns, lane-reduce, accumulate into the resident
    (COUT_PAD, 1) output block."""
    s = pl.program_id(1)

    @pl.when(s == 0)
    def _():
        o_ref[...] = jnp.zeros_like(o_ref)

    y = jnp.dot(w_ref[...], x_ref[...], preferred_element_type=jnp.float32)  # (COUT_PAD, TP)
    y = jnp.where(y > 0, y, y * NEG_SLOPE)            # leaky: where(x11>0, x11, 0.148*x11)
    y = jnp.where(m_ref[...] > 0.5, y, 0.0)           # crop (padding=1) + ragged-tail mask
    o_ref[...] += jnp.sum(y, axis=-1, keepdims=True)  # (COUT_PAD, 1) partial sums


def _partial_channel_sums(w_oc, x_cp, mask):
    """w_oc: (COUT_PAD, C_IN) f32; x_cp: (C_IN, P_FULL) f32 (natural layout, un-padded);
    mask: (1, P_COVER) f32.  Returns (N_CORES*COUT_PAD, 1) per-core partial sums."""
    return pl.pallas_call(
        _fused_kernel,
        out_shape=jax.ShapeDtypeStruct((N_CORES * COUT_PAD, 1), jnp.float32),
        grid=(N_CORES, NS),
        in_specs=[
            pl.BlockSpec((COUT_PAD, C_IN), lambda c, s: (0, 0)),        # weight (whole)
            pl.BlockSpec((C_IN, TP), lambda c, s: (0, c * NS + s)),     # activations, lane-tiled
            pl.BlockSpec((1, TP), lambda c, s: (0, c * NS + s)),        # validity mask
        ],
        out_specs=pl.BlockSpec((COUT_PAD, 1), lambda c, s: (c, 0)),     # per-core partial sums
        compiler_params=pltpu.CompilerParams(
            dimension_semantics=("parallel", "arbitrary"),
        ),
    )(w_oc, x_cp, mask)


def model_forward(x10, weight):
    """x10: (1, 253, 93, 45) f32 NCHW; weight: (253, 79, 1, 1) f32 (ConvTranspose2d layout).
    Returns (1, 79, 6, 40) f32."""
    # Free reshape: NCHW (1, Cin, H, W) -> (Cin, H*W). No crop / transpose / pad of X.
    x_cp = x10.reshape(C_IN, P_FULL)

    # Tiny weight prep: (Cin, Cout) -> (COUT_PAD, Cin) with zero-padded output channels.
    w_oc = jnp.zeros((COUT_PAD, C_IN), jnp.float32).at[:C_OUT, :].set(weight[:, :, 0, 0].T)

    # Mask = 1 for the interior (the padding=1 crop of the 1x1 deconv), 0 for the border
    # and for the out-of-bounds lane tail of the last spatial tile.
    h = jnp.arange(H_IN)
    w = jnp.arange(W_IN)
    interior = ((h[:, None] >= 1) & (h[:, None] <= H_IN - 2) &
                (w[None, :] >= 1) & (w[None, :] <= W_IN - 2)).astype(jnp.float32)
    mask = jnp.zeros((1, P_COVER), jnp.float32).at[0, :P_FULL].set(interior.reshape(-1))

    partial = _partial_channel_sums(w_oc, x_cp, mask)           # (2*COUT_PAD, 1)
    sums = partial.reshape(N_CORES, COUT_PAD).sum(axis=0)       # combine the two cores
    ch = jnp.maximum(sums * (1.0 / float(P_TRUE)), 0.0)[:C_OUT]  # adaptive_avg_pool -> ReLU

    # nearest interpolate of a spatially-constant (1,1) map -> pure broadcast
    return jnp.broadcast_to(ch[None, :, None, None], (1, C_OUT, OUT_H, OUT_W))


def _reference(x10, weight):
    x_crop = x10[0, :, 1:-1, 1:-1].reshape(C_IN, P_TRUE)
    w2d = weight[:, :, 0, 0]
    y = jnp.einsum("cp,co->op", x_crop, w2d)                    # (79, P)
    y = jnp.where(y > 0, y, y * NEG_SLOPE)
    m = jnp.maximum(jnp.mean(y, axis=1), 0.0)
    return jnp.broadcast_to(m[None, :, None, None], (1, C_OUT, OUT_H, OUT_W))


if __name__ == "__main__":
    key = jax.random.PRNGKey(0)
    kx, kw = jax.random.split(key)
    x10 = jax.random.normal(kx, (1, C_IN, H_IN, W_IN), dtype=jnp.float32)
    # deterministic weight init (stand-in for PyTorch's kaiming-uniform default)
    weight = jax.random.uniform(kw, (C_IN, C_OUT, 1, 1), dtype=jnp.float32,
                                minval=-0.0629, maxval=0.0629)

    out = jax.jit(model_forward)(x10, weight)
    out = jax.block_until_ready(out)

    ref = _reference(x10, weight)
    assert out.shape == (1, C_OUT, OUT_H, OUT_W), out.shape
    assert jnp.allclose(out, ref, atol=1e-4, rtol=1e-4), "mismatch vs reference"
    print("KERNEL_OK")
</pallas_src>

<mosaic_0001>
module attributes {stable_mosaic.version = 11 : i64} {
  func.func @_fused_kernel(%arg0: i32, %arg1: i32, %arg2: memref<128x253xf32, #tpu.memory_space<vmem>>, %arg3: memref<253x1152xf32, #tpu.memory_space<vmem>>, %arg4: memref<1x1152xf32, #tpu.memory_space<vmem>>, %arg5: memref<128x1xf32, #tpu.memory_space<vmem>>) attributes {dimension_semantics = [#tpu.dimension_semantics<parallel>, #tpu.dimension_semantics<arbitrary>], iteration_bounds = array<i64: 2, 2>, scalar_prefetch = 0 : i64, scratch_operands = 0 : i64, tpu.core_type = #tpu.core_type<tc>, window_params = [{pipeline_mode = #tpu.pipeline_mode<synchronous>, transform_indices = @transform_0, window_bounds = array<i64: 128, 253>}, {transform_indices = @transform_1, window_bounds = array<i64: 253, 1152>}, {transform_indices = @transform_2, window_bounds = array<i64: 1, 1152>}, {transform_indices = @transform_3, window_bounds = array<i64: 128, 1>}]} {
    %c0_i32 = arith.constant 0 : i32
    %0 = arith.cmpi eq, %arg1, %c0_i32 : i32
    %1 = arith.extui %0 : i1 to i32
    %c0_i32_0 = arith.constant 0 : i32
    %2 = arith.cmpi ne, %1, %c0_i32_0 : i32
    scf.if %2 {
      %cst_15 = arith.constant 0.000000e+00 : f32
      %23 = vector.broadcast %cst_15 : f32 to vector<128x1xf32>
      %c0_16 = arith.constant 0 : index
      %c0_17 = arith.constant 0 : index
      %24 = vector.load %arg5[%c0_16, %c0_17] : memref<128x1xf32, #tpu.memory_space<vmem>>, vector<128x1xf32>
      tpu.vector_store %arg5[%c0_16, %c0_17], %23 {strides = array<i32>} : memref<128x1xf32, #tpu.memory_space<vmem>>, vector<128x1xf32>,
    } else {
    }
    %c0 = arith.constant 0 : index
    %c0_1 = arith.constant 0 : index
    %3 = vector.load %arg2[%c0, %c0_1] : memref<128x253xf32, #tpu.memory_space<vmem>>, vector<128x253xf32>
    %c0_2 = arith.constant 0 : index
    %c0_3 = arith.constant 0 : index
    %4 = vector.load %arg3[%c0_2, %c0_3] : memref<253x1152xf32, #tpu.memory_space<vmem>>, vector<253x1152xf32>
    %cst = arith.constant dense<0.000000e+00> : vector<128x1152xf32>
    %5 = tpu.matmul %3, %4, %cst {dimension_numbers = #tpu.dot_dimension_numbers<[1], [0], [0], [1], [0, 0, 1, 1], [], []>} : vector<128x253xf32>, vector<253x1152xf32>, vector<128x1152xf32> -> vector<128x1152xf32>
    %cst_4 = arith.constant 0.000000e+00 : f32
    %6 = vector.broadcast %cst_4 : f32 to vector<128x1152xf32>
    %7 = arith.cmpf ogt, %5, %6 : vector<128x1152xf32>
    %cst_5 = arith.constant 1.480000e-01 : f32
    %8 = vector.broadcast %cst_5 : f32 to vector<128x1152xf32>
    %9 = arith.mulf %5, %8 : vector<128x1152xf32>
    %10 = arith.select %7, %5, %9 : vector<128x1152xi1>, vector<128x1152xf32>
    %c0_6 = arith.constant 0 : index
    %c0_7 = arith.constant 0 : index
    %11 = vector.load %arg4[%c0_6, %c0_7] : memref<1x1152xf32, #tpu.memory_space<vmem>>, vector<1x1152xf32>
    %cst_8 = arith.constant 5.000000e-01 : f32
    %12 = vector.broadcast %cst_8 : f32 to vector<1x1152xf32>
    %13 = arith.cmpf ogt, %11, %12 : vector<1x1152xf32>
    %cst_9 = arith.constant 0.000000e+00 : f32
    %14 = vector.shape_cast %13 : vector<1x1152xi1> to vector<1x1152xi1>
    %15 = vector.broadcast %14 : vector<1x1152xi1> to vector<128x1152xi1>
    %16 = vector.broadcast %cst_9 : f32 to vector<128x1152xf32>
    %17 = arith.select %15, %10, %16 : vector<128x1152xi1>, vector<128x1152xf32>
    %c0_10 = arith.constant 0 : index
    %c0_11 = arith.constant 0 : index
    %18 = vector.load %arg5[%c0_10, %c0_11] : memref<128x1xf32, #tpu.memory_space<vmem>>, vector<128x1xf32>
    %cst_12 = arith.constant dense<0.000000e+00> : vector<128xf32>
    %19 = vector.multi_reduction <add>, %17, %cst_12 [1] : vector<128x1152xf32> to vector<128xf32>
    %20 = vector.shape_cast %19 : vector<128xf32> to vector<128x1xf32>
    %21 = arith.addf %18, %20 : vector<128x1xf32>
    %c0_13 = arith.constant 0 : index
    %c0_14 = arith.constant 0 : index
    %22 = vector.load %arg5[%c0_13, %c0_14] : memref<128x1xf32, #tpu.memory_space<vmem>>, vector<128x1xf32>
    tpu.vector_store %arg5[%c0_13, %c0_14], %21 {strides = array<i32>} : memref<128x1xf32, #tpu.memory_space<vmem>>, vector<128x1xf32>,
    return
  }
  func.func @transform_0(%arg0: i32, %arg1: i32) -> (i32, i32) {
    %c0_i32 = arith.constant 0 : i32
    %c0_i32_0 = arith.constant 0 : i32
    %c0_i32_1 = arith.constant 0 : i32
    return %c0_i32, %c0_i32_0 : i32, i32
  }
  func.func @transform_1(%arg0: i32, %arg1: i32) -> (i32, i32) {
    %c2_i32 = arith.constant 2 : i32
    %0 = arith.muli %arg0, %c2_i32 : i32
    %1 = arith.addi %0, %arg1 : i32
    %c0_i32 = arith.constant 0 : i32
    %c0_i32_0 = arith.constant 0 : i32
    return %c0_i32, %1 : i32, i32
  }
  func.func @transform_2(%arg0: i32, %arg1: i32) -> (i32, i32) {
    %c2_i32 = arith.constant 2 : i32
    %0 = arith.muli %arg0, %c2_i32 : i32
    %1 = arith.addi %0, %arg1 : i32
    %c0_i32 = arith.constant 0 : i32
    %c0_i32_0 = arith.constant 0 : i32
    return %c0_i32, %1 : i32, i32
  }
  func.func @transform_3(%arg0: i32, %arg1: i32) -> (i32, i32) {
    %c0_i32 = arith.constant 0 : i32
    %c0_i32_0 = arith.constant 0 : i32
    return %arg0, %c0_i32 : i32, i32
  }
}

</mosaic_0001>

<llo_original>
// kernel: model_forward.1
$region0: #{model_forward.1}
  #allocation0 [shape = 'u32[]', space=smem, size = 0x4, offset = 0x4, fixed_abs, tag = 'smem constant byte address 0x4 - core index']
  #allocation1 [shape = 'u32[144,128]{1,0:T(1,128)}', space=vmem, size = 0x12000, scoped, tag = 'internal scratch']
  %s0 = inlined_call_operand.vmem [shape: f32[128,253], index: 0, kind: input, shape index: {}]
  %s1 = inlined_call_operand.vmem [shape: f32[253,4185], index: 1, kind: input, shape index: {}]
  %s2 = inlined_call_operand.vmem [shape: f32[1,4608], index: 2, kind: input, shape index: {}]
  %s3 = inlined_call_operand.vmem [shape: f32[256,1], index: 3, kind: output, shape index: {}]
  %s4 = sld [smem:[#allocation0]]
  $region115: #{model_forward.1} parent=0
    _
  %s6 = ssub.s32 1, %s4
  %s7 = scalar_select 0, %s6, %s4
  $region1: #{model_forward.1} parent=0
    #allocation2 [shape = 'u8[2359296]{0}', space=vmem, size = 0x240000, scoped, tag = 'input window, operand 1']
    loop: start=0, step=1, limit=6
    $region2: #{model_forward.1} parent=1 // loop_pre_header
      _
    $region3: #{model_forward.1} parent=1 // loop_header
      %s9 = sphi 0, %s13
      %p10 = scmp.ge.s32.totalorder %s9, 6
      %s16 = sphi 0, %s28
      %s17 = sphi 0, %s24
      %s18 = sphi 0, %s16
      %s19 = sphi 0, %s17
      %s20 = sphi 0, %s18
      %s21 = sphi 0, %s19
      %s29 = sphi 0, %s29
      %s31 = sphi 0, %s29
      %s32 = sphi 0, %s31
      %s46 = sphi 0, %s32
      %s56 = sphi 0, %s58
      %s59 = sphi 0, %s56
      %s60 = sphi 0, %s59
      %s76 = sphi 0, %s60
      %s86 = sphi 0, %s88
      %s89 = sphi 0, %s86
      %s90 = sphi 0, %s89
      %s106 = sphi 0, %s90
      %s112 = sphi 0, %s114
      %s115 = sphi 0, %s112
      %s116 = sphi 0, %s115
      %s132 = sphi 0, %s116
    $region4: #{model_forward.1} parent=1 // loop_header_branch
      %12 = sbr.rel (%p10) target = $region8
    $region5: #{model_forward.1} parent=1 // loop_body
      %s14 = ssub.s32 %s9, 1
      %s15 = ssub.s32 %s9, 2
      %s22 = sadd.s32 1, %s17
      %p23 = scmp.ge.s32.totalorder %s22, 2
      %s24 = scalar_select %p23, 0, %s22
      %s25 = sadd.s32 1, %s16
      %s26 = scalar_select %p23, %s25, %s16
      %p27 = scmp.ge.s32.totalorder %s26, 2
      %s28 = scalar_select %p27, 0, %s26
      %s30 = sadd.s32 %s29, 1
      %p33 = scmp.eq.s32.totalorder %s9, 3
      %p34 = scmp.ne.s32.totalorder %s29, %s31
      %p35 = scmp.eq.s32.totalorder %s9, 0
      %p36 = por %p34, %p35
      %p37 = scmp.ne.s32.totalorder %s29, %s31
      %p38 = scmp.eq.s32.totalorder %s14, 3
      %p39 = por %p37, %p38
      %p40 = scmp.ne.s32.totalorder %s31, %s32
      %p41 = scmp.eq.s32.totalorder %s14, 0
      %p42 = por %p40, %p41
      %p43 = scmp.ne.s32.totalorder %s31, %s32
      %p44 = scmp.eq.s32.totalorder %s15, 3
      %p45 = por %p43, %p44
      %p47 = scmp.ne.s32.totalorder %s32, %s46
      %p48 = scmp.eq.s32.totalorder %s15, 0
      %p49 = por %p47, %p48
      %s50 = smul.u32 %s16, 2
      %s51 = sadd.s32 %s50, %s17
      %s52 = smul.u32 %s28, 2
      %s53 = sadd.s32 %s52, %s24
      %s54 = ssub.s32 %s51, %s53
      %p55 = scmp.eq.s32.totalorder %s54, 0
      %s57 = sadd.s32 %s56, 1
      %s58 = scalar_select %p55, %s56, %s57
      %p61 = pneg %p55
      %p62 = scmp.eq.s32.totalorder %s9, 3
      %p63 = por %p61, %p62
      %p64 = scmp.ne.s32.totalorder %s56, %s59
      %p65 = scmp.eq.s32.totalorder %s9, 0
      %p66 = por %p64, %p65
      %p67 = scmp.ne.s32.totalorder %s56, %s59
      %p68 = scmp.eq.s32.totalorder %s14, 3
      %p69 = por %p67, %p68
      %p70 = scmp.ne.s32.totalorder %s59, %s60
      %p71 = scmp.eq.s32.totalorder %s14, 0
      %p72 = por %p70, %p71
      %p73 = scmp.ne.s32.totalorder %s59, %s60
      %p74 = scmp.eq.s32.totalorder %s15, 3
      %p75 = por %p73, %p74
      %p77 = scmp.ne.s32.totalorder %s60, %s76
      %p78 = scmp.eq.s32.totalorder %s15, 0
      %p79 = por %p77, %p78
      %s80 = smul.u32 %s16, 2
      %s81 = sadd.s32 %s80, %s17
      %s82 = smul.u32 %s28, 2
      %s83 = sadd.s32 %s82, %s24
      %s84 = ssub.s32 %s81, %s83
      %p85 = scmp.eq.s32.totalorder %s84, 0
      %s87 = sadd.s32 %s86, 1
      %s88 = scalar_select %p85, %s86, %s87
      %p91 = pneg %p85
      %p92 = scmp.eq.s32.totalorder %s9, 3
      %p93 = por %p91, %p92
      %p94 = scmp.ne.s32.totalorder %s86, %s89
      %p95 = scmp.eq.s32.totalorder %s9, 0
      %p96 = por %p94, %p95
      %p97 = scmp.ne.s32.totalorder %s86, %s89
      %p98 = scmp.eq.s32.totalorder %s14, 3
      %p99 = por %p97, %p98
      %p100 = scmp.ne.s32.totalorder %s89, %s90
      %p101 = scmp.eq.s32.totalorder %s14, 0
      %p102 = por %p100, %p101
      %p103 = scmp.ne.s32.totalorder %s89, %s90
      %p104 = scmp.eq.s32.totalorder %s15, 3
      %p105 = por %p103, %p104
      %p107 = scmp.ne.s32.totalorder %s90, %s106
      %p108 = scmp.eq.s32.totalorder %s15, 0
      %p109 = por %p107, %p108
      %s110 = ssub.s32 %s16, %s28
      %p111 = scmp.eq.s32.totalorder %s110, 0
      %s113 = sadd.s32 %s112, 1
      %s114 = scalar_select %p111, %s112, %s113
      %p117 = pneg %p111
      %p118 = scmp.eq.s32.totalorder %s9, 3
      %p119 = por %p117, %p118
      %p120 = scmp.ne.s32.totalorder %s112, %s115
      %p121 = scmp.eq.s32.totalorder %s9, 0
      %p122 = por %p120, %p121
      %p123 = scmp.ne.s32.totalorder %s112, %s115
      %p124 = scmp.eq.s32.totalorder %s14, 3
      %p125 = por %p123, %p124
      %p126 = scmp.ne.s32.totalorder %s115, %s116
      %p127 = scmp.eq.s32.totalorder %s14, 0
      %p128 = por %p126, %p127
      %p129 = scmp.ne.s32.totalorder %s115, %s116
      %p130 = scmp.eq.s32.totalorder %s15, 3
      %p131 = por %p129, %p130
      %p133 = scmp.ne.s32.totalorder %s116, %s132
      %p134 = scmp.eq.s32.totalorder %s15, 0
      %p135 = por %p133, %p134
      %p136 = scmp.le.s32.totalorder 1, %s9
      %p137 = scmp.lt.s32.totalorder %s9, 5
      %p138 = pnand %p136, %p137
      %p139 = pneg %p138
      // Predicated region
      $region9: #{model_forward.1} parent=5 // pred_check
        _
      $region10: #{model_forward.1} parent=5 // pred_check_branch
        %141 = sbr.rel (%p138) target = $region12
      $region11: #{model_forward.1} parent=5 // pred_region
        %s142 = ssub.s32 %s9, 1
        // Predicated region
        $region13: #{model_forward.1} parent=11 // pred_check
          %p143 = pneg %p42
        $region14: #{model_forward.1} parent=11 // pred_check_branch
          %145 = sbr.rel (%p143) target = $region16
        $region15: #{model_forward.1} parent=11 // pred_region
          _
        $region16: #{model_forward.1} parent=11 // pred_fallthru
          _
      $region12: #{model_forward.1} parent=5 // pred_fallthru
        _
      %p146 = scmp.lt.s32.totalorder %s9, 4
      // Predicated region
      $region17: #{model_forward.1} parent=5 // pred_check
        %p147 = pneg %p146
      $region18: #{model_forward.1} parent=5 // pred_check_branch
        %149 = sbr.rel (%p147) target = $region20
      $region19: #{model_forward.1} parent=5 // pred_region
        // Predicated region
        $region21: #{model_forward.1} parent=19 // pred_check
          %p150 = pneg %p66
        $region22: #{model_forward.1} parent=19 // pred_check_branch
          %152 = sbr.rel (%p150) target = $region24
        $region23: #{model_forward.1} parent=19 // pred_region
          %s153 = sand.u32 %s56, 1
          %s154 = sand.u32 %s56, 1
          %s155 = smul.addr %s154, 2304
          %s156 = scalar_lea.vmem [#allocation2], %s155
          %s157 = smul.u32 %s16, 2
          %s158 = sadd.s32 %s157, %s17
          %s159 = smul.u32 9, %s158
          %s160 = ssub.s32 33, %s159
          %p161 = scmp.lt.s32.totalorder %s160, 9
          %s162 = scalar_select %p161, %s160, 9
          %s163 = smul.u32 4096, %s162
          %p164 = scmp.ne.s32.totalorder 0, %s163
          %s165 = smul.addr %s159, 8
          %s166 = scalar_lea.vmem %s1, %s165
          %s167 = smul.u32 %s162, 8
          // Predicated region
          $region25: #{model_forward.1} parent=23 // pred_check
            %p168 = pneg %p164
          $region26: #{model_forward.1} parent=23 // pred_check_branch
            %170 = sbr.rel (%p168) target = $region28
          $region27: #{model_forward.1} parent=23 // pred_region
            %p171 = scmp.lt.u32.totalorder %s167, 8
            %p172 = pneg %p171
            // Predicated region
            $region29: #{model_forward.1} parent=27 // pred_check
              _
            $region30: #{model_forward.1} parent=27 // pred_check_branch
              %174 = sbr.rel (%p171) target = $region32
            $region31: #{model_forward.1} parent=27 // pred_region
              %s252 = sand.u32 %s167, 7
              %p253 = scmp.eq.s32.totalorder %s252, 0
              // Predicated region
              $region44: #{model_forward.1} parent=31 // pred_check
                %p254 = pneg %p253
              $region45: #{model_forward.1} parent=31 // pred_check_branch
                %256 = sbr.rel (%p254) target = $region47
              $region46: #{model_forward.1} parent=31 // pred_region
                %s257 = sshrl.u32 %s167, 3
                %s258 = sshrl.u32 %s257, 1
                // While loop
                $region48: #{model_forward.1} parent=46 // loop_pre_header
                  _
                $region49: #{model_forward.1} parent=46 // loop_header
                  %s262 = sphi 0, %s264
                  %p263 = scmp.ge.s32.totalorder %s262, %s258
                  %s267 = sphi 0, %s400
                  %s268 = sphi %s166, %s403
                  %s269 = sphi %s156, %s404
                $region50: #{model_forward.1} parent=46 // loop_header_branch
                  %266 = sbr.rel (%p263) target = $region54
                $region51: #{model_forward.1} parent=46 // loop_body
                  %v270 = vld [vmem:[%s268] sm:$0xff]
                  %271 = vst [vmem:[%s269] sm:$0xff] %v270
                  %v272 = vld [vmem:[%s268 + $0x8] sm:$0xff]
                  %273 = vst [vmem:[%s269 + $0x8] sm:$0xff] %v272
                  %v274 = vld [vmem:[%s268 + $0x108] sm:$0xff]
                  %275 = vst [vmem:[%s269 + $0x48] sm:$0xff] %v274
                  %v276 = vld [vmem:[%s268 + $0x110] sm:$0xff]
                  %277 = vst [vmem:[%s269 + $0x50] sm:$0xff] %v276
                  %v278 = vld [vmem:[%s268 + $0x210] sm:$0xff]
                  %279 = vst [vmem:[%s269 + $0x90] sm:$0xff] %v278
                  %v280 = vld [vmem:[%s268 + $0x218] sm:$0xff]
                  %281 = vst [vmem:[%s269 + $0x98] sm:$0xff] %v280
                  %v282 = vld [vmem:[%s268 + $0x318] sm:$0xff]
                  %283 = vst [vmem:[%s269 + $0xd8] sm:$0xff] %v282
                  %v284 = vld [vmem:[%s268 + $0x320] sm:$0xff]
                  %285 = vst [vmem:[%s269 + $0xe0] sm:$0xff] %v284
                  %v286 = vld [vmem:[%s268 + $0x420] sm:$0xff]
                  %287 = vst [vmem:[%s269 + $0x120] sm:$0xff] %v286
                  %v288 = vld [vmem:[%s268 + $0x428] sm:$0xff]
                  %289 = vst [vmem:[%s269 + $0x128] sm:$0xff] %v288
                  %v290 = vld [vmem:[%s268 + $0x528] sm:$0xff]
                  %291 = vst [vmem:[%s269 + $0x168] sm:$0xff] %v290
                  %v292 = vld [vmem:[%s268 + $0x530] sm:$0xff]
                  %293 = vst [vmem:[%s269 + $0x170] sm:$0xff] %v292
                  %v294 = vld [vmem:[%s268 + $0x630] sm:$0xff]
                  %295 = vst [vmem:[%s269 + $0x1b0] sm:$0xff] %v294
                  %v296 = vld [vmem:[%s268 + $0x638] sm:$0xff]
                  %297 = vst [vmem:[%s269 + $0x1b8] sm:$0xff] %v296
                  %v298 = vld [vmem:[%s268 + $0x738] sm:$0xff]
                  %299 = vst [vmem:[%s269 + $0x1f8] sm:$0xff] %v298
                  %v300 = vld [vmem:[%s268 + $0x740] sm:$0xff]
                  %301 = vst [vmem:[%s269 + $0x200] sm:$0xff] %v300
                  %v302 = vld [vmem:[%s268 + $0x840] sm:$0xff]
                  %303 = vst [vmem:[%s269 + $0x240] sm:$0xff] %v302
                  %v304 = vld [vmem:[%s268 + $0x848] sm:$0xff]
                  %305 = vst [vmem:[%s269 + $0x248] sm:$0xff] %v304
                  %v306 = vld [vmem:[%s268 + $0x948] sm:$0xff]
                  %307 = vst [vmem:[%s269 + $0x288] sm:$0xff] %v306
                  %v308 = vld [vmem:[%s268 + $0x950] sm:$0xff]
                  %309 = vst [vmem:[%s269 + $0x290] sm:$0xff] %v308
                  %v310 = vld [vmem:[%s268 + $0xa50] sm:$0xff]
                  %311 = vst [vmem:[%s269 + $0x2d0] sm:$0xff] %v310
                  %v312 = vld [vmem:[%s268 + $0xa58] sm:$0xff]
                  %313 = vst [vmem:[%s269 + $0x2d8] sm:$0xff] %v312
                  %v314 = vld [vmem:[%s268 + $0xb58] sm:$0xff]
                  %315 = vst [vmem:[%s269 + $0x318] sm:$0xff] %v314
                  %v316 = vld [vmem:[%s268 + $0xb60] sm:$0xff]
                  %317 = vst [vmem:[%s269 + $0x320] sm:$0xff] %v316
                  %v318 = vld [vmem:[%s268 + $0xc60] sm:$0xff]
                  %319 = vst [vmem:[%s269 + $0x360] sm:$0xff] %v318
                  %v320 = vld [vmem:[%s268 + $0xc68] sm:$0xff]
                  %321 = vst [vmem:[%s269 + $0x368] sm:$0xff] %v320
                  %v322 = vld [vmem:[%s268 + $0xd68] sm:$0xff]
                  %323 = vst [vmem:[%s269 + $0x3a8] sm:$0xff] %v322
                  %v324 = vld [vmem:[%s268 + $0xd70] sm:$0xff]
                  %325 = vst [vmem:[%s269 + $0x3b0] sm:$0xff] %v324
                  %v326 = vld [vmem:[%s268 + $0xe70] sm:$0xff]
                  %327 = vst [vmem:[%s269 + $0x3f0] sm:$0xff] %v326
                  %v328 = vld [vmem:[%s268 + $0xe78] sm:$0xff]
                  %329 = vst [vmem:[%s269 + $0x3f8] sm:$0xff] %v328
                  %v330 = vld [vmem:[%s268 + $0xf78] sm:$0xff]
                  %331 = vst [vmem:[%s269 + $0x438] sm:$0xff] %v330
                  %v332 = vld [vmem:[%s268 + $0xf80] sm:$0xff]
                  %333 = vst [vmem:[%s269 + $0x440] sm:$0xff] %v332
                  %v334 = vld [vmem:[%s268 + $0x1080] sm:$0xff]
                  %335 = vst [vmem:[%s269 + $0x480] sm:$0xff] %v334
                  %v336 = vld [vmem:[%s268 + $0x1088] sm:$0xff]
                  %337 = vst [vmem:[%s269 + $0x488] sm:$0xff] %v336
                  %v338 = vld [vmem:[%s268 + $0x1188] sm:$0xff]
                  %339 = vst [vmem:[%s269 + $0x4c8] sm:$0xff] %v338
                  %v340 = vld [vmem:[%s268 + $0x1190] sm:$0xff]
                  %341 = vst [vmem:[%s269 + $0x4d0] sm:$0xff] %v340
                  %v342 = vld [vmem:[%s268 + $0x1290] sm:$0xff]
                  %343 = vst [vmem:[%s269 + $0x510] sm:$0xff] %v342
                  %v344 = vld [vmem:[%s268 + $0x1298] sm:$0xff]
                  %345 = vst [vmem:[%s269 + $0x518] sm:$0xff] %v344
                  %v346 = vld [vmem:[%s268 + $0x1398] sm:$0xff]
                  %347 = vst [vmem:[%s269 + $0x558] sm:$0xff] %v346
                  %v348 = vld [vmem:[%s268 + $0x13a0] sm:$0xff]
                  %349 = vst [vmem:[%s269 + $0x560] sm:$0xff] %v348
                  %v350 = vld [vmem:[%s268 + $0x14a0] sm:$0xff]
                  %351 = vst [vmem:[%s269 + $0x5a0] sm:$0xff] %v350
                  %v352 = vld [vmem:[%s268 + $0x14a8] sm:$0xff]
                  %353 = vst [vmem:[%s269 + $0x5a8] sm:$0xff] %v352
                  %v354 = vld [vmem:[%s268 + $0x15a8] sm:$0xff]
                  %355 = vst [vmem:[%s269 + $0x5e8] sm:$0xff] %v354
                  %v356 = vld [vmem:[%s268 + $0x15b0] sm:$0xff]
                  %357 = vst [vmem:[%s269 + $0x5f0] sm:$0xff] %v356
                  %v358 = vld [vmem:[%s268 + $0x16b0] sm:$0xff]
                  %359 = vst [vmem:[%s269 + $0x630] sm:$0xff] %v358
                  %v360 = vld [vmem:[%s268 + $0x16b8] sm:$0xff]
                  %361 = vst [vmem:[%s269 + $0x638] sm:$0xff] %v360
                  %v362 = vld [vmem:[%s268 + $0x17b8] sm:$0xff]
                  %363 = vst [vmem:[%s269 + $0x678] sm:$0xff] %v362
                  %v364 = vld [vmem:[%s268 + $0x17c0] sm:$0xff]
                  %365 = vst [vmem:[%s269 + $0x680] sm:$0xff] %v364
                  %v366 = vld [vmem:[%s268 + $0x18c0] sm:$0xff]
                  %367 = vst [vmem:[%s269 + $0x6c0] sm:$0xff] %v366
                  %v368 = vld [vmem:[%s268 + $0x18c8] sm:$0xff]
                  %369 = vst [vmem:[%s269 + $0x6c8] sm:$0xff] %v368
                  %v370 = vld [vmem:[%s268 + $0x19c8] sm:$0xff]
                  %371 = vst [vmem:[%s269 + $0x708] sm:$0xff] %v370
                  %v372 = vld [vmem:[%s268 + $0x19d0] sm:$0xff]
                  %373 = vst [vmem:[%s269 + $0x710] sm:$0xff] %v372
                  %v374 = vld [vmem:[%s268 + $0x1ad0] sm:$0xff]
                  %375 = vst [vmem:[%s269 + $0x750] sm:$0xff] %v374
                  %v376 = vld [vmem:[%s268 + $0x1ad8] sm:$0xff]
                  %377 = vst [vmem:[%s269 + $0x758] sm:$0xff] %v376
                  %v378 = vld [vmem:[%s268 + $0x1bd8] sm:$0xff]
                  %379 = vst [vmem:[%s269 + $0x798] sm:$0xff] %v378
                  %v380 = vld [vmem:[%s268 + $0x1be0] sm:$0xff]
                  %381 = vst [vmem:[%s269 + $0x7a0] sm:$0xff] %v380
                  %v382 = vld [vmem:[%s268 + $0x1ce0] sm:$0xff]
                  %383 = vst [vmem:[%s269 + $0x7e0] sm:$0xff] %v382
                  %v384 = vld [vmem:[%s268 + $0x1ce8] sm:$0xff]
                  %385 = vst [vmem:[%s269 + $0x7e8] sm:$0xff] %v384
                  %v386 = vld [vmem:[%s268 + $0x1de8] sm:$0xff]
                  %387 = vst [vmem:[%s269 + $0x828] sm:$0xff] %v386
                  %v388 = vld [vmem:[%s268 + $0x1df0] sm:$0xff]
                  %389 = vst [vmem:[%s269 + $0x830] sm:$0xff] %v388
                  %v390 = vld [vmem:[%s268 + $0x1ef0] sm:$0xff]
                  %391 = vst [vmem:[%s269 + $0x870] sm:$0xff] %v390
                  %v392 = vld [vmem:[%s268 + $0x1ef8] sm:$0xff]
                  %393 = vst [vmem:[%s269 + $0x878] sm:$0xff] %v392
                  %v394 = vld [vmem:[%s268 + $0x1ff8] sm:$0xff]
                  %395 = vst [vmem:[%s269 + $0x8b8] sm:$0xff] %v394
                  %v396 = vld [vmem:[%s268 + $0x2000] sm:$0xff]
                  %397 = vst [vmem:[%s269 + $0x8c0] sm:$0xff] %v396
                  %s398 = sadd.s32 1, %s267
                  %p399 = scmp.ge.s32.totalorder %s398, %s258
                  %s400 = scalar_select %p399, 0, %s398
                  %s401 = smul.u32 %s400, 16
                  %s402 = smul.u32 %s400, 16
                  %s403 = scalar_lea.vmem %s166, %s401
                  %s404 = scalar_lea.vmem %s156, %s402 [#allocation2]
                $region52: #{model_forward.1} parent=46 // loop_footer
                  %s264 = sadd.s32 %s262, 1
                $region53: #{model_forward.1} parent=46 // loop_footer_branch
                  %261 = sbr.rel target = $region49
                $region54: #{model_forward.1} parent=46 // loop_exit
                  _
                %s405 = sshrl.u32 %s257, 1
                %s406 = sand.u32 %s257, 1
                %s407 = smul.u32 %s405, 2
                %s408 = smul.u32 128, %s407
                %s409 = sshra.s32 %s408, 4
                %s410 = scalar_lea.vmem %s166, %s409
                %s411 = smul.u32 128, %s407
                %s412 = sshra.s32 %s411, 4
                %s413 = scalar_lea.vmem %s156, %s412 [#allocation2]
                // While loop
                $region55: #{model_forward.1} parent=46 // loop_pre_header
                  _
                $region56: #{model_forward.1} parent=46 // loop_header
                  %s417 = sphi 0, %s419
                  %p418 = scmp.ge.s32.totalorder %s417, %s406
                  %s422 = sphi 0, %s491
                  %s423 = sphi %s410, %s494
                  %s424 = sphi %s413, %s495
                $region57: #{model_forward.1} parent=46 // loop_header_branch
                  %421 = sbr.rel (%p418) target = $region61
                $region58: #{model_forward.1} parent=46 // loop_body
                  %v425 = vld [vmem:[%s423] sm:$0xff]
                  %426 = vst [vmem:[%s424] sm:$0xff] %v425
                  %v427 = vld [vmem:[%s423 + $0x108] sm:$0xff]
                  %428 = vst [vmem:[%s424 + $0x48] sm:$0xff] %v427
                  %v429 = vld [vmem:[%s423 + $0x210] sm:$0xff]
                  %430 = vst [vmem:[%s424 + $0x90] sm:$0xff] %v429
                  %v431 = vld [vmem:[%s423 + $0x318] sm:$0xff]
                  %432 = vst [vmem:[%s424 + $0xd8] sm:$0xff] %v431
                  %v433 = vld [vmem:[%s423 + $0x420] sm:$0xff]
                  %434 = vst [vmem:[%s424 + $0x120] sm:$0xff] %v433
                  %v435 = vld [vmem:[%s423 + $0x528] sm:$0xff]
                  %436 = vst [vmem:[%s424 + $0x168] sm:$0xff] %v435
                  %v437 = vld [vmem:[%s423 + $0x630] sm:$0xff]
                  %438 = vst [vmem:[%s424 + $0x1b0] sm:$0xff] %v437
                  %v439 = vld [vmem:[%s423 + $0x738] sm:$0xff]
                  %440 = vst [vmem:[%s424 + $0x1f8] sm:$0xff] %v439
                  %v441 = vld [vmem:[%s423 + $0x840] sm:$0xff]
                  %442 = vst [vmem:[%s424 + $0x240] sm:$0xff] %v441
                  %v443 = vld [vmem:[%s423 + $0x948] sm:$0xff]
                  %444 = vst [vmem:[%s424 + $0x288] sm:$0xff] %v443
                  %v445 = vld [vmem:[%s423 + $0xa50] sm:$0xff]
                  %446 = vst [vmem:[%s424 + $0x2d0] sm:$0xff] %v445
                  %v447 = vld [vmem:[%s423 + $0xb58] sm:$0xff]
                  %448 = vst [vmem:[%s424 + $0x318] sm:$0xff] %v447
                  %v449 = vld [vmem:[%s423 + $0xc60] sm:$0xff]
                  %450 = vst [vmem:[%s424 + $0x360] sm:$0xff] %v449
                  %v451 = vld [vmem:[%s423 + $0xd68] sm:$0xff]
                  %452 = vst [vmem:[%s424 + $0x3a8] sm:$0xff] %v451
                  %v453 = vld [vmem:[%s423 + $0xe70] sm:$0xff]
                  %454 = vst [vmem:[%s424 + $0x3f0] sm:$0xff] %v453
                  %v455 = vld [vmem:[%s423 + $0xf78] sm:$0xff]
                  %456 = vst [vmem:[%s424 + $0x438] sm:$0xff] %v455
                  %v457 = vld [vmem:[%s423 + $0x1080] sm:$0xff]
                  %458 = vst [vmem:[%s424 + $0x480] sm:$0xff] %v457
                  %v459 = vld [vmem:[%s423 + $0x1188] sm:$0xff]
                  %460 = vst [vmem:[%s424 + $0x4c8] sm:$0xff] %v459
                  %v461 = vld [vmem:[%s423 + $0x1290] sm:$0xff]
                  %462 = vst [vmem:[%s424 + $0x510] sm:$0xff] %v461
                  %v463 = vld [vmem:[%s423 + $0x1398] sm:$0xff]
                  %464 = vst [vmem:[%s424 + $0x558] sm:$0xff] %v463
                  %v465 = vld [vmem:[%s423 + $0x14a0] sm:$0xff]
                  %466 = vst [vmem:[%s424 + $0x5a0] sm:$0xff] %v465
                  %v467 = vld [vmem:[%s423 + $0x15a8] sm:$0xff]
                  %468 = vst [vmem:[%s424 + $0x5e8] sm:$0xff] %v467
                  %v469 = vld [vmem:[%s423 + $0x16b0] sm:$0xff]
                  %470 = vst [vmem:[%s424 + $0x630] sm:$0xff] %v469
                  %v471 = vld [vmem:[%s423 + $0x17b8] sm:$0xff]
                  %472 = vst [vmem:[%s424 + $0x678] sm:$0xff] %v471
                  %v473 = vld [vmem:[%s423 + $0x18c0] sm:$0xff]
                  %474 = vst [vmem:[%s424 + $0x6c0] sm:$0xff] %v473
                  %v475 = vld [vmem:[%s423 + $0x19c8] sm:$0xff]
                  %476 = vst [vmem:[%s424 + $0x708] sm:$0xff] %v475
                  %v477 = vld [vmem:[%s423 + $0x1ad0] sm:$0xff]
                  %478 = vst [vmem:[%s424 + $0x750] sm:$0xff] %v477
                  %v479 = vld [vmem:[%s423 + $0x1bd8] sm:$0xff]
                  %480 = vst [vmem:[%s424 + $0x798] sm:$0xff] %v479
                  %v481 = vld [vmem:[%s423 + $0x1ce0] sm:$0xff]
                  %482 = vst [vmem:[%s424 + $0x7e0] sm:$0xff] %v481
                  %v483 = vld [vmem:[%s423 + $0x1de8] sm:$0xff]
                  %484 = vst [vmem:[%s424 + $0x828] sm:$0xff] %v483
                  %v485 = vld [vmem:[%s423 + $0x1ef0] sm:$0xff]
                  %486 = vst [vmem:[%s424 + $0x870] sm:$0xff] %v485
                  %v487 = vld [vmem:[%s423 + $0x1ff8] sm:$0xff]
                  %488 = vst [vmem:[%s424 + $0x8b8] sm:$0xff] %v487
                  %s489 = sadd.s32 1, %s422
                  %p490 = scmp.ge.s32.totalorder %s489, %s406
                  %s491 = scalar_select %p490, 0, %s489
                  %s492 = smul.u32 %s491, 8
                  %s493 = smul.u32 %s491, 8
                  %s494 = scalar_lea.vmem %s410, %s492
                  %s495 = scalar_lea.vmem %s413, %s493 [#allocation2]
                $region59: #{model_forward.1} parent=46 // loop_footer
                  %s419 = sadd.s32 %s417, 1
                $region60: #{model_forward.1} parent=46 // loop_footer_branch
                  %416 = sbr.rel target = $region56
                $region61: #{model_forward.1} parent=46 // loop_exit
                  _
              $region47: #{model_forward.1} parent=31 // pred_fallthru
                _
              %p496 = pneg %p253
              // Predicated region
              $region62: #{model_forward.1} parent=31 // pred_check
                _
              $region63: #{model_forward.1} parent=31 // pred_check_branch
                %498 = sbr.rel (%p253) target = $region65
              $region64: #{model_forward.1} parent=31 // pred_region
                %s499 = sand.u32 %s167, 7
                %s500 = ssub.s32 %s167, %s499
                %s501 = scalar_lea.vmem %s166, %s500
                %s502 = ssub.s32 %s167, %s499
                %s503 = scalar_lea.vmem %s156, %s502 [#allocation2]
                %s504 = sshrl.u32 %s167, 3
                %s505 = sshrl.u32 %s504, 1
                // While loop
                $region66: #{model_forward.1} parent=64 // loop_pre_header
                  _
                $region67: #{model_forward.1} parent=64 // loop_header
                  %s509 = sphi 0, %s511
                  %p510 = scmp.ge.s32.totalorder %s509, %s505
                  %s514 = sphi 0, %s647
                  %s515 = sphi %s166, %s650
                  %s516 = sphi %s156, %s651
                $region68: #{model_forward.1} parent=64 // loop_header_branch
                  %513 = sbr.rel (%p510) target = $region72
                $region69: #{model_forward.1} parent=64 // loop_body
                  %v517 = vld [vmem:[%s515] sm:$0xff]
                  %518 = vst [vmem:[%s516] sm:$0xff] %v517
                  %v519 = vld [vmem:[%s515 + $0x8] sm:$0xff]
                  %520 = vst [vmem:[%s516 + $0x8] sm:$0xff] %v519
                  %v521 = vld [vmem:[%s515 + $0x108] sm:$0xff]
                  %522 = vst [vmem:[%s516 + $0x48] sm:$0xff] %v521
                  %v523 = vld [vmem:[%s515 + $0x110] sm:$0xff]
                  %524 = vst [vmem:[%s516 + $0x50] sm:$0xff] %v523
                  %v525 = vld [vmem:[%s515 + $0x210] sm:$0xff]
                  %526 = vst [vmem:[%s516 + $0x90] sm:$0xff] %v525
                  %v527 = vld [vmem:[%s515 + $0x218] sm:$0xff]
                  %528 = vst [vmem:[%s516 + $0x98] sm:$0xff] %v527
                  %v529 = vld [vmem:[%s515 + $0x318] sm:$0xff]
                  %530 = vst [vmem:[%s516 + $0xd8] sm:$0xff] %v529
                  %v531 = vld [vmem:[%s515 + $0x320] sm:$0xff]
                  %532 = vst [vmem:[%s516 + $0xe0] sm:$0xff] %v531
                  %v533 = vld [vmem:[%s515 + $0x420] sm:$0xff]
                  %534 = vst [vmem:[%s516 + $0x120] sm:$0xff] %v533
                  %v535 = vld [vmem:[%s515 + $0x428] sm:$0xff]
                  %536 = vst [vmem:[%s516 + $0x128] sm:$0xff] %v535
                  %v537 = vld [vmem:[%s515 + $0x528] sm:$0xff]
                  %538 = vst [vmem:[%s516 + $0x168] sm:$0xff] %v537
                  %v539 = vld [vmem:[%s515 + $0x530] sm:$0xff]
                  %540 = vst [vmem:[%s516 + $0x170] sm:$0xff] %v539
                  %v541 = vld [vmem:[%s515 + $0x630] sm:$0xff]
                  %542 = vst [vmem:[%s516 + $0x1b0] sm:$0xff] %v541
                  %v543 = vld [vmem:[%s515 + $0x638] sm:$0xff]
                  %544 = vst [vmem:[%s516 + $0x1b8] sm:$0xff] %v543
                  %v545 = vld [vmem:[%s515 + $0x738] sm:$0xff]
                  %546 = vst [vmem:[%s516 + $0x1f8] sm:$0xff] %v545
                  %v547 = vld [vmem:[%s515 + $0x740] sm:$0xff]
                  %548 = vst [vmem:[%s516 + $0x200] sm:$0xff] %v547
                  %v549 = vld [vmem:[%s515 + $0x840] sm:$0xff]
                  %550 = vst [vmem:[%s516 + $0x240] sm:$0xff] %v549
                  %v551 = vld [vmem:[%s515 + $0x848] sm:$0xff]
                  %552 = vst [vmem:[%s516 + $0x248] sm:$0xff] %v551
                  %v553 = vld [vmem:[%s515 + $0x948] sm:$0xff]
                  %554 = vst [vmem:[%s516 + $0x288] sm:$0xff] %v553
                  %v555 = vld [vmem:[%s515 + $0x950] sm:$0xff]
                  %556 = vst [vmem:[%s516 + $0x290] sm:$0xff] %v555
                  %v557 = vld [vmem:[%s515 + $0xa50] sm:$0xff]
                  %558 = vst [vmem:[%s516 + $0x2d0] sm:$0xff] %v557
                  %v559 = vld [vmem:[%s515 + $0xa58] sm:$0xff]
                  %560 = vst [vmem:[%s516 + $0x2d8] sm:$0xff] %v559
                  %v561 = vld [vmem:[%s515 + $0xb58] sm:$0xff]
                  %562 = vst [vmem:[%s516 + $0x318] sm:$0xff] %v561
                  %v563 = vld [vmem:[%s515 + $0xb60] sm:$0xff]
                  %564 = vst [vmem:[%s516 + $0x320] sm:$0xff] %v563
                  %v565 = vld [vmem:[%s515 + $0xc60] sm:$0xff]
                  %566 = vst [vmem:[%s516 + $0x360] sm:$0xff] %v565
                  %v567 = vld [vmem:[%s515 + $0xc68] sm:$0xff]
                  %568 = vst [vmem:[%s516 + $0x368] sm:$0xff] %v567
                  %v569 = vld [vmem:[%s515 + $0xd68] sm:$0xff]
                  %570 = vst [vmem:[%s516 + $0x3a8] sm:$0xff] %v569
                  %v571 = vld [vmem:[%s515 + $0xd70] sm:$0xff]
                  %572 = vst [vmem:[%s516 + $0x3b0] sm:$0xff] %v571
                  %v573 = vld [vmem:[%s515 + $0xe70] sm:$0xff]
                  %574 = vst [vmem:[%s516 + $0x3f0] sm:$0xff] %v573
                  %v575 = vld [vmem:[%s515 + $0xe78] sm:$0xff]
                  %576 = vst [vmem:[%s516 + $0x3f8] sm:$0xff] %v575
                  %v577 = vld [vmem:[%s515 + $0xf78] sm:$0xff]
                  %578 = vst [vmem:[%s516 + $0x438] sm:$0xff] %v577
                  %v579 = vld [vmem:[%s515 + $0xf80] sm:$0xff]
                  %580 = vst [vmem:[%s516 + $0x440] sm:$0xff] %v579
                  %v581 = vld [vmem:[%s515 + $0x1080] sm:$0xff]
                  %582 = vst [vmem:[%s516 + $0x480] sm:$0xff] %v581
                  %v583 = vld [vmem:[%s515 + $0x1088] sm:$0xff]
                  %584 = vst [vmem:[%s516 + $0x488] sm:$0xff] %v583
                  %v585 = vld [vmem:[%s515 + $0x1188] sm:$0xff]
                  %586 = vst [vmem:[%s516 + $0x4c8] sm:$0xff] %v585
                  %v587 = vld [vmem:[%s515 + $0x1190] sm:$0xff]
                  %588 = vst [vmem:[%s516 + $0x4d0] sm:$0xff] %v587
                  %v589 = vld [vmem:[%s515 + $0x1290] sm:$0xff]
                  %590 = vst [vmem:[%s516 + $0x510] sm:$0xff] %v589
                  %v591 = vld [vmem:[%s515 + $0x1298] sm:$0xff]
                  %592 = vst [vmem:[%s516 + $0x518] sm:$0xff] %v591
                  %v593 = vld [vmem:[%s515 + $0x1398] sm:$0xff]
                  %594 = vst [vmem:[%s516 + $0x558] sm:$0xff] %v593
                  %v595 = vld [vmem:[%s515 + $0x13a0] sm:$0xff]
                  %596 = vst [vmem:[%s516 + $0x560] sm:$0xff] %v595
                  %v597 = vld [vmem:[%s515 + $0x14a0] sm:$0xff]
                  %598 = vst [vmem:[%s516 + $0x5a0] sm:$0xff] %v597
                  %v599 = vld [vmem:[%s515 + $0x14a8] sm:$0xff]
                  %600 = vst [vmem:[%s516 + $0x5a8] sm:$0xff] %v599
                  %v601 = vld [vmem:[%s515 + $0x15a8] sm:$0xff]
                  %602 = vst [vmem:[%s516 + $0x5e8] sm:$0xff] %v601
                  %v603 = vld [vmem:[%s515 + $0x15b0] sm:$0xff]
                  %604 = vst [vmem:[%s516 + $0x5f0] sm:$0xff] %v603
                  %v605 = vld [vmem:[%s515 + $0x16b0] sm:$0xff]
                  %606 = vst [vmem:[%s516 + $0x630] sm:$0xff] %v605
                  %v607 = vld [vmem:[%s515 + $0x16b8] sm:$0xff]
                  %608 = vst [vmem:[%s516 + $0x638] sm:$0xff] %v607
                  %v609 = vld [vmem:[%s515 + $0x17b8] sm:$0xff]
                  %610 = vst [vmem:[%s516 + $0x678] sm:$0xff] %v609
                  %v611 = vld [vmem:[%s515 + $0x17c0] sm:$0xff]
                  %612 = vst [vmem:[%s516 + $0x680] sm:$0xff] %v611
                  %v613 = vld [vmem:[%s515 + $0x18c0] sm:$0xff]
                  %614 = vst [vmem:[%s516 + $0x6c0] sm:$0xff] %v613
                  %v615 = vld [vmem:[%s515 + $0x18c8] sm:$0xff]
                  %616 = vst [vmem:[%s516 + $0x6c8] sm:$0xff] %v615
                  %v617 = vld [vmem:[%s515 + $0x19c8] sm:$0xff]
                  %618 = vst [vmem:[%s516 + $0x708] sm:$0xff] %v617
                  %v619 = vld [vmem:[%s515 + $0x19d0] sm:$0xff]
                  %620 = vst [vmem:[%s516 + $0x710] sm:$0xff] %v619
                  %v621 = vld [vmem:[%s515 + $0x1ad0] sm:$0xff]
                  %622 = vst [vmem:[%s516 + $0x750] sm:$0xff] %v621
                  %v623 = vld [vmem:[%s515 + $0x1ad8] sm:$0xff]
                  %624 = vst [vmem:[%s516 + $0x758] sm:$0xff] %v623
                  %v625 = vld [vmem:[%s515 + $0x1bd8] sm:$0xff]
                  %626 = vst [vmem:[%s516 + $0x798] sm:$0xff] %v625
                  %v627 = vld [vmem:[%s515 + $0x1be0] sm:$0xff]
                  %628 = vst [vmem:[%s516 + $0x7a0] sm:$0xff] %v627
                  %v629 = vld [vmem:[%s515 + $0x1ce0] sm:$0xff]
                  %630 = vst [vmem:[%s516 + $0x7e0] sm:$0xff] %v629
                  %v631 = vld [vmem:[%s515 + $0x1ce8] sm:$0xff]
                  %632 = vst [vmem:[%s516 + $0x7e8] sm:$0xff] %v631
                  %v633 = vld [vmem:[%s515 + $0x1de8] sm:$0xff]
                  %634 = vst [vmem:[%s516 + $0x828] sm:$0xff] %v633
                  %v635 = vld [vmem:[%s515 + $0x1df0] sm:$0xff]
                  %636 = vst [vmem:[%s516 + $0x830] sm:$0xff] %v635
                  %v637 = vld [vmem:[%s515 + $0x1ef0] sm:$0xff]
                  %638 = vst [vmem:[%s516 + $0x870] sm:$0xff] %v637
                  %v639 = vld [vmem:[%s515 + $0x1ef8] sm:$0xff]
                  %640 = vst [vmem:[%s516 + $0x878] sm:$0xff] %v639
                  %v641 = vld [vmem:[%s515 + $0x1ff8] sm:$0xff]
                  %642 = vst [vmem:[%s516 + $0x8b8] sm:$0xff] %v641
                  %v643 = vld [vmem:[%s515 + $0x2000] sm:$0xff]
                  %644 = vst [vmem:[%s516 + $0x8c0] sm:$0xff] %v643
                  %s645 = sadd.s32 1, %s514
                  %p646 = scmp.ge.s32.totalorder %s645, %s505
                  %s647 = scalar_select %p646, 0, %s645
                  %s648 = smul.u32 %s647, 16
                  %s649 = smul.u32 %s647, 16
                  %s650 = scalar_lea.vmem %s166, %s648
                  %s651 = scalar_lea.vmem %s156, %s649 [#allocation2]
                $region70: #{model_forward.1} parent=64 // loop_footer
                  %s511 = sadd.s32 %s509, 1
                $region71: #{model_forward.1} parent=64 // loop_footer_branch
                  %508 = sbr.rel target = $region67
                $region72: #{model_forward.1} parent=64 // loop_exit
                  _
                %s652 = sshrl.u32 %s504, 1
                %s653 = sand.u32 %s504, 1
                %s654 = smul.u32 %s652, 2
                %s655 = smul.u32 128, %s654
                %s656 = sshra.s32 %s655, 4
                %s657 = scalar_lea.vmem %s166, %s656
                %s658 = smul.u32 128, %s654
                %s659 = sshra.s32 %s658, 4
                %s660 = scalar_lea.vmem %s156, %s659 [#allocation2]
                // While loop
                $region73: #{model_forward.1} parent=64 // loop_pre_header
                  _
                $region74: #{model_forward.1} parent=64 // loop_header
                  %s664 = sphi 0, %s666
                  %p665 = scmp.ge.s32.totalorder %s664, %s653
                  %s669 = sphi 0, %s738
                  %s670 = sphi %s657, %s741
                  %s671 = sphi %s660, %s742
                $region75: #{model_forward.1} parent=64 // loop_header_branch
                  %668 = sbr.rel (%p665) target = $region79
                $region76: #{model_forward.1} parent=64 // loop_body
                  %v672 = vld [vmem:[%s670] sm:$0xff]
                  %673 = vst [vmem:[%s671] sm:$0xff] %v672
                  %v674 = vld [vmem:[%s670 + $0x108] sm:$0xff]
                  %675 = vst [vmem:[%s671 + $0x48] sm:$0xff] %v674
                  %v676 = vld [vmem:[%s670 + $0x210] sm:$0xff]
                  %677 = vst [vmem:[%s671 + $0x90] sm:$0xff] %v676
                  %v678 = vld [vmem:[%s670 + $0x318] sm:$0xff]
                  %679 = vst [vmem:[%s671 + $0xd8] sm:$0xff] %v678
                  %v680 = vld [vmem:[%s670 + $0x420] sm:$0xff]
                  %681 = vst [vmem:[%s671 + $0x120] sm:$0xff] %v680
                  %v682 = vld [vmem:[%s670 + $0x528] sm:$0xff]
                  %683 = vst [vmem:[%s671 + $0x168] sm:$0xff] %v682
                  %v684 = vld [vmem:[%s670 + $0x630] sm:$0xff]
                  %685 = vst [vmem:[%s671 + $0x1b0] sm:$0xff] %v684
                  %v686 = vld [vmem:[%s670 + $0x738] sm:$0xff]
                  %687 = vst [vmem:[%s671 + $0x1f8] sm:$0xff] %v686
                  %v688 = vld [vmem:[%s670 + $0x840] sm:$0xff]
                  %689 = vst [vmem:[%s671 + $0x240] sm:$0xff] %v688
                  %v690 = vld [vmem:[%s670 + $0x948] sm:$0xff]
                  %691 = vst [vmem:[%s671 + $0x288] sm:$0xff] %v690
                  %v692 = vld [vmem:[%s670 + $0xa50] sm:$0xff]
                  %693 = vst [vmem:[%s671 + $0x2d0] sm:$0xff] %v692
                  %v694 = vld [vmem:[%s670 + $0xb58] sm:$0xff]
                  %695 = vst [vmem:[%s671 + $0x318] sm:$0xff] %v694
                  %v696 = vld [vmem:[%s670 + $0xc60] sm:$0xff]
                  %697 = vst [vmem:[%s671 + $0x360] sm:$0xff] %v696
                  %v698 = vld [vmem:[%s670 + $0xd68] sm:$0xff]
                  %699 = vst [vmem:[%s671 + $0x3a8] sm:$0xff] %v698
                  %v700 = vld [vmem:[%s670 + $0xe70] sm:$0xff]
                  %701 = vst [vmem:[%s671 + $0x3f0] sm:$0xff] %v700
                  %v702 = vld [vmem:[%s670 + $0xf78] sm:$0xff]
                  %703 = vst [vmem:[%s671 + $0x438] sm:$0xff] %v702
                  %v704 = vld [vmem:[%s670 + $0x1080] sm:$0xff]
                  %705 = vst [vmem:[%s671 + $0x480] sm:$0xff] %v704
                  %v706 = vld [vmem:[%s670 + $0x1188] sm:$0xff]
                  %707 = vst [vmem:[%s671 + $0x4c8] sm:$0xff] %v706
                  %v708 = vld [vmem:[%s670 + $0x1290] sm:$0xff]
                  %709 = vst [vmem:[%s671 + $0x510] sm:$0xff] %v708
                  %v710 = vld [vmem:[%s670 + $0x1398] sm:$0xff]
                  %711 = vst [vmem:[%s671 + $0x558] sm:$0xff] %v710
                  %v712 = vld [vmem:[%s670 + $0x14a0] sm:$0xff]
                  %713 = vst [vmem:[%s671 + $0x5a0] sm:$0xff] %v712
                  %v714 = vld [vmem:[%s670 + $0x15a8] sm:$0xff]
                  %715 = vst [vmem:[%s671 + $0x5e8] sm:$0xff] %v714
                  %v716 = vld [vmem:[%s670 + $0x16b0] sm:$0xff]
                  %717 = vst [vmem:[%s671 + $0x630] sm:$0xff] %v716
                  %v718 = vld [vmem:[%s670 + $0x17b8] sm:$0xff]
                  %719 = vst [vmem:[%s671 + $0x678] sm:$0xff] %v718
                  %v720 = vld [vmem:[%s670 + $0x18c0] sm:$0xff]
                  %721 = vst [vmem:[%s671 + $0x6c0] sm:$0xff] %v720
                  %v722 = vld [vmem:[%s670 + $0x19c8] sm:$0xff]
                  %723 = vst [vmem:[%s671 + $0x708] sm:$0xff] %v722
                  %v724 = vld [vmem:[%s670 + $0x1ad0] sm:$0xff]
                  %725 = vst [vmem:[%s671 + $0x750] sm:$0xff] %v724
                  %v726 = vld [vmem:[%s670 + $0x1bd8] sm:$0xff]
                  %727 = vst [vmem:[%s671 + $0x798] sm:$0xff] %v726
                  %v728 = vld [vmem:[%s670 + $0x1ce0] sm:$0xff]
                  %729 = vst [vmem:[%s671 + $0x7e0] sm:$0xff] %v728
                  %v730 = vld [vmem:[%s670 + $0x1de8] sm:$0xff]
                  %731 = vst [vmem:[%s671 + $0x828] sm:$0xff] %v730
                  %v732 = vld [vmem:[%s670 + $0x1ef0] sm:$0xff]
                  %733 = vst [vmem:[%s671 + $0x870] sm:$0xff] %v732
                  %v734 = vld [vmem:[%s670 + $0x1ff8] sm:$0xff]
                  %735 = vst [vmem:[%s671 + $0x8b8] sm:$0xff] %v734
                  %s736 = sadd.s32 1, %s669
                  %p737 = scmp.ge.s32.totalorder %s736, %s653
                  %s738 = scalar_select %p737, 0, %s736
                  %s739 = smul.u32 %s738, 8
                  %s740 = smul.u32 %s738, 8
                  %s741 = scalar_lea.vmem %s657, %s739
                  %s742 = scalar_lea.vmem %s660, %s740 [#allocation2]
                $region77: #{model_forward.1} parent=64 // loop_footer
                  %s666 = sadd.s32 %s664, 1
                $region78: #{model_forward.1} parent=64 // loop_footer_branch
                  %663 = sbr.rel target = $region74
                $region79: #{model_forward.1} parent=64 // loop_exit
                  _
                %s743 = sshll.u32 1, %s499
                %s744 = ssub.s32 %s743, 1
                loop: start=0, step=1, limit=1
                $region80: #{model_forward.1} parent=64 // loop_pre_header
                  _
                $region81: #{model_forward.1} parent=64 // loop_header
                  %s746 = sphi 0, %s750
                  %p747 = scmp.ge.s32.totalorder %s746, 1
                  %s751 = sphi %s501, %s501
                  %s752 = sphi %s503, %s503
                $region82: #{model_forward.1} parent=64 // loop_header_branch
                  %749 = sbr.rel (%p747) target = $region86
                $region83: #{model_forward.1} parent=64 // loop_body
                  %v753 = vld [vmem:[%s751] sm:%s744]
                  %754 = vst [vmem:[%s752] sm:%s744] %v753
                  %v755 = vld [vmem:[%s751 + $0x108] sm:%s744]
                  %756 = vst [vmem:[%s752 + $0x48] sm:%s744] %v755
                  %v757 = vld [vmem:[%s751 + $0x210] sm:%s744]
                  %758 = vst [vmem:[%s752 + $0x90] sm:%s744] %v757
                  %v759 = vld [vmem:[%s751 + $0x318] sm:%s744]
                  %760 = vst [vmem:[%s752 + $0xd8] sm:%s744] %v759
                  %v761 = vld [vmem:[%s751 + $0x420] sm:%s744]
                  %762 = vst [vmem:[%s752 + $0x120] sm:%s744] %v761
                  %v763 = vld [vmem:[%s751 + $0x528] sm:%s744]
                  %764 = vst [vmem:[%s752 + $0x168] sm:%s744] %v763
                  %v765 = vld [vmem:[%s751 + $0x630] sm:%s744]
                  %766 = vst [vmem:[%s752 + $0x1b0] sm:%s744] %v765
                  %v767 = vld [vmem:[%s751 + $0x738] sm:%s744]
                  %768 = vst [vmem:[%s752 + $0x1f8] sm:%s744] %v767
                  %v769 = vld [vmem:[%s751 + $0x840] sm:%s744]
                  %770 = vst [vmem:[%s752 + $0x240] sm:%s744] %v769
                  %v771 = vld [vmem:[%s751 + $0x948] sm:%s744]
                  %772 = vst [vmem:[%s752 + $0x288] sm:%s744] %v771
                  %v773 = vld [vmem:[%s751 + $0xa50] sm:%s744]
                  %774 = vst [vmem:[%s752 + $0x2d0] sm:%s744] %v773
                  %v775 = vld [vmem:[%s751 + $0xb58] sm:%s744]
                  %776 = vst [vmem:[%s752 + $0x318] sm:%s744] %v775
                  %v777 = vld [vmem:[%s751 + $0xc60] sm:%s744]
                  %778 = vst [vmem:[%s752 + $0x360] sm:%s744] %v777
                  %v779 = vld [vmem:[%s751 + $0xd68] sm:%s744]
                  %780 = vst [vmem:[%s752 + $0x3a8] sm:%s744] %v779
                  %v781 = vld [vmem:[%s751 + $0xe70] sm:%s744]
                  %782 = vst [vmem:[%s752 + $0x3f0] sm:%s744] %v781
                  %v783 = vld [vmem:[%s751 + $0xf78] sm:%s744]
                  %784 = vst [vmem:[%s752 + $0x438] sm:%s744] %v783
                  %v785 = vld [vmem:[%s751 + $0x1080] sm:%s744]
                  %786 = vst [vmem:[%s752 + $0x480] sm:%s744] %v785
                  %v787 = vld [vmem:[%s751 + $0x1188] sm:%s744]
                  %788 = vst [vmem:[%s752 + $0x4c8] sm:%s744] %v787
                  %v789 = vld [vmem:[%s751 + $0x1290] sm:%s744]
                  %790 = vst [vmem:[%s752 + $0x510] sm:%s744] %v789
                  %v791 = vld [vmem:[%s751 + $0x1398] sm:%s744]
                  %792 = vst [vmem:[%s752 + $0x558] sm:%s744] %v791
                  %v793 = vld [vmem:[%s751 + $0x14a0] sm:%s744]
                  %794 = vst [vmem:[%s752 + $0x5a0] sm:%s744] %v793
                  %v795 = vld [vmem:[%s751 + $0x15a8] sm:%s744]
                  %796 = vst [vmem:[%s752 + $0x5e8] sm:%s744] %v795
                  %v797 = vld [vmem:[%s751 + $0x16b0] sm:%s744]
                  %798 = vst [vmem:[%s752 + $0x630] sm:%s744] %v797
                  %v799 = vld [vmem:[%s751 + $0x17b8] sm:%s744]
                  %800 = vst [vmem:[%s752 + $0x678] sm:%s744] %v799
                  %v801 = vld [vmem:[%s751 + $0x18c0] sm:%s744]
                  %802 = vst [vmem:[%s752 + $0x6c0] sm:%s744] %v801
                  %v803 = vld [vmem:[%s751 + $0x19c8] sm:%s744]
                  %804 = vst [vmem:[%s752 + $0x708] sm:%s744] %v803
                  %v805 = vld [vmem:[%s751 + $0x1ad0] sm:%s744]
                  %806 = vst [vmem:[%s752 + $0x750] sm:%s744] %v805
                  %v807 = vld [vmem:[%s751 + $0x1bd8] sm:%s744]
                  %808 = vst [vmem:[%s752 + $0x798] sm:%s744] %v807
                  %v809 = vld [vmem:[%s751 + $0x1ce0] sm:%s744]
                  %810 = vst [vmem:[%s752 + $0x7e0] sm:%s744] %v809
                  %v811 = vld [vmem:[%s751 + $0x1de8] sm:%s744]
                  %812 = vst [vmem:[%s752 + $0x828] sm:%s744] %v811
                  %v813 = vld [vmem:[%s751 + $0x1ef0] sm:%s744]
                  %814 = vst [vmem:[%s752 + $0x870] sm:%s744] %v813
                  %v815 = vld [vmem:[%s751 + $0x1ff8] sm:%s744]
                  %816 = vst [vmem:[%s752 + $0x8b8] sm:%s744] %v815
                $region84: #{model_forward.1} parent=64 // loop_footer
                  %s750 = sadd.s32 1, %s746
                $region85: #{model_forward.1} parent=64 // loop_footer_branch
                  %745 = sbr.rel target = $region81
                $region86: #{model_forward.1} parent=64 // loop_exit
                  _
              $region65: #{model_forward.1} parent=31 // pred_fallthru
                _
            $region32: #{model_forward.1} parent=27 // pred_fallthru
              _
            // Predicated region
            $region33: #{model_forward.1} parent=27 // pred_check
              %p175 = pneg %p171
            $region34: #{model_forward.1} parent=27 // pred_check_branch
              %177 = sbr.rel (%p175) target = $region36
            $region35: #{model_forward.1} parent=27 // pred_region
              %s178 = sshll.u32 1, %s167
              %s179 = ssub.s32 %s178, 1
              loop: start=0, step=1, limit=1
              $region37: #{model_forward.1} parent=35 // loop_pre_header
                _
              $region38: #{model_forward.1} parent=35 // loop_header
                %s181 = sphi 0, %s185
                %p182 = scmp.ge.s32.totalorder %s181, 1
                %s186 = sphi %s166, %s166
                %s187 = sphi %s156, %s156
              $region39: #{model_forward.1} parent=35 // loop_header_branch
                %184 = sbr.rel (%p182) target = $region43
              $region40: #{model_forward.1} parent=35 // loop_body
                %v188 = vld [vmem:[%s186] sm:%s179]
                %189 = vst [vmem:[%s187] sm:%s179] %v188
                %v190 = vld [vmem:[%s186 + $0x108] sm:%s179]
                %191 = vst [vmem:[%s187 + $0x48] sm:%s179] %v190
                %v192 = vld [vmem:[%s186 + $0x210] sm:%s179]
                %193 = vst [vmem:[%s187 + $0x90] sm:%s179] %v192
                %v194 = vld [vmem:[%s186 + $0x318] sm:%s179]
                %195 = vst [vmem:[%s187 + $0xd8] sm:%s179] %v194
                %v196 = vld [vmem:[%s186 + $0x420] sm:%s179]
                %197 = vst [vmem:[%s187 + $0x120] sm:%s179] %v196
                %v198 = vld [vmem:[%s186 + $0x528] sm:%s179]
                %199 = vst [vmem:[%s187 + $0x168] sm:%s179] %v198
                %v200 = vld [vmem:[%s186 + $0x630] sm:%s179]
                %201 = vst [vmem:[%s187 + $0x1b0] sm:%s179] %v200
                %v202 = vld [vmem:[%s186 + $0x738] sm:%s179]
                %203 = vst [vmem:[%s187 + $0x1f8] sm:%s179] %v202
                %v204 = vld [vmem:[%s186 + $0x840] sm:%s179]
                %205 = vst [vmem:[%s187 + $0x240] sm:%s179] %v204
                %v206 = vld [vmem:[%s186 + $0x948] sm:%s179]
                %207 = vst [vmem:[%s187 + $0x288] sm:%s179] %v206
                %v208 = vld [vmem:[%s186 + $0xa50] sm:%s179]
                %209 = vst [vmem:[%s187 + $0x2d0] sm:%s179] %v208
                %v210 = vld [vmem:[%s186 + $0xb58] sm:%s179]
                %211 = vst [vmem:[%s187 + $0x318] sm:%s179] %v210
                %v212 = vld [vmem:[%s186 + $0xc60] sm:%s179]
                %213 = vst [vmem:[%s187 + $0x360] sm:%s179] %v212
                %v214 = vld [vmem:[%s186 + $0xd68] sm:%s179]
                %215 = vst [vmem:[%s187 + $0x3a8] sm:%s179] %v214
                %v216 = vld [vmem:[%s186 + $0xe70] sm:%s179]
                %217 = vst [vmem:[%s187 + $0x3f0] sm:%s179] %v216
                %v218 = vld [vmem:[%s186 + $0xf78] sm:%s179]
                %219 = vst [vmem:[%s187 + $0x438] sm:%s179] %v218
                %v220 = vld [vmem:[%s186 + $0x1080] sm:%s179]
                %221 = vst [vmem:[%s187 + $0x480] sm:%s179] %v220
                %v222 = vld [vmem:[%s186 + $0x1188] sm:%s179]
                %223 = vst [vmem:[%s187 + $0x4c8] sm:%s179] %v222
                %v224 = vld [vmem:[%s186 + $0x1290] sm:%s179]
                %225 = vst [vmem:[%s187 + $0x510] sm:%s179] %v224
                %v226 = vld [vmem:[%s186 + $0x1398] sm:%s179]
                %227 = vst [vmem:[%s187 + $0x558] sm:%s179] %v226
                %v228 = vld [vmem:[%s186 + $0x14a0] sm:%s179]
                %229 = vst [vmem:[%s187 + $0x5a0] sm:%s179] %v228
                %v230 = vld [vmem:[%s186 + $0x15a8] sm:%s179]
                %231 = vst [vmem:[%s187 + $0x5e8] sm:%s179] %v230
                %v232 = vld [vmem:[%s186 + $0x16b0] sm:%s179]
                %233 = vst [vmem:[%s187 + $0x630] sm:%s179] %v232
                %v234 = vld [vmem:[%s186 + $0x17b8] sm:%s179]
                %235 = vst [vmem:[%s187 + $0x678] sm:%s179] %v234
                %v236 = vld [vmem:[%s186 + $0x18c0] sm:%s179]
                %237 = vst [vmem:[%s187 + $0x6c0] sm:%s179] %v236
                %v238 = vld [vmem:[%s186 + $0x19c8] sm:%s179]
                %239 = vst [vmem:[%s187 + $0x708] sm:%s179] %v238
                %v240 = vld [vmem:[%s186 + $0x1ad0] sm:%s179]
                %241 = vst [vmem:[%s187 + $0x750] sm:%s179] %v240
                %v242 = vld [vmem:[%s186 + $0x1bd8] sm:%s179]
                %243 = vst [vmem:[%s187 + $0x798] sm:%s179] %v242
                %v244 = vld [vmem:[%s186 + $0x1ce0] sm:%s179]
                %245 = vst [vmem:[%s187 + $0x7e0] sm:%s179] %v244
                %v246 = vld [vmem:[%s186 + $0x1de8] sm:%s179]
                %247 = vst [vmem:[%s187 + $0x828] sm:%s179] %v246
                %v248 = vld [vmem:[%s186 + $0x1ef0] sm:%s179]
                %249 = vst [vmem:[%s187 + $0x870] sm:%s179] %v248
                %v250 = vld [vmem:[%s186 + $0x1ff8] sm:%s179]
                %251 = vst [vmem:[%s187 + $0x8b8] sm:%s179] %v250
              $region41: #{model_forward.1} parent=35 // loop_footer
                %s185 = sadd.s32 1, %s181
              $region42: #{model_forward.1} parent=35 // loop_footer_branch
                %180 = sbr.rel target = $region38
              $region43: #{model_forward.1} parent=35 // loop_exit
                _
            $region36: #{model_forward.1} parent=27 // pred_fallthru
              _
          $region28: #{model_forward.1} parent=23 // pred_fallthru
            _
          %817 = vnop
        $region24: #{model_forward.1} parent=19 // pred_fallthru
          _
        // Predicated region
        $region87: #{model_forward.1} parent=19 // pred_check
          %p818 = pneg %p96
        $region88: #{model_forward.1} parent=19 // pred_check_branch
          %820 = sbr.rel (%p818) target = $region90
        $region89: #{model_forward.1} parent=19 // pred_region
          %s821 = smul.u32 %s16, 2
          %s822 = sadd.s32 %s821, %s17
          %s823 = smul.u32 9, %s822
          %p824 = scmp.lt.s32.totalorder %s823, 35
          %s825 = scalar_select %p824, %s823, 35
          %s826 = scalar_lea.vmem %s2, %s825
          %s827 = smul.u32 %s16, 2
          %s828 = sadd.s32 %s827, %s17
          %s829 = smul.u32 9, %s828
        $region90: #{model_forward.1} parent=19 // pred_fallthru
          _
      $region20: #{model_forward.1} parent=5 // pred_fallthru
        _
      %p830 = scmp.le.s32.totalorder 1, %s9
      %p831 = scmp.lt.s32.totalorder %s9, 5
      %p832 = pnand %p830, %p831
      %p833 = pneg %p832
      // Predicated region
      $region91: #{model_forward.1} parent=5 // pred_check
        _
      $region92: #{model_forward.1} parent=5 // pred_check_branch
        %835 = sbr.rel (%p832) target = $region94
      $region93: #{model_forward.1} parent=5 // pred_region
        %s836 = ssub.s32 %s9, 1
        %s837 = sand.u32 %s59, 1
        %s838 = sand.u32 %s59, 1
        %s839 = smul.addr %s838, 2304
        %s840 = scalar_lea.vmem [#allocation2], %s839
        // Predicated region
        $region95: #{model_forward.1} parent=93 // pred_check
          %p841 = pneg %p72
        $region96: #{model_forward.1} parent=93 // pred_check_branch
          %843 = sbr.rel (%p841) target = $region98
        $region97: #{model_forward.1} parent=93 // pred_region
          _
        $region98: #{model_forward.1} parent=93 // pred_fallthru
          _
        %p844 = pneg %p42
        %p845 = pneg %p39
        %s846 = sand.u32 %s59, 1
        %s847 = sand.u32 %s59, 1
        %s848 = smul.addr %s847, 2304
        %s849 = scalar_lea.vmem [#allocation2], %s848
        %p850 = pneg %p72
        %p851 = pneg %p69
        %s852 = smul.u32 %s18, 2
        %s853 = sadd.s32 %s852, %s19
        %s854 = smul.u32 9, %s853
        %p855 = scmp.lt.s32.totalorder %s854, 35
        %s856 = scalar_select %p855, %s854, 35
        %s857 = scalar_lea.vmem %s2, %s856
        %p858 = pneg %p102
        %p859 = pneg %p99
        %p860 = pneg %p128
        %p861 = pneg %p125
        %s862 = smul.u32 16, %s18
        %p863 = scmp.lt.s32.totalorder %s862, 31
        %s864 = scalar_select %p863, %s862, 31
        %s865 = smul.addr %s864, 8
        %s866 = scalar_lea.vmem %s3, %s865
        %s867 = smul.u32 %s18, 2
        %s868 = sadd.s32 %s867, %s19
        %s869 = smul.u32 9, %s868
        %s870 = ssub.s32 33, %s869
        %p871 = scmp.lt.s32.totalorder %s870, 9
        %s872 = scalar_select %p871, %s870, 9
        %s873 = smul.u32 4096, %s872
        %s874 = smul.u32 %s18, 2
        %s875 = sadd.s32 %s874, %s19
        %s876 = smul.u32 9, %s875
        %p877 = scmp.lt.s32.totalorder %s876, 35
        %s878 = scalar_select %p877, %s876, 35
        %s879 = scalar_lea.vmem %s2, %s878
        %s880 = smul.u32 %s18, 2
        %s881 = sadd.s32 %s880, %s19
        %s882 = smul.u32 9, %s881
        %s883 = smul.u32 16, %s18
        %p884 = scmp.lt.s32.totalorder %s883, 31
        %s885 = scalar_select %p884, %s883, 31
        %s886 = smul.addr %s885, 8
        %s887 = scalar_lea.vmem %s3, %s886
        %s888 = smul.u32 16, %s18
        %p889 = scmp.eq.s32.totalorder %s19, 0
        // Predicated region
        $region99: #{model_forward.1} parent=93 // pred_check
          %p890 = pneg %p889
        $region100: #{model_forward.1} parent=93 // pred_check_branch
          %892 = sbr.rel (%p890) target = $region102
        $region101: #{model_forward.1} parent=93 // pred_region
          %vm893 = vcmask 7168
          %894 = vst.msk [vmem:[%s887] sm:$0xff] %vm893, 0.0
          %895 = vst.msk [vmem:[%s887 + $0x8] sm:$0xff] %vm893, 0.0
          %896 = vst.msk [vmem:[%s887 + $0x10] sm:$0xff] %vm893, 0.0
          %897 = vst.msk [vmem:[%s887 + $0x18] sm:$0xff] %vm893, 0.0
          %898 = vst.msk [vmem:[%s887 + $0x20] sm:$0xff] %vm893, 0.0
          %899 = vst.msk [vmem:[%s887 + $0x28] sm:$0xff] %vm893, 0.0
          %900 = vst.msk [vmem:[%s887 + $0x30] sm:$0xff] %vm893, 0.0
          %901 = vst.msk [vmem:[%s887 + $0x38] sm:$0xff] %vm893, 0.0
          %902 = vst.msk [vmem:[%s887 + $0x40] sm:$0xff] %vm893, 0.0
          %903 = vst.msk [vmem:[%s887 + $0x48] sm:$0xff] %vm893, 0.0
          %904 = vst.msk [vmem:[%s887 + $0x50] sm:$0xff] %vm893, 0.0
          %905 = vst.msk [vmem:[%s887 + $0x58] sm:$0xff] %vm893, 0.0
          %906 = vst.msk [vmem:[%s887 + $0x60] sm:$0xff] %vm893, 0.0
          %907 = vst.msk [vmem:[%s887 + $0x68] sm:$0xff] %vm893, 0.0
          %908 = vst.msk [vmem:[%s887 + $0x70] sm:$0xff] %vm893, 0.0
          %909 = vst.msk [vmem:[%s887 + $0x78] sm:$0xff] %vm893, 0.0
        $region102: #{model_forward.1} parent=93 // pred_fallthru
          _
        %v910 = vld [vmem:[%s0] sm:$0xff]
        %v911 = vld [vmem:[%s0 + $0x8] sm:$0xff]
        %v912 = vld [vmem:[%s0 + $0x10] sm:$0xff]
        %v913 = vld [vmem:[%s0 + $0x18] sm:$0xff]
        %v914 = vld [vmem:[%s0 + $0x20] sm:$0xff]
        %v915 = vld [vmem:[%s0 + $0x28] sm:$0xff]
        %v916 = vld [vmem:[%s0 + $0x30] sm:$0xff]
        %v917 = vld [vmem:[%s0 + $0x38] sm:$0xff]
        %v918 = vld [vmem:[%s0 + $0x40] sm:$0xff]
        %v919 = vld [vmem:[%s0 + $0x48] sm:$0xff]
        %v920 = vld [vmem:[%s0 + $0x50] sm:$0xff]
        %v921 = vld [vmem:[%s0 + $0x58] sm:$0xff]
        %v922 = vld [vmem:[%s0 + $0x60] sm:$0xff]
        %v923 = vld [vmem:[%s0 + $0x68] sm:$0xff]
        %v924 = vld [vmem:[%s0 + $0x70] sm:$0xff]
        %v925 = vld [vmem:[%s0 + $0x78] sm:$0xff]
        %v926 = vld [vmem:[%s0 + $0x80] sm:$0xff]
        %v927 = vld [vmem:[%s0 + $0x88] sm:$0xff]
        %v928 = vld [vmem:[%s0 + $0x90] sm:$0xff]
        %v929 = vld [vmem:[%s0 + $0x98] sm:$0xff]
        %v930 = vld [vmem:[%s0 + $0xa0] sm:$0xff]
        %v931 = vld [vmem:[%s0 + $0xa8] sm:$0xff]
        %v932 = vld [vmem:[%s0 + $0xb0] sm:$0xff]
        %v933 = vld [vmem:[%s0 + $0xb8] sm:$0xff]
        %v934 = vld [vmem:[%s0 + $0xc0] sm:$0xff]
        %v935 = vld [vmem:[%s0 + $0xc8] sm:$0xff]
        %v936 = vld [vmem:[%s0 + $0xd0] sm:$0xff]
        %v937 = vld [vmem:[%s0 + $0xd8] sm:$0xff]
        %v938 = vld [vmem:[%s0 + $0xe0] sm:$0xff]
        %v939 = vld [vmem:[%s0 + $0xe8] sm:$0xff]
        %v940 = vld [vmem:[%s0 + $0xf0] sm:$0xff]
        %v941 = vld [vmem:[%s0 + $0xf8] sm:$0xff]
        %v942 = vld [vmem:[%s840] sm:$0xff]
        %v943 = vld [vmem:[%s840 + $0x8] sm:$0xff]
        %v944 = vld [vmem:[%s840 + $0x10] sm:$0xff]
        %v945 = vld [vmem:[%s840 + $0x18] sm:$0xff]
        %v946 = vld [vmem:[%s840 + $0x20] sm:$0xff]
        %v947 = vld [vmem:[%s840 + $0x28] sm:$0xff]
        %v948 = vld [vmem:[%s840 + $0x30] sm:$0xff]
        %v949 = vld [vmem:[%s840 + $0x38] sm:$0xff]
        %v950 = vld [vmem:[%s840 + $0x40] sm:$0xff]
        %v951 = vld [vmem:[%s840 + $0x48] sm:$0xff]
        %v952 = vld [vmem:[%s840 + $0x50] sm:$0xff]
        %v953 = vld [vmem:[%s840 + $0x58] sm:$0xff]
        %v954 = vld [vmem:[%s840 + $0x60] sm:$0xff]
        %v955 = vld [vmem:[%s840 + $0x68] sm:$0xff]
        %v956 = vld [vmem:[%s840 + $0x70] sm:$0xff]
        %v957 = vld [vmem:[%s840 + $0x78] sm:$0xff]
        %v958 = vld [vmem:[%s840 + $0x80] sm:$0xff]
        %v959 = vld [vmem:[%s840 + $0x88] sm:$0xff]
        %v960 = vld [vmem:[%s840 + $0x90] sm:$0xff]
        %v961 = vld [vmem:[%s840 + $0x98] sm:$0xff]
        %v962 = vld [vmem:[%s840 + $0xa0] sm:$0xff]
        %v963 = vld [vmem:[%s840 + $0xa8] sm:$0xff]
        %v964 = vld [vmem:[%s840 + $0xb0] sm:$0xff]
        %v965 = vld [vmem:[%s840 + $0xb8] sm:$0xff]
        %v966 = vld [vmem:[%s840 + $0xc0] sm:$0xff]
        %v967 = vld [vmem:[%s840 + $0xc8] sm:$0xff]
        %v968 = vld [vmem:[%s840 + $0xd0] sm:$0xff]
        %v969 = vld [vmem:[%s840 + $0xd8] sm:$0xff]
        %v970 = vld [vmem:[%s840 + $0xe0] sm:$0xff]
        %v971 = vld [vmem:[%s840 + $0xe8] sm:$0xff]
        %v972 = vld [vmem:[%s840 + $0xf0] sm:$0xff]
        %v973 = vld [vmem:[%s840 + $0xf8] sm:$0xff]
        %v974 = vld [vmem:[%s840 + $0x100] sm:$0xff]
        %v975 = vld [vmem:[%s840 + $0x108] sm:$0xff]
        %v976 = vld [vmem:[%s840 + $0x110] sm:$0xff]
        %v977 = vld [vmem:[%s840 + $0x118] sm:$0xff]
        %v978 = vld [vmem:[%s840 + $0x120] sm:$0xff]
        %v979 = vld [vmem:[%s840 + $0x128] sm:$0xff]
        %v980 = vld [vmem:[%s840 + $0x130] sm:$0xff]
        %v981 = vld [vmem:[%s840 + $0x138] sm:$0xff]
        %v982 = vld [vmem:[%s840 + $0x140] sm:$0xff]
        %v983 = vld [vmem:[%s840 + $0x148] sm:$0xff]
        %v984 = vld [vmem:[%s840 + $0x150] sm:$0xff]
        %v985 = vld [vmem:[%s840 + $0x158] sm:$0xff]
        %v986 = vld [vmem:[%s840 + $0x160] sm:$0xff]
        %v987 = vld [vmem:[%s840 + $0x168] sm:$0xff]
        %v988 = vld [vmem:[%s840 + $0x170] sm:$0xff]
        %v989 = vld [vmem:[%s840 + $0x178] sm:$0xff]
        %v990 = vld [vmem:[%s840 + $0x180] sm:$0xff]
        %v991 = vld [vmem:[%s840 + $0x188] sm:$0xff]
        %v992 = vld [vmem:[%s840 + $0x190] sm:$0xff]
        %v993 = vld [vmem:[%s840 + $0x198] sm:$0xff]
        %v994 = vld [vmem:[%s840 + $0x1a0] sm:$0xff]
        %v995 = vld [vmem:[%s840 + $0x1a8] sm:$0xff]
        %v996 = vld [vmem:[%s840 + $0x1b0] sm:$0xff]
        %v997 = vld [vmem:[%s840 + $0x1b8] sm:$0xff]
        %v998 = vld [vmem:[%s840 + $0x1c0] sm:$0xff]
        %v999 = vld [vmem:[%s840 + $0x1c8] sm:$0xff]
        %v1000 = vld [vmem:[%s840 + $0x1d0] sm:$0xff]
        %v1001 = vld [vmem:[%s840 + $0x1d8] sm:$0xff]
        %v1002 = vld [vmem:[%s840 + $0x1e0] sm:$0xff]
        %v1003 = vld [vmem:[%s840 + $0x1e8] sm:$0xff]
        %v1004 = vld [vmem:[%s840 + $0x1f0] sm:$0xff]
        %v1005 = vld [vmem:[%s840 + $0x1f8] sm:$0xff]
        %v1006 = vld [vmem:[%s840 + $0x200] sm:$0xff]
        %v1007 = vld [vmem:[%s840 + $0x208] sm:$0xff]
        %v1008 = vld [vmem:[%s840 + $0x210] sm:$0xff]
        %v1009 = vld [vmem:[%s840 + $0x218] sm:$0xff]
        %v1010 = vld [vmem:[%s840 + $0x220] sm:$0xff]
        %v1011 = vld [vmem:[%s840 + $0x228] sm:$0xff]
        %v1012 = vld [vmem:[%s840 + $0x230] sm:$0xff]
        %v1013 = vld [vmem:[%s840 + $0x238] sm:$0xff]
        %v1014 = vld [vmem:[%s840 + $0x240] sm:$0xff]
        %v1015 = vld [vmem:[%s840 + $0x248] sm:$0xff]
        %v1016 = vld [vmem:[%s840 + $0x250] sm:$0xff]
        %v1017 = vld [vmem:[%s840 + $0x258] sm:$0xff]
        %v1018 = vld [vmem:[%s840 + $0x260] sm:$0xff]
        %v1019 = vld [vmem:[%s840 + $0x268] sm:$0xff]
        %v1020 = vld [vmem:[%s840 + $0x270] sm:$0xff]
        %v1021 = vld [vmem:[%s840 + $0x278] sm:$0xff]
        %v1022 = vld [vmem:[%s840 + $0x280] sm:$0xff]
        %v1023 = vld [vmem:[%s840 + $0x288] sm:$0xff]
        %v1024 = vld [vmem:[%s840 + $0x290] sm:$0xff]
        %v1025 = vld [vmem:[%s840 + $0x298] sm:$0xff]
        %v1026 = vld [vmem:[%s840 + $0x2a0] sm:$0xff]
        %v1027 = vld [vmem:[%s840 + $0x2a8] sm:$0xff]
        %v1028 = vld [vmem:[%s840 + $0x2b0] sm:$0xff]
        %v1029 = vld [vmem:[%s840 + $0x2b8] sm:$0xff]
        %v1030 = vld [vmem:[%s840 + $0x2c0] sm:$0xff]
        %v1031 = vld [vmem:[%s840 + $0x2c8] sm:$0xff]
        %v1032 = vld [vmem:[%s840 + $0x2d0] sm:$0xff]
        %v1033 = vld [vmem:[%s840 + $0x2d8] sm:$0xff]
        %v1034 = vld [vmem:[%s840 + $0x2e0] sm:$0xff]
        %v1035 = vld [vmem:[%s840 + $0x2e8] sm:$0xff]
        %v1036 = vld [vmem:[%s840 + $0x2f0] sm:$0xff]
        %v1037 = vld [vmem:[%s840 + $0x2f8] sm:$0xff]
        %v1038 = vld [vmem:[%s840 + $0x300] sm:$0xff]
        %v1039 = vld [vmem:[%s840 + $0x308] sm:$0xff]
        %v1040 = vld [vmem:[%s840 + $0x310] sm:$0xff]
        %v1041 = vld [vmem:[%s840 + $0x318] sm:$0xff]
        %v1042 = vld [vmem:[%s840 + $0x320] sm:$0xff]
        %v1043 = vld [vmem:[%s840 + $0x328] sm:$0xff]
        %v1044 = vld [vmem:[%s840 + $0x330] sm:$0xff]
        %v1045 = vld [vmem:[%s840 + $0x338] sm:$0xff]
        %v1046 = vld [vmem:[%s840 + $0x340] sm:$0xff]
        %v1047 = vld [vmem:[%s840 + $0x348] sm:$0xff]
        %v1048 = vld [vmem:[%s840 + $0x350] sm:$0xff]
        %v1049 = vld [vmem:[%s840 + $0x358] sm:$0xff]
        %v1050 = vld [vmem:[%s840 + $0x360] sm:$0xff]
        %v1051 = vld [vmem:[%s840 + $0x368] sm:$0xff]
        %v1052 = vld [vmem:[%s840 + $0x370] sm:$0xff]
        %v1053 = vld [vmem:[%s840 + $0x378] sm:$0xff]
        %v1054 = vld [vmem:[%s840 + $0x380] sm:$0xff]
        %v1055 = vld [vmem:[%s840 + $0x388] sm:$0xff]
        %v1056 = vld [vmem:[%s840 + $0x390] sm:$0xff]
        %v1057 = vld [vmem:[%s840 + $0x398] sm:$0xff]
        %v1058 = vld [vmem:[%s840 + $0x3a0] sm:$0xff]
        %v1059 = vld [vmem:[%s840 + $0x3a8] sm:$0xff]
        %v1060 = vld [vmem:[%s840 + $0x3b0] sm:$0xff]
        %v1061 = vld [vmem:[%s840 + $0x3b8] sm:$0xff]
        %v1062 = vld [vmem:[%s840 + $0x3c0] sm:$0xff]
        %v1063 = vld [vmem:[%s840 + $0x3c8] sm:$0xff]
        %v1064 = vld [vmem:[%s840 + $0x3d0] sm:$0xff]
        %v1065 = vld [vmem:[%s840 + $0x3d8] sm:$0xff]
        %v1066 = vld [vmem:[%s840 + $0x3e0] sm:$0xff]
        %v1067 = vld [vmem:[%s840 + $0x3e8] sm:$0xff]
        %v1068 = vld [vmem:[%s840 + $0x3f0] sm:$0xff]
        %v1069 = vld [vmem:[%s840 + $0x3f8] sm:$0xff]
        %v1070 = vld [vmem:[%s840 + $0x400] sm:$0xff]
        %v1071 = vld [vmem:[%s840 + $0x408] sm:$0xff]
        %v1072 = vld [vmem:[%s840 + $0x410] sm:$0xff]
        %v1073 = vld [vmem:[%s840 + $0x418] sm:$0xff]
        %v1074 = vld [vmem:[%s840 + $0x420] sm:$0xff]
        %v1075 = vld [vmem:[%s840 + $0x428] sm:$0xff]
        %v1076 = vld [vmem:[%s840 + $0x430] sm:$0xff]
        %v1077 = vld [vmem:[%s840 + $0x438] sm:$0xff]
        %v1078 = vld [vmem:[%s840 + $0x440] sm:$0xff]
        %v1079 = vld [vmem:[%s840 + $0x448] sm:$0xff]
        %v1080 = vld [vmem:[%s840 + $0x450] sm:$0xff]
        %v1081 = vld [vmem:[%s840 + $0x458] sm:$0xff]
        %v1082 = vld [vmem:[%s840 + $0x460] sm:$0xff]
        %v1083 = vld [vmem:[%s840 + $0x468] sm:$0xff]
        %v1084 = vld [vmem:[%s840 + $0x470] sm:$0xff]
        %v1085 = vld [vmem:[%s840 + $0x478] sm:$0xff]
        %v1086 = vld [vmem:[%s840 + $0x480] sm:$0xff]
        %v1087 = vld [vmem:[%s840 + $0x488] sm:$0xff]
        %v1088 = vld [vmem:[%s840 + $0x490] sm:$0xff]
        %v1089 = vld [vmem:[%s840 + $0x498] sm:$0xff]
        %v1090 = vld [vmem:[%s840 + $0x4a0] sm:$0xff]
        %v1091 = vld [vmem:[%s840 + $0x4a8] sm:$0xff]
        %v1092 = vld [vmem:[%s840 + $0x4b0] sm:$0xff]
        %v1093 = vld [vmem:[%s840 + $0x4b8] sm:$0xff]
        %v1094 = vld [vmem:[%s840 + $0x4c0] sm:$0xff]
        %v1095 = vld [vmem:[%s840 + $0x4c8] sm:$0xff]
        %v1096 = vld [vmem:[%s840 + $0x4d0] sm:$0xff]
        %v1097 = vld [vmem:[%s840 + $0x4d8] sm:$0xff]
        %v1098 = vld [vmem:[%s840 + $0x4e0] sm:$0xff]
        %v1099 = vld [vmem:[%s840 + $0x4e8] sm:$0xff]
        %v1100 = vld [vmem:[%s840 + $0x4f0] sm:$0xff]
        %v1101 = vld [vmem:[%s840 + $0x4f8] sm:$0xff]
        %v1102 = vld [vmem:[%s840 + $0x500] sm:$0xff]
        %v1103 = vld [vmem:[%s840 + $0x508] sm:$0xff]
        %v1104 = vld [vmem:[%s840 + $0x510] sm:$0xff]
        %v1105 = vld [vmem:[%s840 + $0x518] sm:$0xff]
        %v1106 = vld [vmem:[%s840 + $0x520] sm:$0xff]
        %v1107 = vld [vmem:[%s840 + $0x528] sm:$0xff]
        %v1108 = vld [vmem:[%s840 + $0x530] sm:$0xff]
        %v1109 = vld [vmem:[%s840 + $0x538] sm:$0xff]
        %v1110 = vld [vmem:[%s840 + $0x540] sm:$0xff]
        %v1111 = vld [vmem:[%s840 + $0x548] sm:$0xff]
        %v1112 = vld [vmem:[%s840 + $0x550] sm:$0xff]
        %v1113 = vld [vmem:[%s840 + $0x558] sm:$0xff]
        %v1114 = vld [vmem:[%s840 + $0x560] sm:$0xff]
        %v1115 = vld [vmem:[%s840 + $0x568] sm:$0xff]
        %v1116 = vld [vmem:[%s840 + $0x570] sm:$0xff]
        %v1117 = vld [vmem:[%s840 + $0x578] sm:$0xff]
        %v1118 = vld [vmem:[%s840 + $0x580] sm:$0xff]
        %v1119 = vld [vmem:[%s840 + $0x588] sm:$0xff]
        %v1120 = vld [vmem:[%s840 + $0x590] sm:$0xff]
        %v1121 = vld [vmem:[%s840 + $0x598] sm:$0xff]
        %v1122 = vld [vmem:[%s840 + $0x5a0] sm:$0xff]
        %v1123 = vld [vmem:[%s840 + $0x5a8] sm:$0xff]
        %v1124 = vld [vmem:[%s840 + $0x5b0] sm:$0xff]
        %v1125 = vld [vmem:[%s840 + $0x5b8] sm:$0xff]
        %v1126 = vld [vmem:[%s840 + $0x5c0] sm:$0xff]
        %v1127 = vld [vmem:[%s840 + $0x5c8] sm:$0xff]
        %v1128 = vld [vmem:[%s840 + $0x5d0] sm:$0xff]
        %v1129 = vld [vmem:[%s840 + $0x5d8] sm:$0xff]
        %v1130 = vld [vmem:[%s840 + $0x5e0] sm:$0xff]
        %v1131 = vld [vmem:[%s840 + $0x5e8] sm:$0xff]
        %v1132 = vld [vmem:[%s840 + $0x5f0] sm:$0xff]
        %v1133 = vld [vmem:[%s840 + $0x5f8] sm:$0xff]
        %v1134 = vld [vmem:[%s840 + $0x600] sm:$0xff]
        %v1135 = vld [vmem:[%s840 + $0x608] sm:$0xff]
        %v1136 = vld [vmem:[%s840 + $0x610] sm:$0xff]
        %v1137 = vld [vmem:[%s840 + $0x618] sm:$0xff]
        %v1138 = vld [vmem:[%s840 + $0x620] sm:$0xff]
        %v1139 = vld [vmem:[%s840 + $0x628] sm:$0xff]
        %v1140 = vld [vmem:[%s840 + $0x630] sm:$0xff]
        %v1141 = vld [vmem:[%s840 + $0x638] sm:$0xff]
        %v1142 = vld [vmem:[%s840 + $0x640] sm:$0xff]
        %v1143 = vld [vmem:[%s840 + $0x648] sm:$0xff]
        %v1144 = vld [vmem:[%s840 + $0x650] sm:$0xff]
        %v1145 = vld [vmem:[%s840 + $0x658] sm:$0xff]
        %v1146 = vld [vmem:[%s840 + $0x660] sm:$0xff]
        %v1147 = vld [vmem:[%s840 + $0x668] sm:$0xff]
        %v1148 = vld [vmem:[%s840 + $0x670] sm:$0xff]
        %v1149 = vld [vmem:[%s840 + $0x678] sm:$0xff]
        %v1150 = vld [vmem:[%s840 + $0x680] sm:$0xff]
        %v1151 = vld [vmem:[%s840 + $0x688] sm:$0xff]
        %v1152 = vld [vmem:[%s840 + $0x690] sm:$0xff]
        %v1153 = vld [vmem:[%s840 + $0x698] sm:$0xff]
        %v1154 = vld [vmem:[%s840 + $0x6a0] sm:$0xff]
        %v1155 = vld [vmem:[%s840 + $0x6a8] sm:$0xff]
        %v1156 = vld [vmem:[%s840 + $0x6b0] sm:$0xff]
        %v1157 = vld [vmem:[%s840 + $0x6b8] sm:$0xff]
        %v1158 = vld [vmem:[%s840 + $0x6c0] sm:$0xff]
        %v1159 = vld [vmem:[%s840 + $0x6c8] sm:$0xff]
        %v1160 = vld [vmem:[%s840 + $0x6d0] sm:$0xff]
        %v1161 = vld [vmem:[%s840 + $0x6d8] sm:$0xff]
        %v1162 = vld [vmem:[%s840 + $0x6e0] sm:$0xff]
        %v1163 = vld [vmem:[%s840 + $0x6e8] sm:$0xff]
        %v1164 = vld [vmem:[%s840 + $0x6f0] sm:$0xff]
        %v1165 = vld [vmem:[%s840 + $0x6f8] sm:$0xff]
        %v1166 = vld [vmem:[%s840 + $0x700] sm:$0xff]
        %v1167 = vld [vmem:[%s840 + $0x708] sm:$0xff]
        %v1168 = vld [vmem:[%s840 + $0x710] sm:$0xff]
        %v1169 = vld [vmem:[%s840 + $0x718] sm:$0xff]
        %v1170 = vld [vmem:[%s840 + $0x720] sm:$0xff]
        %v1171 = vld [vmem:[%s840 + $0x728] sm:$0xff]
        %v1172 = vld [vmem:[%s840 + $0x730] sm:$0xff]
        %v1173 = vld [vmem:[%s840 + $0x738] sm:$0xff]
        %v1174 = vld [vmem:[%s840 + $0x740] sm:$0xff]
        %v1175 = vld [vmem:[%s840 + $0x748] sm:$0xff]
        %v1176 = vld [vmem:[%s840 + $0x750] sm:$0xff]
        %v1177 = vld [vmem:[%s840 + $0x758] sm:$0xff]
        %v1178 = vld [vmem:[%s840 + $0x760] sm:$0xff]
        %v1179 = vld [vmem:[%s840 + $0x768] sm:$0xff]
        %v1180 = vld [vmem:[%s840 + $0x770] sm:$0xff]
        %v1181 = vld [vmem:[%s840 + $0x778] sm:$0xff]
        %v1182 = vld [vmem:[%s840 + $0x780] sm:$0xff]
        %v1183 = vld [vmem:[%s840 + $0x788] sm:$0xff]
        %v1184 = vld [vmem:[%s840 + $0x790] sm:$0xff]
        %v1185 = vld [vmem:[%s840 + $0x798] sm:$0xff]
        %v1186 = vld [vmem:[%s840 + $0x7a0] sm:$0xff]
        %v1187 = vld [vmem:[%s840 + $0x7a8] sm:$0xff]
        %v1188 = vld [vmem:[%s840 + $0x7b0] sm:$0xff]
        %v1189 = vld [vmem:[%s840 + $0x7b8] sm:$0xff]
        %v1190 = vld [vmem:[%s840 + $0x7c0] sm:$0xff]
        %v1191 = vld [vmem:[%s840 + $0x7c8] sm:$0xff]
        %v1192 = vld [vmem:[%s840 + $0x7d0] sm:$0xff]
        %v1193 = vld [vmem:[%s840 + $0x7d8] sm:$0xff]
        %v1194 = vld [vmem:[%s840 + $0x7e0] sm:$0xff]
        %v1195 = vld [vmem:[%s840 + $0x7e8] sm:$0xff]
        %v1196 = vld [vmem:[%s840 + $0x7f0] sm:$0xff]
        %v1197 = vld [vmem:[%s840 + $0x7f8] sm:$0xff]
        %v1198 = vld [vmem:[%s840 + $0x800] sm:$0xff]
        %v1199 = vld [vmem:[%s840 + $0x808] sm:$0xff]
        %v1200 = vld [vmem:[%s840 + $0x810] sm:$0xff]
        %v1201 = vld [vmem:[%s840 + $0x818] sm:$0xff]
        %v1202 = vld [vmem:[%s840 + $0x820] sm:$0xff]
        %v1203 = vld [vmem:[%s840 + $0x828] sm:$0xff]
        %v1204 = vld [vmem:[%s840 + $0x830] sm:$0xff]
        %v1205 = vld [vmem:[%s840 + $0x838] sm:$0xff]
        %v1206 = vld [vmem:[%s840 + $0x840] sm:$0xff]
        %v1207 = vld [vmem:[%s840 + $0x848] sm:$0xff]
        %v1208 = vld [vmem:[%s840 + $0x850] sm:$0xff]
        %v1209 = vld [vmem:[%s840 + $0x858] sm:$0xff]
        %v1210 = vld [vmem:[%s840 + $0x860] sm:$0xff]
        %v1211 = vld [vmem:[%s840 + $0x868] sm:$0xff]
        %v1212 = vld [vmem:[%s840 + $0x870] sm:$0xff]
        %v1213 = vld [vmem:[%s840 + $0x878] sm:$0xff]
        %v1214 = vld [vmem:[%s840 + $0x880] sm:$0xff]
        %v1215 = vld [vmem:[%s840 + $0x888] sm:$0xff]
        %v1216 = vld [vmem:[%s840 + $0x890] sm:$0xff]
        %v1217 = vld [vmem:[%s840 + $0x898] sm:$0xff]
        %v1218 = vld [vmem:[%s840 + $0x8a0] sm:$0xff]
        %v1219 = vld [vmem:[%s840 + $0x8a8] sm:$0xff]
        %v1220 = vld [vmem:[%s840 + $0x8b0] sm:$0xff]
        %v1221 = vld [vmem:[%s840 + $0x8b8] sm:$0x1f]
        %v1222 = vld [vmem:[%s840 + $0x8c0] sm:$0x1f]
        %v1223 = vld [vmem:[%s840 + $0x8c8] sm:$0x1f]
        %v1224 = vld [vmem:[%s840 + $0x8d0] sm:$0x1f]
        %v1225 = vld [vmem:[%s840 + $0x8d8] sm:$0x1f]
        %v1226 = vld [vmem:[%s840 + $0x8e0] sm:$0x1f]
        %v1227 = vld [vmem:[%s840 + $0x8e8] sm:$0x1f]
        %v1228 = vld [vmem:[%s840 + $0x8f0] sm:$0x1f]
        %v1229 = vld [vmem:[%s840 + $0x8f8] sm:$0x1f]
        %vm1230 = vcmask 1022976
        %v1232 = vsel %vm1230, %v911, 0
        %v1235 = vsel %vm1230, %v913, 0
        %v1238 = vsel %vm1230, %v915, 0
        %v1241 = vsel %vm1230, %v917, 0
        %v1244 = vsel %vm1230, %v919, 0
        %v1247 = vsel %vm1230, %v921, 0
        %v1250 = vsel %vm1230, %v923, 0
        %v1253 = vsel %vm1230, %v925, 0
        %v1256 = vsel %vm1230, %v927, 0
        %v1259 = vsel %vm1230, %v929, 0
        %v1262 = vsel %vm1230, %v931, 0
        %v1265 = vsel %vm1230, %v933, 0
        %v1268 = vsel %vm1230, %v935, 0
        %v1271 = vsel %vm1230, %v937, 0
        %v1274 = vsel %vm1230, %v939, 0
        %v1277 = vsel %vm1230, %v941, 0
        %vm1279 = vcmask 1044480
        %v1281 = vsel %vm1279, %v1221, 0
        %v1284 = vsel %vm1279, %v1222, 0
        %v1287 = vsel %vm1279, %v1223, 0
        %v1290 = vsel %vm1279, %v1224, 0
        %v1293 = vsel %vm1279, %v1225, 0
        %v1296 = vsel %vm1279, %v1226, 0
        %v1299 = vsel %vm1279, %v1227, 0
        %v1302 = vsel %vm1279, %v1228, 0
        %v1305 = vsel %vm1279, %v1229, 0
        %1307 = vmatprep.subr.mxu0 %v1078
        %1308 = vmatpush1.msra.mxu0 %v1077
        %1309 = vmatprep.subr.mxu0 %v1069
        %1310 = vmatpush1.msra.mxu0 %v1068
        %1311 = vmatprep.subr.mxu0 %v1060
        %1312 = vmatpush1.msra.mxu0 %v1059
        %1313 = vmatprep.subr.mxu0 %v1051
        %1314 = vmatpush1.msra.mxu0 %v1050
        %1315 = vmatprep.subr.mxu0 %v1042
        %1316 = vmatpush1.msra.mxu0 %v1041
        %1317 = vmatprep.subr.mxu0 %v1033
        %1318 = vmatpush1.msra.mxu0 %v1032
        %1319 = vmatprep.subr.mxu0 %v1024
        %1320 = vmatpush1.msra.mxu0 %v1023
        %1321 = vmatprep.subr.mxu0 %v1015
        %1322 = vmatpush1.msra.mxu0 %v1014
        %1323 = vmatprep.subr.mxu0 %v1006
        %1324 = vmatpush1.msra.mxu0 %v1005
        %1325 = vmatprep.subr.mxu0 %v997
        %1326 = vmatpush1.msra.mxu0 %v996
        %1327 = vmatprep.subr.mxu0 %v988
        %1328 = vmatpush1.msra.mxu0 %v987
        %1329 = vmatprep.subr.mxu0 %v979
        %1330 = vmatpush1.msra.mxu0 %v978
        %1331 = vmatprep.subr.mxu0 %v970
        %1332 = vmatpush1.msra.mxu0 %v969
        %1333 = vmatprep.subr.mxu0 %v961
        %1334 = vmatpush1.msra.mxu0 %v960
        %1335 = vmatprep.subr.mxu0 %v952
        %1336 = vmatpush1.msra.mxu0 %v951
        %1337 = vmatprep.subr.mxu0 %v943
        %1338 = vmatpush1.msra.mxu0 %v942
        %1339 = vmatprep.subr.mxu0 %v1284
        %1340 = vmatpush2.msra.mxu0 %v1281
        %1341 = vmatprep.subr.mxu0 %v1213
        %1342 = vmatpush2.msra.mxu0 %v1212
        %1343 = vmatprep.subr.mxu0 %v1204
        %1344 = vmatpush2.msra.mxu0 %v1203
        %1345 = vmatprep.subr.mxu0 %v1195
        %1346 = vmatpush2.msra.mxu0 %v1194
        %1347 = vmatprep.subr.mxu0 %v1186
        %1348 = vmatpush2.msra.mxu0 %v1185
        %1349 = vmatprep.subr.mxu0 %v1177
        %1350 = vmatpush2.msra.mxu0 %v1176
        %1351 = vmatprep.subr.mxu0 %v1168
        %1352 = vmatpush2.msra.mxu0 %v1167
        %1353 = vmatprep.subr.mxu0 %v1159
        %1354 = vmatpush2.msra.mxu0 %v1158
        %1355 = vmatprep.subr.mxu0 %v1150
        %1356 = vmatpush2.msra.mxu0 %v1149
        %1357 = vmatprep.subr.mxu0 %v1141
        %1358 = vmatpush2.msra.mxu0 %v1140
        %1359 = vmatprep.subr.mxu0 %v1132
        %1360 = vmatpush2.msra.mxu0 %v1131
        %1361 = vmatprep.subr.mxu0 %v1123
        %1362 = vmatpush2.msra.mxu0 %v1122
        %1363 = vmatprep.subr.mxu0 %v1114
        %1364 = vmatpush2.msra.mxu0 %v1113
        %1365 = vmatprep.subr.mxu0 %v1105
        %1366 = vmatpush2.msra.mxu0 %v1104
        %1367 = vmatprep.subr.mxu0 %v1096
        %1368 = vmatpush2.msra.mxu0 %v1095
        %1369 = vmatprep.subr.mxu0 %v1087
        %1370 = vmatpush2.msra.mxu0 %v1086
        %1371 = vmatprep.mubr.f32.mxu0 %v1232
        %1372 = vmatmul.mubr.f32.gmra.mxu0 %v910
        %v1373 = vpop.f32.mrf.mxu0
        %v1374 = vadd.f32 0.0, %v1373
        %v1375 = vpop.f32.mrf.mxu0
        %v1376 = vadd.f32 0.0, %v1375
        %1377 = vmatprep.mubr.f32.mxu0 %v1235
        %1378 = vmatmul.mubr.f32.gmra.mxu0 %v912
        %v1379 = vpop.f32.mrf.mxu0
        %v1380 = vadd.f32 0.0, %v1379
        %v1381 = vpop.f32.mrf.mxu0
        %v1382 = vadd.f32 0.0, %v1381
        %1383 = vmatprep.mubr.f32.mxu0 %v1238
        %1384 = vmatmul.mubr.f32.gmra.mxu0 %v914
        %v1385 = vpop.f32.mrf.mxu0
        %v1386 = vadd.f32 0.0, %v1385
        %v1387 = vpop.f32.mrf.mxu0
        %v1388 = vadd.f32 0.0, %v1387
        %1389 = vmatprep.mubr.f32.mxu0 %v1241
        %1390 = vmatmul.mubr.f32.gmra.mxu0 %v916
        %v1391 = vpop.f32.mrf.mxu0
        %v1392 = vadd.f32 0.0, %v1391
        %v1393 = vpop.f32.mrf.mxu0
        %v1394 = vadd.f32 0.0, %v1393
        %1395 = vmatprep.mubr.f32.mxu0 %v1244
        %1396 = vmatmul.mubr.f32.gmra.mxu0 %v918
        %v1397 = vpop.f32.mrf.mxu0
        %v1398 = vadd.f32 0.0, %v1397
        %v1399 = vpop.f32.mrf.mxu0
        %v1400 = vadd.f32 0.0, %v1399
        %1401 = vmatprep.mubr.f32.mxu0 %v1247
        %1402 = vmatmul.mubr.f32.gmra.mxu0 %v920
        %v1403 = vpop.f32.mrf.mxu0
        %v1404 = vadd.f32 0.0, %v1403
        %v1405 = vpop.f32.mrf.mxu0
        %v1406 = vadd.f32 0.0, %v1405
        %1407 = vmatprep.mubr.f32.mxu0 %v1250
        %1408 = vmatmul.mubr.f32.gmra.mxu0 %v922
        %v1409 = vpop.f32.mrf.mxu0
        %v1410 = vadd.f32 0.0, %v1409
        %v1411 = vpop.f32.mrf.mxu0
        %v1412 = vadd.f32 0.0, %v1411
        %1413 = vmatprep.mubr.f32.mxu0 %v1253
        %1414 = vmatmul.mubr.f32.gmra.mxu0 %v924
        %v1415 = vpop.f32.mrf.mxu0
        %v1416 = vadd.f32 0.0, %v1415
        %v1417 = vpop.f32.mrf.mxu0
        %v1418 = vadd.f32 0.0, %v1417
        %1419 = vmatprep.mubr.f32.mxu0 %v1256
        %1420 = vmatmul.mubr.f32.gmra.mxu0 %v926
        %v1421 = vpop.f32.mrf.mxu0
        %v1422 = vadd.f32 0.0, %v1421
        %v1423 = vpop.f32.mrf.mxu0
        %v1424 = vadd.f32 0.0, %v1423
        %1425 = vmatprep.mubr.f32.mxu0 %v1259
        %1426 = vmatmul.mubr.f32.gmra.mxu0 %v928
        %v1427 = vpop.f32.mrf.mxu0
        %v1428 = vadd.f32 0.0, %v1427
        %v1429 = vpop.f32.mrf.mxu0
        %v1430 = vadd.f32 0.0, %v1429
        %1431 = vmatprep.mubr.f32.mxu0 %v1262
        %1432 = vmatmul.mubr.f32.gmra.mxu0 %v930
        %v1433 = vpop.f32.mrf.mxu0
        %v1434 = vadd.f32 0.0, %v1433
        %v1435 = vpop.f32.mrf.mxu0
        %v1436 = vadd.f32 0.0, %v1435
        %1437 = vmatprep.mubr.f32.mxu0 %v1265
        %1438 = vmatmul.mubr.f32.gmra.mxu0 %v932
        %v1439 = vpop.f32.mrf.mxu0
        %v1440 = vadd.f32 0.0, %v1439
        %v1441 = vpop.f32.mrf.mxu0
        %v1442 = vadd.f32 0.0, %v1441
        %1443 = vmatprep.mubr.f32.mxu0 %v1268
        %1444 = vmatmul.mubr.f32.gmra.mxu0 %v934
        %v1445 = vpop.f32.mrf.mxu0
        %v1446 = vadd.f32 0.0, %v1445
        %v1447 = vpop.f32.mrf.mxu0
        %v1448 = vadd.f32 0.0, %v1447
        %1449 = vmatprep.mubr.f32.mxu0 %v1271
        %1450 = vmatmul.mubr.f32.gmra.mxu0 %v936
        %v1451 = vpop.f32.mrf.mxu0
        %v1452 = vadd.f32 0.0, %v1451
        %v1453 = vpop.f32.mrf.mxu0
        %v1454 = vadd.f32 0.0, %v1453
        %1455 = vmatprep.mubr.f32.mxu0 %v1274
        %1456 = vmatmul.mubr.f32.gmra.mxu0 %v938
        %v1457 = vpop.f32.mrf.mxu0
        %v1458 = vadd.f32 0.0, %v1457
        %v1459 = vpop.f32.mrf.mxu0
        %v1460 = vadd.f32 0.0, %v1459
        %1461 = vmatprep.mubr.f32.mxu0 %v1277
        %1462 = vmatmul.mubr.f32.gmra.mxu0 %v940
        %v1463 = vpop.f32.mrf.mxu0
        %v1464 = vadd.f32 0.0, %v1463
        %v1465 = vpop.f32.mrf.mxu0
        %v1466 = vadd.f32 0.0, %v1465
        %1467 = vdwg.mxu0
        %1468 = vmatprep.subr.mxu0 %v1080
        %1469 = vmatpush1.msra.mxu0 %v1079
        %1470 = vmatprep.subr.mxu0 %v1071
        %1471 = vmatpush1.msra.mxu0 %v1070
        %1472 = vmatprep.subr.mxu0 %v1062
        %1473 = vmatpush1.msra.mxu0 %v1061
        %1474 = vmatprep.subr.mxu0 %v1053
        %1475 = vmatpush1.msra.mxu0 %v1052
        %1476 = vmatprep.subr.mxu0 %v1044
        %1477 = vmatpush1.msra.mxu0 %v1043
        %1478 = vmatprep.subr.mxu0 %v1035
        %1479 = vmatpush1.msra.mxu0 %v1034
        %1480 = vmatprep.subr.mxu0 %v1026
        %1481 = vmatpush1.msra.mxu0 %v1025
        %1482 = vmatprep.subr.mxu0 %v1017
        %1483 = vmatpush1.msra.mxu0 %v1016
        %1484 = vmatprep.subr.mxu0 %v1008
        %1485 = vmatpush1.msra.mxu0 %v1007
        %1486 = vmatprep.subr.mxu0 %v999
        %1487 = vmatpush1.msra.mxu0 %v998
        %1488 = vmatprep.subr.mxu0 %v990
        %1489 = vmatpush1.msra.mxu0 %v989
        %1490 = vmatprep.subr.mxu0 %v981
        %1491 = vmatpush1.msra.mxu0 %v980
        %1492 = vmatprep.subr.mxu0 %v972
        %1493 = vmatpush1.msra.mxu0 %v971
        %1494 = vmatprep.subr.mxu0 %v963
        %1495 = vmatpush1.msra.mxu0 %v962
        %1496 = vmatprep.subr.mxu0 %v954
        %1497 = vmatpush1.msra.mxu0 %v953
        %1498 = vmatprep.subr.mxu0 %v945
        %1499 = vmatpush1.msra.mxu0 %v944
        %1500 = vmatprep.subr.mxu0 %v1290
        %1501 = vmatpush2.msra.mxu0 %v1287
        %1502 = vmatprep.subr.mxu0 %v1215
        %1503 = vmatpush2.msra.mxu0 %v1214
        %1504 = vmatprep.subr.mxu0 %v1206
        %1505 = vmatpush2.msra.mxu0 %v1205
        %1506 = vmatprep.subr.mxu0 %v1197
        %1507 = vmatpush2.msra.mxu0 %v1196
        %1508 = vmatprep.subr.mxu0 %v1188
        %1509 = vmatpush2.msra.mxu0 %v1187
        %1510 = vmatprep.subr.mxu0 %v1179
        %1511 = vmatpush2.msra.mxu0 %v1178
        %1512 = vmatprep.subr.mxu0 %v1170
        %1513 = vmatpush2.msra.mxu0 %v1169
        %1514 = vmatprep.subr.mxu0 %v1161
        %1515 = vmatpush2.msra.mxu0 %v1160
        %1516 = vmatprep.subr.mxu0 %v1152
        %1517 = vmatpush2.msra.mxu0 %v1151
        %1518 = vmatprep.subr.mxu0 %v1143
        %1519 = vmatpush2.msra.mxu0 %v1142
        %1520 = vmatprep.subr.mxu0 %v1134
        %1521 = vmatpush2.msra.mxu0 %v1133
        %1522 = vmatprep.subr.mxu0 %v1125
        %1523 = vmatpush2.msra.mxu0 %v1124
        %1524 = vmatprep.subr.mxu0 %v1116
        %1525 = vmatpush2.msra.mxu0 %v1115
        %1526 = vmatprep.subr.mxu0 %v1107
        %1527 = vmatpush2.msra.mxu0 %v1106
        %1528 = vmatprep.subr.mxu0 %v1098
        %1529 = vmatpush2.msra.mxu0 %v1097
        %1530 = vmatprep.subr.mxu0 %v1089
        %1531 = vmatpush2.msra.mxu0 %v1088
        %1532 = vmatprep.mubr.f32.mxu0 %v1232
        %1533 = vmatmul.mubr.f32.gmra.mxu0 %v910
        %v1534 = vpop.f32.mrf.mxu0
        %v1535 = vadd.f32 0.0, %v1534
        %v1536 = vpop.f32.mrf.mxu0
        %v1537 = vadd.f32 0.0, %v1536
        %1538 = vmatprep.mubr.f32.mxu0 %v1235
        %1539 = vmatmul.mubr.f32.gmra.mxu0 %v912
        %v1540 = vpop.f32.mrf.mxu0
        %v1541 = vadd.f32 0.0, %v1540
        %v1542 = vpop.f32.mrf.mxu0
        %v1543 = vadd.f32 0.0, %v1542
        %1544 = vmatprep.mubr.f32.mxu0 %v1238
        %1545 = vmatmul.mubr.f32.gmra.mxu0 %v914
        %v1546 = vpop.f32.mrf.mxu0
        %v1547 = vadd.f32 0.0, %v1546
        %v1548 = vpop.f32.mrf.mxu0
        %v1549 = vadd.f32 0.0, %v1548
        %1550 = vmatprep.mubr.f32.mxu0 %v1241
        %1551 = vmatmul.mubr.f32.gmra.mxu0 %v916
        %v1552 = vpop.f32.mrf.mxu0
        %v1553 = vadd.f32 0.0, %v1552
        %v1554 = vpop.f32.mrf.mxu0
        %v1555 = vadd.f32 0.0, %v1554
        %1556 = vmatprep.mubr.f32.mxu0 %v1244
        %1557 = vmatmul.mubr.f32.gmra.mxu0 %v918
        %v1558 = vpop.f32.mrf.mxu0
        %v1559 = vadd.f32 0.0, %v1558
        %v1560 = vpop.f32.mrf.mxu0
        %v1561 = vadd.f32 0.0, %v1560
        %1562 = vmatprep.mubr.f32.mxu0 %v1247
        %1563 = vmatmul.mubr.f32.gmra.mxu0 %v920
        %v1564 = vpop.f32.mrf.mxu0
        %v1565 = vadd.f32 0.0, %v1564
        %v1566 = vpop.f32.mrf.mxu0
        %v1567 = vadd.f32 0.0, %v1566
        %1568 = vmatprep.mubr.f32.mxu0 %v1250
        %1569 = vmatmul.mubr.f32.gmra.mxu0 %v922
        %v1570 = vpop.f32.mrf.mxu0
        %v1571 = vadd.f32 0.0, %v1570
        %v1572 = vpop.f32.mrf.mxu0
        %v1573 = vadd.f32 0.0, %v1572
        %1574 = vmatprep.mubr.f32.mxu0 %v1253
        %1575 = vmatmul.mubr.f32.gmra.mxu0 %v924
        %v1576 = vpop.f32.mrf.mxu0
        %v1577 = vadd.f32 0.0, %v1576
        %v1578 = vpop.f32.mrf.mxu0
        %v1579 = vadd.f32 0.0, %v1578
        %1580 = vmatprep.mubr.f32.mxu0 %v1256
        %1581 = vmatmul.mubr.f32.gmra.mxu0 %v926
        %v1582 = vpop.f32.mrf.mxu0
        %v1583 = vadd.f32 0.0, %v1582
        %v1584 = vpop.f32.mrf.mxu0
        %v1585 = vadd.f32 0.0, %v1584
        %1586 = vmatprep.mubr.f32.mxu0 %v1259
        %1587 = vmatmul.mubr.f32.gmra.mxu0 %v928
        %v1588 = vpop.f32.mrf.mxu0
        %v1589 = vadd.f32 0.0, %v1588
        %v1590 = vpop.f32.mrf.mxu0
        %v1591 = vadd.f32 0.0, %v1590
        %1592 = vmatprep.mubr.f32.mxu0 %v1262
        %1593 = vmatmul.mubr.f32.gmra.mxu0 %v930
        %v1594 = vpop.f32.mrf.mxu0
        %v1595 = vadd.f32 0.0, %v1594
        %v1596 = vpop.f32.mrf.mxu0
        %v1597 = vadd.f32 0.0, %v1596
        %1598 = vmatprep.mubr.f32.mxu0 %v1265
        %1599 = vmatmul.mubr.f32.gmra.mxu0 %v932
        %v1600 = vpop.f32.mrf.mxu0
        %v1601 = vadd.f32 0.0, %v1600
        %v1602 = vpop.f32.mrf.mxu0
        %v1603 = vadd.f32 0.0, %v1602
        %1604 = vmatprep.mubr.f32.mxu0 %v1268
        %1605 = vmatmul.mubr.f32.gmra.mxu0 %v934
        %v1606 = vpop.f32.mrf.mxu0
        %v1607 = vadd.f32 0.0, %v1606
        %v1608 = vpop.f32.mrf.mxu0
        %v1609 = vadd.f32 0.0, %v1608
        %1610 = vmatprep.mubr.f32.mxu0 %v1271
        %1611 = vmatmul.mubr.f32.gmra.mxu0 %v936
        %v1612 = vpop.f32.mrf.mxu0
        %v1613 = vadd.f32 0.0, %v1612
        %v1614 = vpop.f32.mrf.mxu0
        %v1615 = vadd.f32 0.0, %v1614
        %1616 = vmatprep.mubr.f32.mxu0 %v1274
        %1617 = vmatmul.mubr.f32.gmra.mxu0 %v938
        %v1618 = vpop.f32.mrf.mxu0
        %v1619 = vadd.f32 0.0, %v1618
        %v1620 = vpop.f32.mrf.mxu0
        %v1621 = vadd.f32 0.0, %v1620
        %1622 = vmatprep.mubr.f32.mxu0 %v1277
        %1623 = vmatmul.mubr.f32.gmra.mxu0 %v940
        %v1624 = vpop.f32.mrf.mxu0
        %v1625 = vadd.f32 0.0, %v1624
        %v1626 = vpop.f32.mrf.mxu0
        %v1627 = vadd.f32 0.0, %v1626
        %1628 = vdwg.mxu0
        %1629 = vmatprep.subr.mxu0 %v1082
        %1630 = vmatpush1.msra.mxu0 %v1081
        %1631 = vmatprep.subr.mxu0 %v1073
        %1632 = vmatpush1.msra.mxu0 %v1072
        %1633 = vmatprep.subr.mxu0 %v1064
        %1634 = vmatpush1.msra.mxu0 %v1063
        %1635 = vmatprep.subr.mxu0 %v1055
        %1636 = vmatpush1.msra.mxu0 %v1054
        %1637 = vmatprep.subr.mxu0 %v1046
        %1638 = vmatpush1.msra.mxu0 %v1045
        %1639 = vmatprep.subr.mxu0 %v1037
        %1640 = vmatpush1.msra.mxu0 %v1036
        %1641 = vmatprep.subr.mxu0 %v1028
        %1642 = vmatpush1.msra.mxu0 %v1027
        %1643 = vmatprep.subr.mxu0 %v1019
        %1644 = vmatpush1.msra.mxu0 %v1018
        %1645 = vmatprep.subr.mxu0 %v1010
        %1646 = vmatpush1.msra.mxu0 %v1009
        %1647 = vmatprep.subr.mxu0 %v1001
        %1648 = vmatpush1.msra.mxu0 %v1000
        %1649 = vmatprep.subr.mxu0 %v992
        %1650 = vmatpush1.msra.mxu0 %v991
        %1651 = vmatprep.subr.mxu0 %v983
        %1652 = vmatpush1.msra.mxu0 %v982
        %1653 = vmatprep.subr.mxu0 %v974
        %1654 = vmatpush1.msra.mxu0 %v973
        %1655 = vmatprep.subr.mxu0 %v965
        %1656 = vmatpush1.msra.mxu0 %v964
        %1657 = vmatprep.subr.mxu0 %v956
        %1658 = vmatpush1.msra.mxu0 %v955
        %1659 = vmatprep.subr.mxu0 %v947
        %1660 = vmatpush1.msra.mxu0 %v946
        %1661 = vmatprep.subr.mxu0 %v1296
        %1662 = vmatpush2.msra.mxu0 %v1293
        %1663 = vmatprep.subr.mxu0 %v1217
        %1664 = vmatpush2.msra.mxu0 %v1216
        %1665 = vmatprep.subr.mxu0 %v1208
        %1666 = vmatpush2.msra.mxu0 %v1207
        %1667 = vmatprep.subr.mxu0 %v1199
        %1668 = vmatpush2.msra.mxu0 %v1198
        %1669 = vmatprep.subr.mxu0 %v1190
        %1670 = vmatpush2.msra.mxu0 %v1189
        %1671 = vmatprep.subr.mxu0 %v1181
        %1672 = vmatpush2.msra.mxu0 %v1180
        %1673 = vmatprep.subr.mxu0 %v1172
        %1674 = vmatpush2.msra.mxu0 %v1171
        %1675 = vmatprep.subr.mxu0 %v1163
        %1676 = vmatpush2.msra.mxu0 %v1162
        %1677 = vmatprep.subr.mxu0 %v1154
        %1678 = vmatpush2.msra.mxu0 %v1153
        %1679 = vmatprep.subr.mxu0 %v1145
        %1680 = vmatpush2.msra.mxu0 %v1144
        %1681 = vmatprep.subr.mxu0 %v1136
        %1682 = vmatpush2.msra.mxu0 %v1135
        %1683 = vmatprep.subr.mxu0 %v1127
        %1684 = vmatpush2.msra.mxu0 %v1126
        %1685 = vmatprep.subr.mxu0 %v1118
        %1686 = vmatpush2.msra.mxu0 %v1117
        %1687 = vmatprep.subr.mxu0 %v1109
        %1688 = vmatpush2.msra.mxu0 %v1108
        %1689 = vmatprep.subr.mxu0 %v1100
        %1690 = vmatpush2.msra.mxu0 %v1099
        %1691 = vmatprep.subr.mxu0 %v1091
        %1692 = vmatpush2.msra.mxu0 %v1090
        %1693 = vmatprep.mubr.f32.mxu0 %v1232
        %1694 = vmatmul.mubr.f32.gmra.mxu0 %v910
        %v1695 = vpop.f32.mrf.mxu0
        %v1696 = vadd.f32 0.0, %v1695
        %v1697 = vpop.f32.mrf.mxu0
        %v1698 = vadd.f32 0.0, %v1697
        %1699 = vmatprep.mubr.f32.mxu0 %v1235
        %1700 = vmatmul.mubr.f32.gmra.mxu0 %v912
        %v1701 = vpop.f32.mrf.mxu0
        %v1702 = vadd.f32 0.0, %v1701
        %v1703 = vpop.f32.mrf.mxu0
        %v1704 = vadd.f32 0.0, %v1703
        %1705 = vmatprep.mubr.f32.mxu0 %v1238
        %1706 = vmatmul.mubr.f32.gmra.mxu0 %v914
        %v1707 = vpop.f32.mrf.mxu0
        %v1708 = vadd.f32 0.0, %v1707
        %v1709 = vpop.f32.mrf.mxu0
        %v1710 = vadd.f32 0.0, %v1709
        %1711 = vmatprep.mubr.f32.mxu0 %v1241
        %1712 = vmatmul.mubr.f32.gmra.mxu0 %v916
        %v1713 = vpop.f32.mrf.mxu0
        %v1714 = vadd.f32 0.0, %v1713
        %v1715 = vpop.f32.mrf.mxu0
        %v1716 = vadd.f32 0.0, %v1715
        %1717 = vmatprep.mubr.f32.mxu0 %v1244
        %1718 = vmatmul.mubr.f32.gmra.mxu0 %v918
        %v1719 = vpop.f32.mrf.mxu0
        %v1720 = vadd.f32 0.0, %v1719
        %v1721 = vpop.f32.mrf.mxu0
        %v1722 = vadd.f32 0.0, %v1721
        %1723 = vmatprep.mubr.f32.mxu0 %v1247
        %1724 = vmatmul.mubr.f32.gmra.mxu0 %v920
        %v1725 = vpop.f32.mrf.mxu0
        %v1726 = vadd.f32 0.0, %v1725
        %v1727 = vpop.f32.mrf.mxu0
        %v1728 = vadd.f32 0.0, %v1727
        %1729 = vmatprep.mubr.f32.mxu0 %v1250
        %1730 = vmatmul.mubr.f32.gmra.mxu0 %v922
        %v1731 = vpop.f32.mrf.mxu0
        %v1732 = vadd.f32 0.0, %v1731
        %v1733 = vpop.f32.mrf.mxu0
        %v1734 = vadd.f32 0.0, %v1733
        %1735 = vmatprep.mubr.f32.mxu0 %v1253
        %1736 = vmatmul.mubr.f32.gmra.mxu0 %v924
        %v1737 = vpop.f32.mrf.mxu0
        %v1738 = vadd.f32 0.0, %v1737
        %v1739 = vpop.f32.mrf.mxu0
        %v1740 = vadd.f32 0.0, %v1739
        %1741 = vmatprep.mubr.f32.mxu0 %v1256
        %1742 = vmatmul.mubr.f32.gmra.mxu0 %v926
        %v1743 = vpop.f32.mrf.mxu0
        %v1744 = vadd.f32 0.0, %v1743
        %v1745 = vpop.f32.mrf.mxu0
        %v1746 = vadd.f32 0.0, %v1745
        %1747 = vmatprep.mubr.f32.mxu0 %v1259
        %1748 = vmatmul.mubr.f32.gmra.mxu0 %v928
        %v1749 = vpop.f32.mrf.mxu0
        %v1750 = vadd.f32 0.0, %v1749
        %v1751 = vpop.f32.mrf.mxu0
        %v1752 = vadd.f32 0.0, %v1751
        %1753 = vmatprep.mubr.f32.mxu0 %v1262
        %1754 = vmatmul.mubr.f32.gmra.mxu0 %v930
        %v1755 = vpop.f32.mrf.mxu0
        %v1756 = vadd.f32 0.0, %v1755
        %v1757 = vpop.f32.mrf.mxu0
        %v1758 = vadd.f32 0.0, %v1757
        %1759 = vmatprep.mubr.f32.mxu0 %v1265
        %1760 = vmatmul.mubr.f32.gmra.mxu0 %v932
        %v1761 = vpop.f32.mrf.mxu0
        %v1762 = vadd.f32 0.0, %v1761
        %v1763 = vpop.f32.mrf.mxu0
        %v1764 = vadd.f32 0.0, %v1763
        %1765 = vmatprep.mubr.f32.mxu0 %v1268
        %1766 = vmatmul.mubr.f32.gmra.mxu0 %v934
        %v1767 = vpop.f32.mrf.mxu0
        %v1768 = vadd.f32 0.0, %v1767
        %v1769 = vpop.f32.mrf.mxu0
        %v1770 = vadd.f32 0.0, %v1769
        %1771 = vmatprep.mubr.f32.mxu0 %v1271
        %1772 = vmatmul.mubr.f32.gmra.mxu0 %v936
        %v1773 = vpop.f32.mrf.mxu0
        %v1774 = vadd.f32 0.0, %v1773
        %v1775 = vpop.f32.mrf.mxu0
        %v1776 = vadd.f32 0.0, %v1775
        %1777 = vmatprep.mubr.f32.mxu0 %v1274
        %1778 = vmatmul.mubr.f32.gmra.mxu0 %v938
        %v1779 = vpop.f32.mrf.mxu0
        %v1780 = vadd.f32 0.0, %v1779
        %v1781 = vpop.f32.mrf.mxu0
        %v1782 = vadd.f32 0.0, %v1781
        %1783 = vmatprep.mubr.f32.mxu0 %v1277
        %1784 = vmatmul.mubr.f32.gmra.mxu0 %v940
        %v1785 = vpop.f32.mrf.mxu0
        %v1786 = vadd.f32 0.0, %v1785
        %v1787 = vpop.f32.mrf.mxu0
        %v1788 = vadd.f32 0.0, %v1787
        %1789 = vdwg.mxu0
        %1790 = vmatprep.subr.mxu0 %v1084
        %1791 = vmatpush1.msra.mxu0 %v1083
        %1792 = vmatprep.subr.mxu0 %v1075
        %1793 = vmatpush1.msra.mxu0 %v1074
        %1794 = vmatprep.subr.mxu0 %v1066
        %1795 = vmatpush1.msra.mxu0 %v1065
        %1796 = vmatprep.subr.mxu0 %v1057
        %1797 = vmatpush1.msra.mxu0 %v1056
        %1798 = vmatprep.subr.mxu0 %v1048
        %1799 = vmatpush1.msra.mxu0 %v1047
        %1800 = vmatprep.subr.mxu0 %v1039
        %1801 = vmatpush1.msra.mxu0 %v1038
        %1802 = vmatprep.subr.mxu0 %v1030
        %1803 = vmatpush1.msra.mxu0 %v1029
        %1804 = vmatprep.subr.mxu0 %v1021
        %1805 = vmatpush1.msra.mxu0 %v1020
        %1806 = vmatprep.subr.mxu0 %v1012
        %1807 = vmatpush1.msra.mxu0 %v1011
        %1808 = vmatprep.subr.mxu0 %v1003
        %1809 = vmatpush1.msra.mxu0 %v1002
        %1810 = vmatprep.subr.mxu0 %v994
        %1811 = vmatpush1.msra.mxu0 %v993
        %1812 = vmatprep.subr.mxu0 %v985
        %1813 = vmatpush1.msra.mxu0 %v984
        %1814 = vmatprep.subr.mxu0 %v976
        %1815 = vmatpush1.msra.mxu0 %v975
        %1816 = vmatprep.subr.mxu0 %v967
        %1817 = vmatpush1.msra.mxu0 %v966
        %1818 = vmatprep.subr.mxu0 %v958
        %1819 = vmatpush1.msra.mxu0 %v957
        %1820 = vmatprep.subr.mxu0 %v949
        %1821 = vmatpush1.msra.mxu0 %v948
        %1822 = vmatprep.subr.mxu0 %v1302
        %1823 = vmatpush2.msra.mxu0 %v1299
        %1824 = vmatprep.subr.mxu0 %v1219
        %1825 = vmatpush2.msra.mxu0 %v1218
        %1826 = vmatprep.subr.mxu0 %v1210
        %1827 = vmatpush2.msra.mxu0 %v1209
        %1828 = vmatprep.subr.mxu0 %v1201
        %1829 = vmatpush2.msra.mxu0 %v1200
        %1830 = vmatprep.subr.mxu0 %v1192
        %1831 = vmatpush2.msra.mxu0 %v1191
        %1832 = vmatprep.subr.mxu0 %v1183
        %1833 = vmatpush2.msra.mxu0 %v1182
        %1834 = vmatprep.subr.mxu0 %v1174
        %1835 = vmatpush2.msra.mxu0 %v1173
        %1836 = vmatprep.subr.mxu0 %v1165
        %1837 = vmatpush2.msra.mxu0 %v1164
        %1838 = vmatprep.subr.mxu0 %v1156
        %1839 = vmatpush2.msra.mxu0 %v1155
        %1840 = vmatprep.subr.mxu0 %v1147
        %1841 = vmatpush2.msra.mxu0 %v1146
        %1842 = vmatprep.subr.mxu0 %v1138
        %1843 = vmatpush2.msra.mxu0 %v1137
        %1844 = vmatprep.subr.mxu0 %v1129
        %1845 = vmatpush2.msra.mxu0 %v1128
        %1846 = vmatprep.subr.mxu0 %v1120
        %1847 = vmatpush2.msra.mxu0 %v1119
        %1848 = vmatprep.subr.mxu0 %v1111
        %1849 = vmatpush2.msra.mxu0 %v1110
        %1850 = vmatprep.subr.mxu0 %v1102
        %1851 = vmatpush2.msra.mxu0 %v1101
        %1852 = vmatprep.subr.mxu0 %v1093
        %1853 = vmatpush2.msra.mxu0 %v1092
        %1854 = vmatprep.mubr.f32.mxu0 %v1232
        %1855 = vmatmul.mubr.f32.gmra.mxu0 %v910
        %v1856 = vpop.f32.mrf.mxu0
        %v1857 = vadd.f32 0.0, %v1856
        %v1858 = vpop.f32.mrf.mxu0
        %v1859 = vadd.f32 0.0, %v1858
        %1860 = vmatprep.mubr.f32.mxu0 %v1235
        %1861 = vmatmul.mubr.f32.gmra.mxu0 %v912
        %v1862 = vpop.f32.mrf.mxu0
        %v1863 = vadd.f32 0.0, %v1862
        %v1864 = vpop.f32.mrf.mxu0
        %v1865 = vadd.f32 0.0, %v1864
        %1866 = vmatprep.mubr.f32.mxu0 %v1238
        %1867 = vmatmul.mubr.f32.gmra.mxu0 %v914
        %v1868 = vpop.f32.mrf.mxu0
        %v1869 = vadd.f32 0.0, %v1868
        %v1870 = vpop.f32.mrf.mxu0
        %v1871 = vadd.f32 0.0, %v1870
        %1872 = vmatprep.mubr.f32.mxu0 %v1241
        %1873 = vmatmul.mubr.f32.gmra.mxu0 %v916
        %v1874 = vpop.f32.mrf.mxu0
        %v1875 = vadd.f32 0.0, %v1874
        %v1876 = vpop.f32.mrf.mxu0
        %v1877 = vadd.f32 0.0, %v1876
        %1878 = vmatprep.mubr.f32.mxu0 %v1244
        %1879 = vmatmul.mubr.f32.gmra.mxu0 %v918
        %v1880 = vpop.f32.mrf.mxu0
        %v1881 = vadd.f32 0.0, %v1880
        %v1882 = vpop.f32.mrf.mxu0
        %v1883 = vadd.f32 0.0, %v1882
        %1884 = vmatprep.mubr.f32.mxu0 %v1247
        %1885 = vmatmul.mubr.f32.gmra.mxu0 %v920
        %v1886 = vpop.f32.mrf.mxu0
        %v1887 = vadd.f32 0.0, %v1886
        %v1888 = vpop.f32.mrf.mxu0
        %v1889 = vadd.f32 0.0, %v1888
        %1890 = vmatprep.mubr.f32.mxu0 %v1250
        %1891 = vmatmul.mubr.f32.gmra.mxu0 %v922
        %v1892 = vpop.f32.mrf.mxu0
        %v1893 = vadd.f32 0.0, %v1892
        %v1894 = vpop.f32.mrf.mxu0
        %v1895 = vadd.f32 0.0, %v1894
        %1896 = vmatprep.mubr.f32.mxu0 %v1253
        %1897 = vmatmul.mubr.f32.gmra.mxu0 %v924
        %v1898 = vpop.f32.mrf.mxu0
        %v1899 = vadd.f32 0.0, %v1898
        %v1900 = vpop.f32.mrf.mxu0
        %v1901 = vadd.f32 0.0, %v1900
        %1902 = vmatprep.mubr.f32.mxu0 %v1256
        %1903 = vmatmul.mubr.f32.gmra.mxu0 %v926
        %v1904 = vpop.f32.mrf.mxu0
        %v1905 = vadd.f32 0.0, %v1904
        %v1906 = vpop.f32.mrf.mxu0
        %v1907 = vadd.f32 0.0, %v1906
        %1908 = vmatprep.mubr.f32.mxu0 %v1259
        %1909 = vmatmul.mubr.f32.gmra.mxu0 %v928
        %v1910 = vpop.f32.mrf.mxu0
        %v1911 = vadd.f32 0.0, %v1910
        %v1912 = vpop.f32.mrf.mxu0
        %v1913 = vadd.f32 0.0, %v1912
        %1914 = vmatprep.mubr.f32.mxu0 %v1262
        %1915 = vmatmul.mubr.f32.gmra.mxu0 %v930
        %v1916 = vpop.f32.mrf.mxu0
        %v1917 = vadd.f32 0.0, %v1916
        %v1918 = vpop.f32.mrf.mxu0
        %v1919 = vadd.f32 0.0, %v1918
        %1920 = vmatprep.mubr.f32.mxu0 %v1265
        %1921 = vmatmul.mubr.f32.gmra.mxu0 %v932
        %v1922 = vpop.f32.mrf.mxu0
        %v1923 = vadd.f32 0.0, %v1922
        %v1924 = vpop.f32.mrf.mxu0
        %v1925 = vadd.f32 0.0, %v1924
        %1926 = vmatprep.mubr.f32.mxu0 %v1268
        %1927 = vmatmul.mubr.f32.gmra.mxu0 %v934
        %v1928 = vpop.f32.mrf.mxu0
        %v1929 = vadd.f32 0.0, %v1928
        %v1930 = vpop.f32.mrf.mxu0
        %v1931 = vadd.f32 0.0, %v1930
        %1932 = vmatprep.mubr.f32.mxu0 %v1271
        %1933 = vmatmul.mubr.f32.gmra.mxu0 %v936
        %v1934 = vpop.f32.mrf.mxu0
        %v1935 = vadd.f32 0.0, %v1934
        %v1936 = vpop.f32.mrf.mxu0
        %v1937 = vadd.f32 0.0, %v1936
        %1938 = vmatprep.mubr.f32.mxu0 %v1274
        %1939 = vmatmul.mubr.f32.gmra.mxu0 %v938
        %v1940 = vpop.f32.mrf.mxu0
        %v1941 = vadd.f32 0.0, %v1940
        %v1942 = vpop.f32.mrf.mxu0
        %v1943 = vadd.f32 0.0, %v1942
        %1944 = vmatprep.mubr.f32.mxu0 %v1277
        %1945 = vmatmul.mubr.f32.gmra.mxu0 %v940
        %v1946 = vpop.f32.mrf.mxu0
        %v1947 = vadd.f32 0.0, %v1946
        %v1948 = vpop.f32.mrf.mxu0
        %v1949 = vadd.f32 0.0, %v1948
        %1950 = vdwg.mxu0
        %1951 = vmatprep.subr.mxu0 0.0
        %1952 = vmatpush1.msra.mxu0 %v1085
        %1953 = vmatprep.subr.mxu0 0.0
        %1954 = vmatpush1.msra.mxu0 %v1076
        %1955 = vmatprep.subr.mxu0 0.0
        %1956 = vmatpush1.msra.mxu0 %v1067
        %1957 = vmatprep.subr.mxu0 0.0
        %1958 = vmatpush1.msra.mxu0 %v1058
        %1959 = vmatprep.subr.mxu0 0.0
        %1960 = vmatpush1.msra.mxu0 %v1049
        %1961 = vmatprep.subr.mxu0 0.0
        %1962 = vmatpush1.msra.mxu0 %v1040
        %1963 = vmatprep.subr.mxu0 0.0
        %1964 = vmatpush1.msra.mxu0 %v1031
        %1965 = vmatprep.subr.mxu0 0.0
        %1966 = vmatpush1.msra.mxu0 %v1022
        %1967 = vmatprep.subr.mxu0 0.0
        %1968 = vmatpush1.msra.mxu0 %v1013
        %1969 = vmatprep.subr.mxu0 0.0
        %1970 = vmatpush1.msra.mxu0 %v1004
        %1971 = vmatprep.subr.mxu0 0.0
        %1972 = vmatpush1.msra.mxu0 %v995
        %1973 = vmatprep.subr.mxu0 0.0
        %1974 = vmatpush1.msra.mxu0 %v986
        %1975 = vmatprep.subr.mxu0 0.0
        %1976 = vmatpush1.msra.mxu0 %v977
        %1977 = vmatprep.subr.mxu0 0.0
        %1978 = vmatpush1.msra.mxu0 %v968
        %1979 = vmatprep.subr.mxu0 0.0
        %1980 = vmatpush1.msra.mxu0 %v959
        %1981 = vmatprep.subr.mxu0 0.0
        %1982 = vmatpush1.msra.mxu0 %v950
        %1983 = vmatprep.subr.mxu0 0.0
        %1984 = vmatpush2.msra.mxu0 %v1305
        %1985 = vmatprep.subr.mxu0 0.0
        %1986 = vmatpush2.msra.mxu0 %v1220
        %1987 = vmatprep.subr.mxu0 0.0
        %1988 = vmatpush2.msra.mxu0 %v1211
        %1989 = vmatprep.subr.mxu0 0.0
        %1990 = vmatpush2.msra.mxu0 %v1202
        %1991 = vmatprep.subr.mxu0 0.0
        %1992 = vmatpush2.msra.mxu0 %v1193
        %1993 = vmatprep.subr.mxu0 0.0
        %1994 = vmatpush2.msra.mxu0 %v1184
        %1995 = vmatprep.subr.mxu0 0.0
        %1996 = vmatpush2.msra.mxu0 %v1175
        %1997 = vmatprep.subr.mxu0 0.0
        %1998 = vmatpush2.msra.mxu0 %v1166
        %1999 = vmatprep.subr.mxu0 0.0
        %2000 = vmatpush2.msra.mxu0 %v1157
        %2001 = vmatprep.subr.mxu0 0.0
        %2002 = vmatpush2.msra.mxu0 %v1148
        %2003 = vmatprep.subr.mxu0 0.0
        %2004 = vmatpush2.msra.mxu0 %v1139
        %2005 = vmatprep.subr.mxu0 0.0
        %2006 = vmatpush2.msra.mxu0 %v1130
        %2007 = vmatprep.subr.mxu0 0.0
        %2008 = vmatpush2.msra.mxu0 %v1121
        %2009 = vmatprep.subr.mxu0 0.0
        %2010 = vmatpush2.msra.mxu0 %v1112
        %2011 = vmatprep.subr.mxu0 0.0
        %2012 = vmatpush2.msra.mxu0 %v1103
        %2013 = vmatprep.subr.mxu0 0.0
        %2014 = vmatpush2.msra.mxu0 %v1094
        %2015 = vmatprep.mubr.f32.mxu0 %v1232
        %2016 = vmatmul.mubr.f32.gmra.mxu0 %v910
        %v2017 = vpop.f32.mrf.mxu0
        %v2018 = vadd.f32 0.0, %v2017
        %v2019 = vpop.f32.mrf.mxu0
        %2020 = vmatprep.mubr.f32.mxu0 %v1235
        %2021 = vmatmul.mubr.f32.gmra.mxu0 %v912
        %v2022 = vpop.f32.mrf.mxu0
        %v2023 = vadd.f32 0.0, %v2022
        %v2024 = vpop.f32.mrf.mxu0
        %2025 = vmatprep.mubr.f32.mxu0 %v1238
        %2026 = vmatmul.mubr.f32.gmra.mxu0 %v914
        %v2027 = vpop.f32.mrf.mxu0
        %v2028 = vadd.f32 0.0, %v2027
        %v2029 = vpop.f32.mrf.mxu0
        %2030 = vmatprep.mubr.f32.mxu0 %v1241
        %2031 = vmatmul.mubr.f32.gmra.mxu0 %v916
        %v2032 = vpop.f32.mrf.mxu0
        %v2033 = vadd.f32 0.0, %v2032
        %v2034 = vpop.f32.mrf.mxu0
        %2035 = vmatprep.mubr.f32.mxu0 %v1244
        %2036 = vmatmul.mubr.f32.gmra.mxu0 %v918
        %v2037 = vpop.f32.mrf.mxu0
        %v2038 = vadd.f32 0.0, %v2037
        %v2039 = vpop.f32.mrf.mxu0
        %2040 = vmatprep.mubr.f32.mxu0 %v1247
        %2041 = vmatmul.mubr.f32.gmra.mxu0 %v920
        %v2042 = vpop.f32.mrf.mxu0
        %v2043 = vadd.f32 0.0, %v2042
        %v2044 = vpop.f32.mrf.mxu0
        %2045 = vmatprep.mubr.f32.mxu0 %v1250
        %2046 = vmatmul.mubr.f32.gmra.mxu0 %v922
        %v2047 = vpop.f32.mrf.mxu0
        %v2048 = vadd.f32 0.0, %v2047
        %v2049 = vpop.f32.mrf.mxu0
        %2050 = vmatprep.mubr.f32.mxu0 %v1253
        %2051 = vmatmul.mubr.f32.gmra.mxu0 %v924
        %v2052 = vpop.f32.mrf.mxu0
        %v2053 = vadd.f32 0.0, %v2052
        %v2054 = vpop.f32.mrf.mxu0
        %2055 = vmatprep.mubr.f32.mxu0 %v1256
        %2056 = vmatmul.mubr.f32.gmra.mxu0 %v926
        %v2057 = vpop.f32.mrf.mxu0
        %v2058 = vadd.f32 0.0, %v2057
        %v2059 = vpop.f32.mrf.mxu0
        %2060 = vmatprep.mubr.f32.mxu0 %v1259
        %2061 = vmatmul.mubr.f32.gmra.mxu0 %v928
        %v2062 = vpop.f32.mrf.mxu0
        %v2063 = vadd.f32 0.0, %v2062
        %v2064 = vpop.f32.mrf.mxu0
        %2065 = vmatprep.mubr.f32.mxu0 %v1262
        %2066 = vmatmul.mubr.f32.gmra.mxu0 %v930
        %v2067 = vpop.f32.mrf.mxu0
        %v2068 = vadd.f32 0.0, %v2067
        %v2069 = vpop.f32.mrf.mxu0
        %2070 = vmatprep.mubr.f32.mxu0 %v1265
        %2071 = vmatmul.mubr.f32.gmra.mxu0 %v932
        %v2072 = vpop.f32.mrf.mxu0
        %v2073 = vadd.f32 0.0, %v2072
        %v2074 = vpop.f32.mrf.mxu0
        %2075 = vmatprep.mubr.f32.mxu0 %v1268
        %2076 = vmatmul.mubr.f32.gmra.mxu0 %v934
        %v2077 = vpop.f32.mrf.mxu0
        %v2078 = vadd.f32 0.0, %v2077
        %v2079 = vpop.f32.mrf.mxu0
        %2080 = vmatprep.mubr.f32.mxu0 %v1271
        %2081 = vmatmul.mubr.f32.gmra.mxu0 %v936
        %v2082 = vpop.f32.mrf.mxu0
        %v2083 = vadd.f32 0.0, %v2082
        %v2084 = vpop.f32.mrf.mxu0
        %2085 = vmatprep.mubr.f32.mxu0 %v1274
        %2086 = vmatmul.mubr.f32.gmra.mxu0 %v938
        %v2087 = vpop.f32.mrf.mxu0
        %v2088 = vadd.f32 0.0, %v2087
        %v2089 = vpop.f32.mrf.mxu0
        %2090 = vmatprep.mubr.f32.mxu0 %v1277
        %2091 = vmatmul.mubr.f32.gmra.mxu0 %v940
        %v2092 = vpop.f32.mrf.mxu0
        %v2093 = vadd.f32 0.0, %v2092
        %v2094 = vpop.f32.mrf.mxu0
        %2095 = vdwg.mxu0
        %vm2096 = vcmp.gt.f32.partialorder %v1374, 0.0
        %vm2097 = vcmp.gt.f32.partialorder %v1376, 0.0
        %vm2098 = vcmp.gt.f32.partialorder %v1535, 0.0
        %vm2099 = vcmp.gt.f32.partialorder %v1537, 0.0
        %vm2100 = vcmp.gt.f32.partialorder %v1696, 0.0
        %vm2101 = vcmp.gt.f32.partialorder %v1698, 0.0
        %vm2102 = vcmp.gt.f32.partialorder %v1857, 0.0
        %vm2103 = vcmp.gt.f32.partialorder %v1859, 0.0
        %vm2104 = vcmp.gt.f32.partialorder %v2018, 0.0
        %vm2105 = vcmp.gt.f32.partialorder %v1380, 0.0
        %vm2106 = vcmp.gt.f32.partialorder %v1382, 0.0
        %vm2107 = vcmp.gt.f32.partialorder %v1541, 0.0
        %vm2108 = vcmp.gt.f32.partialorder %v1543, 0.0
        %vm2109 = vcmp.gt.f32.partialorder %v1702, 0.0
        %vm2110 = vcmp.gt.f32.partialorder %v1704, 0.0
        %vm2111 = vcmp.gt.f32.partialorder %v1863, 0.0
        %vm2112 = vcmp.gt.f32.partialorder %v1865, 0.0
        %vm2113 = vcmp.gt.f32.partialorder %v2023, 0.0
        %vm2114 = vcmp.gt.f32.partialorder %v1386, 0.0
        %vm2115 = vcmp.gt.f32.partialorder %v1388, 0.0
        %vm2116 = vcmp.gt.f32.partialorder %v1547, 0.0
        %vm2117 = vcmp.gt.f32.partialorder %v1549, 0.0
        %vm2118 = vcmp.gt.f32.partialorder %v1708, 0.0
        %vm2119 = vcmp.gt.f32.partialorder %v1710, 0.0
        %vm2120 = vcmp.gt.f32.partialorder %v1869, 0.0
        %vm2121 = vcmp.gt.f32.partialorder %v1871, 0.0
        %vm2122 = vcmp.gt.f32.partialorder %v2028, 0.0
        %vm2123 = vcmp.gt.f32.partialorder %v1392, 0.0
        %vm2124 = vcmp.gt.f32.partialorder %v1394, 0.0
        %vm2125 = vcmp.gt.f32.partialorder %v1553, 0.0
        %vm2126 = vcmp.gt.f32.partialorder %v1555, 0.0
        %vm2127 = vcmp.gt.f32.partialorder %v1714, 0.0
        %vm2128 = vcmp.gt.f32.partialorder %v1716, 0.0
        %vm2129 = vcmp.gt.f32.partialorder %v1875, 0.0
        %vm2130 = vcmp.gt.f32.partialorder %v1877, 0.0
        %vm2131 = vcmp.gt.f32.partialorder %v2033, 0.0
        %vm2132 = vcmp.gt.f32.partialorder %v1398, 0.0
        %vm2133 = vcmp.gt.f32.partialorder %v1400, 0.0
        %vm2134 = vcmp.gt.f32.partialorder %v1559, 0.0
        %vm2135 = vcmp.gt.f32.partialorder %v1561, 0.0
        %vm2136 = vcmp.gt.f32.partialorder %v1720, 0.0
        %vm2137 = vcmp.gt.f32.partialorder %v1722, 0.0
        %vm2138 = vcmp.gt.f32.partialorder %v1881, 0.0
        %vm2139 = vcmp.gt.f32.partialorder %v1883, 0.0
        %vm2140 = vcmp.gt.f32.partialorder %v2038, 0.0
        %vm2141 = vcmp.gt.f32.partialorder %v1404, 0.0
        %vm2142 = vcmp.gt.f32.partialorder %v1406, 0.0
        %vm2143 = vcmp.gt.f32.partialorder %v1565, 0.0
        %vm2144 = vcmp.gt.f32.partialorder %v1567, 0.0
        %vm2145 = vcmp.gt.f32.partialorder %v1726, 0.0
        %vm2146 = vcmp.gt.f32.partialorder %v1728, 0.0
        %vm2147 = vcmp.gt.f32.partialorder %v1887, 0.0
        %vm2148 = vcmp.gt.f32.partialorder %v1889, 0.0
        %vm2149 = vcmp.gt.f32.partialorder %v2043, 0.0
        %vm2150 = vcmp.gt.f32.partialorder %v1410, 0.0
        %vm2151 = vcmp.gt.f32.partialorder %v1412, 0.0
        %vm2152 = vcmp.gt.f32.partialorder %v1571, 0.0
        %vm2153 = vcmp.gt.f32.partialorder %v1573, 0.0
        %vm2154 = vcmp.gt.f32.partialorder %v1732, 0.0
        %vm2155 = vcmp.gt.f32.partialorder %v1734, 0.0
        %vm2156 = vcmp.gt.f32.partialorder %v1893, 0.0
        %vm2157 = vcmp.gt.f32.partialorder %v1895, 0.0
        %vm2158 = vcmp.gt.f32.partialorder %v2048, 0.0
        %vm2159 = vcmp.gt.f32.partialorder %v1416, 0.0
        %vm2160 = vcmp.gt.f32.partialorder %v1418, 0.0
        %vm2161 = vcmp.gt.f32.partialorder %v1577, 0.0
        %vm2162 = vcmp.gt.f32.partialorder %v1579, 0.0
        %vm2163 = vcmp.gt.f32.partialorder %v1738, 0.0
        %vm2164 = vcmp.gt.f32.partialorder %v1740, 0.0
        %vm2165 = vcmp.gt.f32.partialorder %v1899, 0.0
        %vm2166 = vcmp.gt.f32.partialorder %v1901, 0.0
        %vm2167 = vcmp.gt.f32.partialorder %v2053, 0.0
        %vm2168 = vcmp.gt.f32.partialorder %v1422, 0.0
        %vm2169 = vcmp.gt.f32.partialorder %v1424, 0.0
        %vm2170 = vcmp.gt.f32.partialorder %v1583, 0.0
        %vm2171 = vcmp.gt.f32.partialorder %v1585, 0.0
        %vm2172 = vcmp.gt.f32.partialorder %v1744, 0.0
        %vm2173 = vcmp.gt.f32.partialorder %v1746, 0.0
        %vm2174 = vcmp.gt.f32.partialorder %v1905, 0.0
        %vm2175 = vcmp.gt.f32.partialorder %v1907, 0.0
        %vm2176 = vcmp.gt.f32.partialorder %v2058, 0.0
        %vm2177 = vcmp.gt.f32.partialorder %v1428, 0.0
        %vm2178 = vcmp.gt.f32.partialorder %v1430, 0.0
        %vm2179 = vcmp.gt.f32.partialorder %v1589, 0.0
        %vm2180 = vcmp.gt.f32.partialorder %v1591, 0.0
        %vm2181 = vcmp.gt.f32.partialorder %v1750, 0.0
        %vm2182 = vcmp.gt.f32.partialorder %v1752, 0.0
        %vm2183 = vcmp.gt.f32.partialorder %v1911, 0.0
        %vm2184 = vcmp.gt.f32.partialorder %v1913, 0.0
        %vm2185 = vcmp.gt.f32.partialorder %v2063, 0.0
        %vm2186 = vcmp.gt.f32.partialorder %v1434, 0.0
        %vm2187 = vcmp.gt.f32.partialorder %v1436, 0.0
        %vm2188 = vcmp.gt.f32.partialorder %v1595, 0.0
        %vm2189 = vcmp.gt.f32.partialorder %v1597, 0.0
        %vm2190 = vcmp.gt.f32.partialorder %v1756, 0.0
        %vm2191 = vcmp.gt.f32.partialorder %v1758, 0.0
        %vm2192 = vcmp.gt.f32.partialorder %v1917, 0.0
        %vm2193 = vcmp.gt.f32.partialorder %v1919, 0.0
        %vm2194 = vcmp.gt.f32.partialorder %v2068, 0.0
        %vm2195 = vcmp.gt.f32.partialorder %v1440, 0.0
        %vm2196 = vcmp.gt.f32.partialorder %v1442, 0.0
        %vm2197 = vcmp.gt.f32.partialorder %v1601, 0.0
        %vm2198 = vcmp.gt.f32.partialorder %v1603, 0.0
        %vm2199 = vcmp.gt.f32.partialorder %v1762, 0.0
        %vm2200 = vcmp.gt.f32.partialorder %v1764, 0.0
        %vm2201 = vcmp.gt.f32.partialorder %v1923, 0.0
        %vm2202 = vcmp.gt.f32.partialorder %v1925, 0.0
        %vm2203 = vcmp.gt.f32.partialorder %v2073, 0.0
        %vm2204 = vcmp.gt.f32.partialorder %v1446, 0.0
        %vm2205 = vcmp.gt.f32.partialorder %v1448, 0.0
        %vm2206 = vcmp.gt.f32.partialorder %v1607, 0.0
        %vm2207 = vcmp.gt.f32.partialorder %v1609, 0.0
        %vm2208 = vcmp.gt.f32.partialorder %v1768, 0.0
        %vm2209 = vcmp.gt.f32.partialorder %v1770, 0.0
        %vm2210 = vcmp.gt.f32.partialorder %v1929, 0.0
        %vm2211 = vcmp.gt.f32.partialorder %v1931, 0.0
        %vm2212 = vcmp.gt.f32.partialorder %v2078, 0.0
        %vm2213 = vcmp.gt.f32.partialorder %v1452, 0.0
        %vm2214 = vcmp.gt.f32.partialorder %v1454, 0.0
        %vm2215 = vcmp.gt.f32.partialorder %v1613, 0.0
        %vm2216 = vcmp.gt.f32.partialorder %v1615, 0.0
        %vm2217 = vcmp.gt.f32.partialorder %v1774, 0.0
        %vm2218 = vcmp.gt.f32.partialorder %v1776, 0.0
        %vm2219 = vcmp.gt.f32.partialorder %v1935, 0.0
        %vm2220 = vcmp.gt.f32.partialorder %v1937, 0.0
        %vm2221 = vcmp.gt.f32.partialorder %v2083, 0.0
        %vm2222 = vcmp.gt.f32.partialorder %v1458, 0.0
        %vm2223 = vcmp.gt.f32.partialorder %v1460, 0.0
        %vm2224 = vcmp.gt.f32.partialorder %v1619, 0.0
        %vm2225 = vcmp.gt.f32.partialorder %v1621, 0.0
        %vm2226 = vcmp.gt.f32.partialorder %v1780, 0.0
        %vm2227 = vcmp.gt.f32.partialorder %v1782, 0.0
        %vm2228 = vcmp.gt.f32.partialorder %v1941, 0.0
        %vm2229 = vcmp.gt.f32.partialorder %v1943, 0.0
        %vm2230 = vcmp.gt.f32.partialorder %v2088, 0.0
        %vm2231 = vcmp.gt.f32.partialorder %v1464, 0.0
        %vm2232 = vcmp.gt.f32.partialorder %v1466, 0.0
        %vm2233 = vcmp.gt.f32.partialorder %v1625, 0.0
        %vm2234 = vcmp.gt.f32.partialorder %v1627, 0.0
        %vm2235 = vcmp.gt.f32.partialorder %v1786, 0.0
        %vm2236 = vcmp.gt.f32.partialorder %v1788, 0.0
        %vm2237 = vcmp.gt.f32.partialorder %v1947, 0.0
        %vm2238 = vcmp.gt.f32.partialorder %v1949, 0.0
        %vm2239 = vcmp.gt.f32.partialorder %v2093, 0.0
        %v2240 = vmul.f32 %v1374, 0.148
        %v2241 = vmul.f32 %v1376, 0.148
        %v2242 = vmul.f32 %v1535, 0.148
        %v2243 = vmul.f32 %v1537, 0.148
        %v2244 = vmul.f32 %v1696, 0.148
        %v2245 = vmul.f32 %v1698, 0.148
        %v2246 = vmul.f32 %v1857, 0.148
        %v2247 = vmul.f32 %v1859, 0.148
        %v2248 = vmul.f32 %v2018, 0.148
        %v2249 = vmul.f32 %v1380, 0.148
        %v2250 = vmul.f32 %v1382, 0.148
        %v2251 = vmul.f32 %v1541, 0.148
        %v2252 = vmul.f32 %v1543, 0.148
        %v2253 = vmul.f32 %v1702, 0.148
        %v2254 = vmul.f32 %v1704, 0.148
        %v2255 = vmul.f32 %v1863, 0.148
        %v2256 = vmul.f32 %v1865, 0.148
        %v2257 = vmul.f32 %v2023, 0.148
        %v2258 = vmul.f32 %v1386, 0.148
        %v2259 = vmul.f32 %v1388, 0.148
        %v2260 = vmul.f32 %v1547, 0.148
        %v2261 = vmul.f32 %v1549, 0.148
        %v2262 = vmul.f32 %v1708, 0.148
        %v2263 = vmul.f32 %v1710, 0.148
        %v2264 = vmul.f32 %v1869, 0.148
        %v2265 = vmul.f32 %v1871, 0.148
        %v2266 = vmul.f32 %v2028, 0.148
        %v2267 = vmul.f32 %v1392, 0.148
        %v2268 = vmul.f32 %v1394, 0.148
        %v2269 = vmul.f32 %v1553, 0.148
        %v2270 = vmul.f32 %v1555, 0.148
        %v2271 = vmul.f32 %v1714, 0.148
        %v2272 = vmul.f32 %v1716, 0.148
        %v2273 = vmul.f32 %v1875, 0.148
        %v2274 = vmul.f32 %v1877, 0.148
        %v2275 = vmul.f32 %v2033, 0.148
        %v2276 = vmul.f32 %v1398, 0.148
        %v2277 = vmul.f32 %v1400, 0.148
        %v2278 = vmul.f32 %v1559, 0.148
        %v2279 = vmul.f32 %v1561, 0.148
        %v2280 = vmul.f32 %v1720, 0.148
        %v2281 = vmul.f32 %v1722, 0.148
        %v2282 = vmul.f32 %v1881, 0.148
        %v2283 = vmul.f32 %v1883, 0.148
        %v2284 = vmul.f32 %v2038, 0.148
        %v2285 = vmul.f32 %v1404, 0.148
        %v2286 = vmul.f32 %v1406, 0.148
        %v2287 = vmul.f32 %v1565, 0.148
        %v2288 = vmul.f32 %v1567, 0.148
        %v2289 = vmul.f32 %v1726, 0.148
        %v2290 = vmul.f32 %v1728, 0.148
        %v2291 = vmul.f32 %v1887, 0.148
        %v2292 = vmul.f32 %v1889, 0.148
        %v2293 = vmul.f32 %v2043, 0.148
        %v2294 = vmul.f32 %v1410, 0.148
        %v2295 = vmul.f32 %v1412, 0.148
        %v2296 = vmul.f32 %v1571, 0.148
        %v2297 = vmul.f32 %v1573, 0.148
        %v2298 = vmul.f32 %v1732, 0.148
        %v2299 = vmul.f32 %v1734, 0.148
        %v2300 = vmul.f32 %v1893, 0.148
        %v2301 = vmul.f32 %v1895, 0.148
        %v2302 = vmul.f32 %v2048, 0.148
        %v2303 = vmul.f32 %v1416, 0.148
        %v2304 = vmul.f32 %v1418, 0.148
        %v2305 = vmul.f32 %v1577, 0.148
        %v2306 = vmul.f32 %v1579, 0.148
        %v2307 = vmul.f32 %v1738, 0.148
        %v2308 = vmul.f32 %v1740, 0.148
        %v2309 = vmul.f32 %v1899, 0.148
        %v2310 = vmul.f32 %v1901, 0.148
        %v2311 = vmul.f32 %v2053, 0.148
        %v2312 = vmul.f32 %v1422, 0.148
        %v2313 = vmul.f32 %v1424, 0.148
        %v2314 = vmul.f32 %v1583, 0.148
        %v2315 = vmul.f32 %v1585, 0.148
        %v2316 = vmul.f32 %v1744, 0.148
        %v2317 = vmul.f32 %v1746, 0.148
        %v2318 = vmul.f32 %v1905, 0.148
        %v2319 = vmul.f32 %v1907, 0.148
        %v2320 = vmul.f32 %v2058, 0.148
        %v2321 = vmul.f32 %v1428, 0.148
        %v2322 = vmul.f32 %v1430, 0.148
        %v2323 = vmul.f32 %v1589, 0.148
        %v2324 = vmul.f32 %v1591, 0.148
        %v2325 = vmul.f32 %v1750, 0.148
        %v2326 = vmul.f32 %v1752, 0.148
        %v2327 = vmul.f32 %v1911, 0.148
        %v2328 = vmul.f32 %v1913, 0.148
        %v2329 = vmul.f32 %v2063, 0.148
        %v2330 = vmul.f32 %v1434, 0.148
        %v2331 = vmul.f32 %v1436, 0.148
        %v2332 = vmul.f32 %v1595, 0.148
        %v2333 = vmul.f32 %v1597, 0.148
        %v2334 = vmul.f32 %v1756, 0.148
        %v2335 = vmul.f32 %v1758, 0.148
        %v2336 = vmul.f32 %v1917, 0.148
        %v2337 = vmul.f32 %v1919, 0.148
        %v2338 = vmul.f32 %v2068, 0.148
        %v2339 = vmul.f32 %v1440, 0.148
        %v2340 = vmul.f32 %v1442, 0.148
        %v2341 = vmul.f32 %v1601, 0.148
        %v2342 = vmul.f32 %v1603, 0.148
        %v2343 = vmul.f32 %v1762, 0.148
        %v2344 = vmul.f32 %v1764, 0.148
        %v2345 = vmul.f32 %v1923, 0.148
        %v2346 = vmul.f32 %v1925, 0.148
        %v2347 = vmul.f32 %v2073, 0.148
        %v2348 = vmul.f32 %v1446, 0.148
        %v2349 = vmul.f32 %v1448, 0.148
        %v2350 = vmul.f32 %v1607, 0.148
        %v2351 = vmul.f32 %v1609, 0.148
        %v2352 = vmul.f32 %v1768, 0.148
        %v2353 = vmul.f32 %v1770, 0.148
        %v2354 = vmul.f32 %v1929, 0.148
        %v2355 = vmul.f32 %v1931, 0.148
        %v2356 = vmul.f32 %v2078, 0.148
        %v2357 = vmul.f32 %v1452, 0.148
        %v2358 = vmul.f32 %v1454, 0.148
        %v2359 = vmul.f32 %v1613, 0.148
        %v2360 = vmul.f32 %v1615, 0.148
        %v2361 = vmul.f32 %v1774, 0.148
        %v2362 = vmul.f32 %v1776, 0.148
        %v2363 = vmul.f32 %v1935, 0.148
        %v2364 = vmul.f32 %v1937, 0.148
        %v2365 = vmul.f32 %v2083, 0.148
        %v2366 = vmul.f32 %v1458, 0.148
        %v2367 = vmul.f32 %v1460, 0.148
        %v2368 = vmul.f32 %v1619, 0.148
        %v2369 = vmul.f32 %v1621, 0.148
        %v2370 = vmul.f32 %v1780, 0.148
        %v2371 = vmul.f32 %v1782, 0.148
        %v2372 = vmul.f32 %v1941, 0.148
        %v2373 = vmul.f32 %v1943, 0.148
        %v2374 = vmul.f32 %v2088, 0.148
        %v2375 = vmul.f32 %v1464, 0.148
        %v2376 = vmul.f32 %v1466, 0.148
        %v2377 = vmul.f32 %v1625, 0.148
        %v2378 = vmul.f32 %v1627, 0.148
        %v2379 = vmul.f32 %v1786, 0.148
        %v2380 = vmul.f32 %v1788, 0.148
        %v2381 = vmul.f32 %v1947, 0.148
        %v2382 = vmul.f32 %v1949, 0.148
        %v2383 = vmul.f32 %v2093, 0.148
        %v2384 = vsel %vm2096, %v1374, %v2240
        %v2385 = vsel %vm2097, %v1376, %v2241
        %v2386 = vsel %vm2098, %v1535, %v2242
        %v2387 = vsel %vm2099, %v1537, %v2243
        %v2388 = vsel %vm2100, %v1696, %v2244
        %v2389 = vsel %vm2101, %v1698, %v2245
        %v2390 = vsel %vm2102, %v1857, %v2246
        %v2391 = vsel %vm2103, %v1859, %v2247
        %v2392 = vsel %vm2104, %v2018, %v2248
        %v2393 = vsel %vm2105, %v1380, %v2249
        %v2394 = vsel %vm2106, %v1382, %v2250
        %v2395 = vsel %vm2107, %v1541, %v2251
        %v2396 = vsel %vm2108, %v1543, %v2252
        %v2397 = vsel %vm2109, %v1702, %v2253
        %v2398 = vsel %vm2110, %v1704, %v2254
        %v2399 = vsel %vm2111, %v1863, %v2255
        %v2400 = vsel %vm2112, %v1865, %v2256
        %v2401 = vsel %vm2113, %v2023, %v2257
        %v2402 = vsel %vm2114, %v1386, %v2258
        %v2403 = vsel %vm2115, %v1388, %v2259
        %v2404 = vsel %vm2116, %v1547, %v2260
        %v2405 = vsel %vm2117, %v1549, %v2261
        %v2406 = vsel %vm2118, %v1708, %v2262
        %v2407 = vsel %vm2119, %v1710, %v2263
        %v2408 = vsel %vm2120, %v1869, %v2264
        %v2409 = vsel %vm2121, %v1871, %v2265
        %v2410 = vsel %vm2122, %v2028, %v2266
        %v2411 = vsel %vm2123, %v1392, %v2267
        %v2412 = vsel %vm2124, %v1394, %v2268
        %v2413 = vsel %vm2125, %v1553, %v2269
        %v2414 = vsel %vm2126, %v1555, %v2270
        %v2415 = vsel %vm2127, %v1714, %v2271
        %v2416 = vsel %vm2128, %v1716, %v2272
        %v2417 = vsel %vm2129, %v1875, %v2273
        %v2418 = vsel %vm2130, %v1877, %v2274
        %v2419 = vsel %vm2131, %v2033, %v2275
        %v2420 = vsel %vm2132, %v1398, %v2276
        %v2421 = vsel %vm2133, %v1400, %v2277
        %v2422 = vsel %vm2134, %v1559, %v2278
        %v2423 = vsel %vm2135, %v1561, %v2279
        %v2424 = vsel %vm2136, %v1720, %v2280
        %v2425 = vsel %vm2137, %v1722, %v2281
        %v2426 = vsel %vm2138, %v1881, %v2282
        %v2427 = vsel %vm2139, %v1883, %v2283
        %v2428 = vsel %vm2140, %v2038, %v2284
        %v2429 = vsel %vm2141, %v1404, %v2285
        %v2430 = vsel %vm2142, %v1406, %v2286
        %v2431 = vsel %vm2143, %v1565, %v2287
        %v2432 = vsel %vm2144, %v1567, %v2288
        %v2433 = vsel %vm2145, %v1726, %v2289
        %v2434 = vsel %vm2146, %v1728, %v2290
        %v2435 = vsel %vm2147, %v1887, %v2291
        %v2436 = vsel %vm2148, %v1889, %v2292
        %v2437 = vsel %vm2149, %v2043, %v2293
        %v2438 = vsel %vm2150, %v1410, %v2294
        %v2439 = vsel %vm2151, %v1412, %v2295
        %v2440 = vsel %vm2152, %v1571, %v2296
        %v2441 = vsel %vm2153, %v1573, %v2297
        %v2442 = vsel %vm2154, %v1732, %v2298
        %v2443 = vsel %vm2155, %v1734, %v2299
        %v2444 = vsel %vm2156, %v1893, %v2300
        %v2445 = vsel %vm2157, %v1895, %v2301
        %v2446 = vsel %vm2158, %v2048, %v2302
        %v2447 = vsel %vm2159, %v1416, %v2303
        %v2448 = vsel %vm2160, %v1418, %v2304
        %v2449 = vsel %vm2161, %v1577, %v2305
        %v2450 = vsel %vm2162, %v1579, %v2306
        %v2451 = vsel %vm2163, %v1738, %v2307
        %v2452 = vsel %vm2164, %v1740, %v2308
        %v2453 = vsel %vm2165, %v1899, %v2309
        %v2454 = vsel %vm2166, %v1901, %v2310
        %v2455 = vsel %vm2167, %v2053, %v2311
        %v2456 = vsel %vm2168, %v1422, %v2312
        %v2457 = vsel %vm2169, %v1424, %v2313
        %v2458 = vsel %vm2170, %v1583, %v2314
        %v2459 = vsel %vm2171, %v1585, %v2315
        %v2460 = vsel %vm2172, %v1744, %v2316
        %v2461 = vsel %vm2173, %v1746, %v2317
        %v2462 = vsel %vm2174, %v1905, %v2318
        %v2463 = vsel %vm2175, %v1907, %v2319
        %v2464 = vsel %vm2176, %v2058, %v2320
        %v2465 = vsel %vm2177, %v1428, %v2321
        %v2466 = vsel %vm2178, %v1430, %v2322
        %v2467 = vsel %vm2179, %v1589, %v2323
        %v2468 = vsel %vm2180, %v1591, %v2324
        %v2469 = vsel %vm2181, %v1750, %v2325
        %v2470 = vsel %vm2182, %v1752, %v2326
        %v2471 = vsel %vm2183, %v1911, %v2327
        %v2472 = vsel %vm2184, %v1913, %v2328
        %v2473 = vsel %vm2185, %v2063, %v2329
        %v2474 = vsel %vm2186, %v1434, %v2330
        %v2475 = vsel %vm2187, %v1436, %v2331
        %v2476 = vsel %vm2188, %v1595, %v2332
        %v2477 = vsel %vm2189, %v1597, %v2333
        %v2478 = vsel %vm2190, %v1756, %v2334
        %v2479 = vsel %vm2191, %v1758, %v2335
        %v2480 = vsel %vm2192, %v1917, %v2336
        %v2481 = vsel %vm2193, %v1919, %v2337
        %v2482 = vsel %vm2194, %v2068, %v2338
        %v2483 = vsel %vm2195, %v1440, %v2339
        %v2484 = vsel %vm2196, %v1442, %v2340
        %v2485 = vsel %vm2197, %v1601, %v2341
        %v2486 = vsel %vm2198, %v1603, %v2342
        %v2487 = vsel %vm2199, %v1762, %v2343
        %v2488 = vsel %vm2200, %v1764, %v2344
        %v2489 = vsel %vm2201, %v1923, %v2345
        %v2490 = vsel %vm2202, %v1925, %v2346
        %v2491 = vsel %vm2203, %v2073, %v2347
        %v2492 = vsel %vm2204, %v1446, %v2348
        %v2493 = vsel %vm2205, %v1448, %v2349
        %v2494 = vsel %vm2206, %v1607, %v2350
        %v2495 = vsel %vm2207, %v1609, %v2351
        %v2496 = vsel %vm2208, %v1768, %v2352
        %v2497 = vsel %vm2209, %v1770, %v2353
        %v2498 = vsel %vm2210, %v1929, %v2354
        %v2499 = vsel %vm2211, %v1931, %v2355
        %v2500 = vsel %vm2212, %v2078, %v2356
        %v2501 = vsel %vm2213, %v1452, %v2357
        %v2502 = vsel %vm2214, %v1454, %v2358
        %v2503 = vsel %vm2215, %v1613, %v2359
        %v2504 = vsel %vm2216, %v1615, %v2360
        %v2505 = vsel %vm2217, %v1774, %v2361
        %v2506 = vsel %vm2218, %v1776, %v2362
        %v2507 = vsel %vm2219, %v1935, %v2363
        %v2508 = vsel %vm2220, %v1937, %v2364
        %v2509 = vsel %vm2221, %v2083, %v2365
        %v2510 = vsel %vm2222, %v1458, %v2366
        %v2511 = vsel %vm2223, %v1460, %v2367
        %v2512 = vsel %vm2224, %v1619, %v2368
        %v2513 = vsel %vm2225, %v1621, %v2369
        %v2514 = vsel %vm2226, %v1780, %v2370
        %v2515 = vsel %vm2227, %v1782, %v2371
        %v2516 = vsel %vm2228, %v1941, %v2372
        %v2517 = vsel %vm2229, %v1943, %v2373
        %v2518 = vsel %vm2230, %v2088, %v2374
        %v2519 = vsel %vm2231, %v1464, %v2375
        %v2520 = vsel %vm2232, %v1466, %v2376
        %v2521 = vsel %vm2233, %v1625, %v2377
        %v2522 = vsel %vm2234, %v1627, %v2378
        %v2523 = vsel %vm2235, %v1786, %v2379
        %v2524 = vsel %vm2236, %v1788, %v2380
        %v2525 = vsel %vm2237, %v1947, %v2381
        %v2526 = vsel %vm2238, %v1949, %v2382
        %v2527 = vsel %vm2239, %v2093, %v2383
        %v2528 = vld [vmem:[%s879] sm:$0xff]
        %v2529 = vld [vmem:[%s879 + $0x8] sm:$0x1]
        %vm2530 = vcmp.gt.f32.partialorder %v2528, 0.5
        %vm2531 = vcmp.gt.f32.partialorder %v2529, 0.5
        %v2532 = vsel %vm2530, 1, 0
        %v2533 = vsel %vm2531, 1, 0
        %v2534 = vlaneseq
        %v2535 = vshrl.u32 %v2534, 7
        %v2536 = vsub.s32 0, %v2535
        %v2537 = vrot.slane %v2532, %v2536
        %v2538 = vlaneseq
        %v2539 = vshrl.u32 %v2538, 7
        %v2540 = vsub.s32 1, %v2539
        %v2541 = vrot.slane %v2532, %v2540
        %v2542 = vlaneseq
        %v2543 = vshrl.u32 %v2542, 7
        %v2544 = vsub.s32 2, %v2543
        %v2545 = vrot.slane %v2532, %v2544
        %v2546 = vlaneseq
        %v2547 = vshrl.u32 %v2546, 7
        %v2548 = vsub.s32 3, %v2547
        %v2549 = vrot.slane %v2532, %v2548
        %v2550 = vlaneseq
        %v2551 = vshrl.u32 %v2550, 7
        %v2552 = vsub.s32 4, %v2551
        %v2553 = vrot.slane %v2532, %v2552
        %v2554 = vlaneseq
        %v2555 = vshrl.u32 %v2554, 7
        %v2556 = vsub.s32 5, %v2555
        %v2557 = vrot.slane %v2532, %v2556
        %v2558 = vlaneseq
        %v2559 = vshrl.u32 %v2558, 7
        %v2560 = vsub.s32 6, %v2559
        %v2561 = vrot.slane %v2532, %v2560
        %v2562 = vlaneseq
        %v2563 = vshrl.u32 %v2562, 7
        %v2564 = vsub.s32 7, %v2563
        %v2565 = vrot.slane %v2532, %v2564
        %v2566 = vlaneseq
        %v2567 = vshrl.u32 %v2566, 7
        %v2568 = vsub.s32 0, %v2567
        %v2569 = vrot.slane %v2533, %v2568
        %vm2570 = vcmp.eq.s32.totalorder %v2537, 1
        %vm2571 = vcmp.eq.s32.totalorder %v2541, 1
        %vm2572 = vcmp.eq.s32.totalorder %v2545, 1
        %vm2573 = vcmp.eq.s32.totalorder %v2549, 1
        %vm2574 = vcmp.eq.s32.totalorder %v2553, 1
        %vm2575 = vcmp.eq.s32.totalorder %v2557, 1
        %vm2576 = vcmp.eq.s32.totalorder %v2561, 1
        %vm2577 = vcmp.eq.s32.totalorder %v2565, 1
        %vm2578 = vcmp.eq.s32.totalorder %v2569, 1
        %v2579 = vsel %vm2570, %v2384, 0.0
        %v2580 = vsel %vm2571, %v2385, 0.0
        %v2581 = vsel %vm2572, %v2386, 0.0
        %v2582 = vsel %vm2573, %v2387, 0.0
        %v2583 = vsel %vm2574, %v2388, 0.0
        %v2584 = vsel %vm2575, %v2389, 0.0
        %v2585 = vsel %vm2576, %v2390, 0.0
        %v2586 = vsel %vm2577, %v2391, 0.0
        %v2587 = vsel %vm2578, %v2392, 0.0
        %v2588 = vsel %vm2570, %v2393, 0.0
        %v2589 = vsel %vm2571, %v2394, 0.0
        %v2590 = vsel %vm2572, %v2395, 0.0
        %v2591 = vsel %vm2573, %v2396, 0.0
        %v2592 = vsel %vm2574, %v2397, 0.0
        %v2593 = vsel %vm2575, %v2398, 0.0
        %v2594 = vsel %vm2576, %v2399, 0.0
        %v2595 = vsel %vm2577, %v2400, 0.0
        %v2596 = vsel %vm2578, %v2401, 0.0
        %v2597 = vsel %vm2570, %v2402, 0.0
        %v2598 = vsel %vm2571, %v2403, 0.0
        %v2599 = vsel %vm2572, %v2404, 0.0
        %v2600 = vsel %vm2573, %v2405, 0.0
        %v2601 = vsel %vm2574, %v2406, 0.0
        %v2602 = vsel %vm2575, %v2407, 0.0
        %v2603 = vsel %vm2576, %v2408, 0.0
        %v2604 = vsel %vm2577, %v2409, 0.0
        %v2605 = vsel %vm2578, %v2410, 0.0
        %v2606 = vsel %vm2570, %v2411, 0.0
        %v2607 = vsel %vm2571, %v2412, 0.0
        %v2608 = vsel %vm2572, %v2413, 0.0
        %v2609 = vsel %vm2573, %v2414, 0.0
        %v2610 = vsel %vm2574, %v2415, 0.0
        %v2611 = vsel %vm2575, %v2416, 0.0
        %v2612 = vsel %vm2576, %v2417, 0.0
        %v2613 = vsel %vm2577, %v2418, 0.0
        %v2614 = vsel %vm2578, %v2419, 0.0
        %v2615 = vsel %vm2570, %v2420, 0.0
        %v2616 = vsel %vm2571, %v2421, 0.0
        %v2617 = vsel %vm2572, %v2422, 0.0
        %v2618 = vsel %vm2573, %v2423, 0.0
        %v2619 = vsel %vm2574, %v2424, 0.0
        %v2620 = vsel %vm2575, %v2425, 0.0
        %v2621 = vsel %vm2576, %v2426, 0.0
        %v2622 = vsel %vm2577, %v2427, 0.0
        %v2623 = vsel %vm2578, %v2428, 0.0
        %v2624 = vsel %vm2570, %v2429, 0.0
        %v2625 = vsel %vm2571, %v2430, 0.0
        %v2626 = vsel %vm2572, %v2431, 0.0
        %v2627 = vsel %vm2573, %v2432, 0.0
        %v2628 = vsel %vm2574, %v2433, 0.0
        %v2629 = vsel %vm2575, %v2434, 0.0
        %v2630 = vsel %vm2576, %v2435, 0.0
        %v2631 = vsel %vm2577, %v2436, 0.0
        %v2632 = vsel %vm2578, %v2437, 0.0
        %v2633 = vsel %vm2570, %v2438, 0.0
        %v2634 = vsel %vm2571, %v2439, 0.0
        %v2635 = vsel %vm2572, %v2440, 0.0
        %v2636 = vsel %vm2573, %v2441, 0.0
        %v2637 = vsel %vm2574, %v2442, 0.0
        %v2638 = vsel %vm2575, %v2443, 0.0
        %v2639 = vsel %vm2576, %v2444, 0.0
        %v2640 = vsel %vm2577, %v2445, 0.0
        %v2641 = vsel %vm2578, %v2446, 0.0
        %v2642 = vsel %vm2570, %v2447, 0.0
        %v2643 = vsel %vm2571, %v2448, 0.0
        %v2644 = vsel %vm2572, %v2449, 0.0
        %v2645 = vsel %vm2573, %v2450, 0.0
        %v2646 = vsel %vm2574, %v2451, 0.0
        %v2647 = vsel %vm2575, %v2452, 0.0
        %v2648 = vsel %vm2576, %v2453, 0.0
        %v2649 = vsel %vm2577, %v2454, 0.0
        %v2650 = vsel %vm2578, %v2455, 0.0
        %v2651 = vsel %vm2570, %v2456, 0.0
        %v2652 = vsel %vm2571, %v2457, 0.0
        %v2653 = vsel %vm2572, %v2458, 0.0
        %v2654 = vsel %vm2573, %v2459, 0.0
        %v2655 = vsel %vm2574, %v2460, 0.0
        %v2656 = vsel %vm2575, %v2461, 0.0
        %v2657 = vsel %vm2576, %v2462, 0.0
        %v2658 = vsel %vm2577, %v2463, 0.0
        %v2659 = vsel %vm2578, %v2464, 0.0
        %v2660 = vsel %vm2570, %v2465, 0.0
        %v2661 = vsel %vm2571, %v2466, 0.0
        %v2662 = vsel %vm2572, %v2467, 0.0
        %v2663 = vsel %vm2573, %v2468, 0.0
        %v2664 = vsel %vm2574, %v2469, 0.0
        %v2665 = vsel %vm2575, %v2470, 0.0
        %v2666 = vsel %vm2576, %v2471, 0.0
        %v2667 = vsel %vm2577, %v2472, 0.0
        %v2668 = vsel %vm2578, %v2473, 0.0
        %v2669 = vsel %vm2570, %v2474, 0.0
        %v2670 = vsel %vm2571, %v2475, 0.0
        %v2671 = vsel %vm2572, %v2476, 0.0
        %v2672 = vsel %vm2573, %v2477, 0.0
        %v2673 = vsel %vm2574, %v2478, 0.0
        %v2674 = vsel %vm2575, %v2479, 0.0
        %v2675 = vsel %vm2576, %v2480, 0.0
        %v2676 = vsel %vm2577, %v2481, 0.0
        %v2677 = vsel %vm2578, %v2482, 0.0
        %v2678 = vsel %vm2570, %v2483, 0.0
        %v2679 = vsel %vm2571, %v2484, 0.0
        %v2680 = vsel %vm2572, %v2485, 0.0
        %v2681 = vsel %vm2573, %v2486, 0.0
        %v2682 = vsel %vm2574, %v2487, 0.0
        %v2683 = vsel %vm2575, %v2488, 0.0
        %v2684 = vsel %vm2576, %v2489, 0.0
        %v2685 = vsel %vm2577, %v2490, 0.0
        %v2686 = vsel %vm2578, %v2491, 0.0
        %v2687 = vsel %vm2570, %v2492, 0.0
        %v2688 = vsel %vm2571, %v2493, 0.0
        %v2689 = vsel %vm2572, %v2494, 0.0
        %v2690 = vsel %vm2573, %v2495, 0.0
        %v2691 = vsel %vm2574, %v2496, 0.0
        %v2692 = vsel %vm2575, %v2497, 0.0
        %v2693 = vsel %vm2576, %v2498, 0.0
        %v2694 = vsel %vm2577, %v2499, 0.0
        %v2695 = vsel %vm2578, %v2500, 0.0
        %v2696 = vsel %vm2570, %v2501, 0.0
        %v2697 = vsel %vm2571, %v2502, 0.0
        %v2698 = vsel %vm2572, %v2503, 0.0
        %v2699 = vsel %vm2573, %v2504, 0.0
        %v2700 = vsel %vm2574, %v2505, 0.0
        %v2701 = vsel %vm2575, %v2506, 0.0
        %v2702 = vsel %vm2576, %v2507, 0.0
        %v2703 = vsel %vm2577, %v2508, 0.0
        %v2704 = vsel %vm2578, %v2509, 0.0
        %v2705 = vsel %vm2570, %v2510, 0.0
        %v2706 = vsel %vm2571, %v2511, 0.0
        %v2707 = vsel %vm2572, %v2512, 0.0
        %v2708 = vsel %vm2573, %v2513, 0.0
        %v2709 = vsel %vm2574, %v2514, 0.0
        %v2710 = vsel %vm2575, %v2515, 0.0
        %v2711 = vsel %vm2576, %v2516, 0.0
        %v2712 = vsel %vm2577, %v2517, 0.0
        %v2713 = vsel %vm2578, %v2518, 0.0
        %v2714 = vsel %vm2570, %v2519, 0.0
        %v2715 = vsel %vm2571, %v2520, 0.0
        %v2716 = vsel %vm2572, %v2521, 0.0
        %v2717 = vsel %vm2573, %v2522, 0.0
        %v2718 = vsel %vm2574, %v2523, 0.0
        %v2719 = vsel %vm2575, %v2524, 0.0
        %v2720 = vsel %vm2576, %v2525, 0.0
        %v2721 = vsel %vm2577, %v2526, 0.0
        %v2722 = vsel %vm2578, %v2527, 0.0
        %v2723 = vld [vmem:[%s887] sm:$0xff]
        %v2724 = vld [vmem:[%s887 + $0x8] sm:$0xff]
        %v2725 = vld [vmem:[%s887 + $0x10] sm:$0xff]
        %v2726 = vld [vmem:[%s887 + $0x18] sm:$0xff]
        %v2727 = vld [vmem:[%s887 + $0x20] sm:$0xff]
        %v2728 = vld [vmem:[%s887 + $0x28] sm:$0xff]
        %v2729 = vld [vmem:[%s887 + $0x30] sm:$0xff]
        %v2730 = vld [vmem:[%s887 + $0x38] sm:$0xff]
        %v2731 = vld [vmem:[%s887 + $0x40] sm:$0xff]
        %v2732 = vld [vmem:[%s887 + $0x48] sm:$0xff]
        %v2733 = vld [vmem:[%s887 + $0x50] sm:$0xff]
        %v2734 = vld [vmem:[%s887 + $0x58] sm:$0xff]
        %v2735 = vld [vmem:[%s887 + $0x60] sm:$0xff]
        %v2736 = vld [vmem:[%s887 + $0x68] sm:$0xff]
        %v2737 = vld [vmem:[%s887 + $0x70] sm:$0xff]
        %v2738 = vld [vmem:[%s887 + $0x78] sm:$0xff]
        %v2739 = vadd.f32 %v2579, %v2580
        %v2740 = vadd.f32 %v2739, %v2581
        %v2741 = vadd.f32 %v2740, %v2582
        %v2742 = vadd.f32 %v2741, %v2583
        %v2743 = vadd.f32 %v2742, %v2584
        %v2744 = vadd.f32 %v2743, %v2585
        %v2745 = vadd.f32 %v2744, %v2586
        %v2746 = vadd.f32 %v2745, %v2587
        %2747 = vadd.xlane.f32.xlu0 %v2746
        %v2748 = vpop.xlane.xlu0 %2747
        %v2749 = vadd.f32 %v2588, %v2589
        %v2750 = vadd.f32 %v2749, %v2590
        %v2751 = vadd.f32 %v2750, %v2591
        %v2752 = vadd.f32 %v2751, %v2592
        %v2753 = vadd.f32 %v2752, %v2593
        %v2754 = vadd.f32 %v2753, %v2594
        %v2755 = vadd.f32 %v2754, %v2595
        %v2756 = vadd.f32 %v2755, %v2596
        %2757 = vadd.xlane.f32.xlu0 %v2756
        %v2758 = vpop.xlane.xlu0 %2757
        %v2759 = vadd.f32 %v2597, %v2598
        %v2760 = vadd.f32 %v2759, %v2599
        %v2761 = vadd.f32 %v2760, %v2600
        %v2762 = vadd.f32 %v2761, %v2601
        %v2763 = vadd.f32 %v2762, %v2602
        %v2764 = vadd.f32 %v2763, %v2603
        %v2765 = vadd.f32 %v2764, %v2604
        %v2766 = vadd.f32 %v2765, %v2605
        %2767 = vadd.xlane.f32.xlu0 %v2766
        %v2768 = vpop.xlane.xlu0 %2767
        %v2769 = vadd.f32 %v2606, %v2607
        %v2770 = vadd.f32 %v2769, %v2608
        %v2771 = vadd.f32 %v2770, %v2609
        %v2772 = vadd.f32 %v2771, %v2610
        %v2773 = vadd.f32 %v2772, %v2611
        %v2774 = vadd.f32 %v2773, %v2612
        %v2775 = vadd.f32 %v2774, %v2613
        %v2776 = vadd.f32 %v2775, %v2614
        %2777 = vadd.xlane.f32.xlu0 %v2776
        %v2778 = vpop.xlane.xlu0 %2777
        %v2779 = vadd.f32 %v2615, %v2616
        %v2780 = vadd.f32 %v2779, %v2617
        %v2781 = vadd.f32 %v2780, %v2618
        %v2782 = vadd.f32 %v2781, %v2619
        %v2783 = vadd.f32 %v2782, %v2620
        %v2784 = vadd.f32 %v2783, %v2621
        %v2785 = vadd.f32 %v2784, %v2622
        %v2786 = vadd.f32 %v2785, %v2623
        %2787 = vadd.xlane.f32.xlu0 %v2786
        %v2788 = vpop.xlane.xlu0 %2787
        %v2789 = vadd.f32 %v2624, %v2625
        %v2790 = vadd.f32 %v2789, %v2626
        %v2791 = vadd.f32 %v2790, %v2627
        %v2792 = vadd.f32 %v2791, %v2628
        %v2793 = vadd.f32 %v2792, %v2629
        %v2794 = vadd.f32 %v2793, %v2630
        %v2795 = vadd.f32 %v2794, %v2631
        %v2796 = vadd.f32 %v2795, %v2632
        %2797 = vadd.xlane.f32.xlu0 %v2796
        %v2798 = vpop.xlane.xlu0 %2797
        %v2799 = vadd.f32 %v2633, %v2634
        %v2800 = vadd.f32 %v2799, %v2635
        %v2801 = vadd.f32 %v2800, %v2636
        %v2802 = vadd.f32 %v2801, %v2637
        %v2803 = vadd.f32 %v2802, %v2638
        %v2804 = vadd.f32 %v2803, %v2639
        %v2805 = vadd.f32 %v2804, %v2640
        %v2806 = vadd.f32 %v2805, %v2641
        %2807 = vadd.xlane.f32.xlu0 %v2806
        %v2808 = vpop.xlane.xlu0 %2807
        %v2809 = vadd.f32 %v2642, %v2643
        %v2810 = vadd.f32 %v2809, %v2644
        %v2811 = vadd.f32 %v2810, %v2645
        %v2812 = vadd.f32 %v2811, %v2646
        %v2813 = vadd.f32 %v2812, %v2647
        %v2814 = vadd.f32 %v2813, %v2648
        %v2815 = vadd.f32 %v2814, %v2649
        %v2816 = vadd.f32 %v2815, %v2650
        %2817 = vadd.xlane.f32.xlu0 %v2816
        %v2818 = vpop.xlane.xlu0 %2817
        %v2819 = vadd.f32 %v2651, %v2652
        %v2820 = vadd.f32 %v2819, %v2653
        %v2821 = vadd.f32 %v2820, %v2654
        %v2822 = vadd.f32 %v2821, %v2655
        %v2823 = vadd.f32 %v2822, %v2656
        %v2824 = vadd.f32 %v2823, %v2657
        %v2825 = vadd.f32 %v2824, %v2658
        %v2826 = vadd.f32 %v2825, %v2659
        %2827 = vadd.xlane.f32.xlu0 %v2826
        %v2828 = vpop.xlane.xlu0 %2827
        %v2829 = vadd.f32 %v2660, %v2661
        %v2830 = vadd.f32 %v2829, %v2662
        %v2831 = vadd.f32 %v2830, %v2663
        %v2832 = vadd.f32 %v2831, %v2664
        %v2833 = vadd.f32 %v2832, %v2665
        %v2834 = vadd.f32 %v2833, %v2666
        %v2835 = vadd.f32 %v2834, %v2667
        %v2836 = vadd.f32 %v2835, %v2668
        %2837 = vadd.xlane.f32.xlu0 %v2836
        %v2838 = vpop.xlane.xlu0 %2837
        %v2839 = vadd.f32 %v2669, %v2670
        %v2840 = vadd.f32 %v2839, %v2671
        %v2841 = vadd.f32 %v2840, %v2672
        %v2842 = vadd.f32 %v2841, %v2673
        %v2843 = vadd.f32 %v2842, %v2674
        %v2844 = vadd.f32 %v2843, %v2675
        %v2845 = vadd.f32 %v2844, %v2676
        %v2846 = vadd.f32 %v2845, %v2677
        %2847 = vadd.xlane.f32.xlu0 %v2846
        %v2848 = vpop.xlane.xlu0 %2847
        %v2849 = vadd.f32 %v2678, %v2679
        %v2850 = vadd.f32 %v2849, %v2680
        %v2851 = vadd.f32 %v2850, %v2681
        %v2852 = vadd.f32 %v2851, %v2682
        %v2853 = vadd.f32 %v2852, %v2683
        %v2854 = vadd.f32 %v2853, %v2684
        %v2855 = vadd.f32 %v2854, %v2685
        %v2856 = vadd.f32 %v2855, %v2686
        %2857 = vadd.xlane.f32.xlu0 %v2856
        %v2858 = vpop.xlane.xlu0 %2857
        %v2859 = vadd.f32 %v2687, %v2688
        %v2860 = vadd.f32 %v2859, %v2689
        %v2861 = vadd.f32 %v2860, %v2690
        %v2862 = vadd.f32 %v2861, %v2691
        %v2863 = vadd.f32 %v2862, %v2692
        %v2864 = vadd.f32 %v2863, %v2693
        %v2865 = vadd.f32 %v2864, %v2694
        %v2866 = vadd.f32 %v2865, %v2695
        %2867 = vadd.xlane.f32.xlu0 %v2866
        %v2868 = vpop.xlane.xlu0 %2867
        %v2869 = vadd.f32 %v2696, %v2697
        %v2870 = vadd.f32 %v2869, %v2698
        %v2871 = vadd.f32 %v2870, %v2699
        %v2872 = vadd.f32 %v2871, %v2700
        %v2873 = vadd.f32 %v2872, %v2701
        %v2874 = vadd.f32 %v2873, %v2702
        %v2875 = vadd.f32 %v2874, %v2703
        %v2876 = vadd.f32 %v2875, %v2704
        %2877 = vadd.xlane.f32.xlu0 %v2876
        %v2878 = vpop.xlane.xlu0 %2877
        %v2879 = vadd.f32 %v2705, %v2706
        %v2880 = vadd.f32 %v2879, %v2707
        %v2881 = vadd.f32 %v2880, %v2708
        %v2882 = vadd.f32 %v2881, %v2709
        %v2883 = vadd.f32 %v2882, %v2710
        %v2884 = vadd.f32 %v2883, %v2711
        %v2885 = vadd.f32 %v2884, %v2712
        %v2886 = vadd.f32 %v2885, %v2713
        %2887 = vadd.xlane.f32.xlu0 %v2886
        %v2888 = vpop.xlane.xlu0 %2887
        %v2889 = vadd.f32 %v2714, %v2715
        %v2890 = vadd.f32 %v2889, %v2716
        %v2891 = vadd.f32 %v2890, %v2717
        %v2892 = vadd.f32 %v2891, %v2718
        %v2893 = vadd.f32 %v2892, %v2719
        %v2894 = vadd.f32 %v2893, %v2720
        %v2895 = vadd.f32 %v2894, %v2721
        %v2896 = vadd.f32 %v2895, %v2722
        %2897 = vadd.xlane.f32.xlu0 %v2896
        %v2898 = vpop.xlane.xlu0 %2897
        %v2899 = vadd.f32 %v2723, %v2748
        %v2900 = vadd.f32 %v2724, %v2758
        %v2901 = vadd.f32 %v2725, %v2768
        %v2902 = vadd.f32 %v2726, %v2778
        %v2903 = vadd.f32 %v2727, %v2788
        %v2904 = vadd.f32 %v2728, %v2798
        %v2905 = vadd.f32 %v2729, %v2808
        %v2906 = vadd.f32 %v2730, %v2818
        %v2907 = vadd.f32 %v2731, %v2828
        %v2908 = vadd.f32 %v2732, %v2838
        %v2909 = vadd.f32 %v2733, %v2848
        %v2910 = vadd.f32 %v2734, %v2858
        %v2911 = vadd.f32 %v2735, %v2868
        %v2912 = vadd.f32 %v2736, %v2878
        %v2913 = vadd.f32 %v2737, %v2888
        %v2914 = vadd.f32 %v2738, %v2898
        %vm2915 = vcmask 7168
        %2916 = vst.msk [vmem:[%s887] sm:$0xff] %vm2915, %v2899
        %2917 = vst.msk [vmem:[%s887 + $0x8] sm:$0xff] %vm2915, %v2900
        %2918 = vst.msk [vmem:[%s887 + $0x10] sm:$0xff] %vm2915, %v2901
        %2919 = vst.msk [vmem:[%s887 + $0x18] sm:$0xff] %vm2915, %v2902
        %2920 = vst.msk [vmem:[%s887 + $0x20] sm:$0xff] %vm2915, %v2903
        %2921 = vst.msk [vmem:[%s887 + $0x28] sm:$0xff] %vm2915, %v2904
        %2922 = vst.msk [vmem:[%s887 + $0x30] sm:$0xff] %vm2915, %v2905
        %2923 = vst.msk [vmem:[%s887 + $0x38] sm:$0xff] %vm2915, %v2906
        %2924 = vst.msk [vmem:[%s887 + $0x40] sm:$0xff] %vm2915, %v2907
        %2925 = vst.msk [vmem:[%s887 + $0x48] sm:$0xff] %vm2915, %v2908
        %2926 = vst.msk [vmem:[%s887 + $0x50] sm:$0xff] %vm2915, %v2909
        %2927 = vst.msk [vmem:[%s887 + $0x58] sm:$0xff] %vm2915, %v2910
        %2928 = vst.msk [vmem:[%s887 + $0x60] sm:$0xff] %vm2915, %v2911
        %2929 = vst.msk [vmem:[%s887 + $0x68] sm:$0xff] %vm2915, %v2912
        %2930 = vst.msk [vmem:[%s887 + $0x70] sm:$0xff] %vm2915, %v2913
        %2931 = vst.msk [vmem:[%s887 + $0x78] sm:$0xff] %vm2915, %v2914
        %s2932 = smul.u32 16, %s18
        %p2933 = scmp.lt.s32.totalorder %s2932, 31
        %s2934 = scalar_select %p2933, %s2932, 31
        %s2935 = smul.addr %s2934, 8
        %s2936 = scalar_lea.vmem %s3, %s2935
        // Predicated region
        $region103: #{model_forward.1} parent=93 // pred_check
          %p2937 = pneg %p125
        $region104: #{model_forward.1} parent=93 // pred_check_branch
          %2939 = sbr.rel (%p2937) target = $region106
        $region105: #{model_forward.1} parent=93 // pred_region
          %s2940 = smul.u32 16, %s18
        $region106: #{model_forward.1} parent=93 // pred_fallthru
          _
      $region94: #{model_forward.1} parent=5 // pred_fallthru
        _
      %p2941 = scmp.le.s32.totalorder 2, %s9
      // Predicated region
      $region107: #{model_forward.1} parent=5 // pred_check
        %p2942 = pneg %p2941
      $region108: #{model_forward.1} parent=5 // pred_check_branch
        %2944 = sbr.rel (%p2942) target = $region110
      $region109: #{model_forward.1} parent=5 // pred_region
        %s2945 = ssub.s32 %s9, 2
        // Predicated region
        $region111: #{model_forward.1} parent=109 // pred_check
          %p2946 = pneg %p131
        $region112: #{model_forward.1} parent=109 // pred_check_branch
          %2948 = sbr.rel (%p2946) target = $region114
        $region113: #{model_forward.1} parent=109 // pred_region
          %s2949 = smul.u32 16, %s20
          %p2950 = scmp.lt.s32.totalorder %s2949, 31
          %s2951 = scalar_select %p2950, %s2949, 31
          %s2952 = smul.addr %s2951, 8
          %s2953 = scalar_lea.vmem %s3, %s2952
        $region114: #{model_forward.1} parent=109 // pred_fallthru
          _
      $region110: #{model_forward.1} parent=5 // pred_fallthru
        _
    $region6: #{model_forward.1} parent=1 // loop_footer
      %s13 = sadd.s32 1, %s9
    $region7: #{model_forward.1} parent=1 // loop_footer_branch
      %8 = sbr.rel target = $region3
    $region8: #{model_forward.1} parent=1 // loop_exit
      _

</llo_original>
